<compile_context>
chip_gen: v7x
topology: tpu7x:2x2x1
jax: 0.10.0
libtpu: 0.0.40
codegen_flags: <defaults>
</compile_context>

<pallas_src>
import jax
import jax.numpy as jnp
from jax import lax
from jax.experimental import pallas as pl
from jax.experimental.pallas import tpu as pltpu


def _basic_block_kernel(x_ref, w1_ref, w2_ref, b1_ref, b2_ref, out_ref, mid_ref):
    # x_ref  : (H+4, W+2, Cin) bf16  spatially padded input (rows pad 2, cols pad 1),
    #                                whole image, resident across the row-tile axis
    # w*_ref : (3, 3, Cin, C)  bf16  conv weights, HWIO, BN scale folded in
    # b*_ref : (1, C)          f32   folded BN bias
    # out_ref: (TH, W, C)      f32   this grid step's row tile of the output
    # mid_ref: (TH+2, W+2, C)  bf16  scratch: padded conv1 activation for this tile
    TH, W, C = out_ref.shape
    Cin = x_ref.shape[2]
    H = x_ref.shape[0] - 4

    r = pl.program_id(1)
    row0 = pl.multiple_of(r * TH, TH)      # top of this tile's padded-input window

    # Padded-input window covering TH output rows plus the conv1+conv2 halo.
    xw = x_ref[pl.ds(row0, TH + 4), :, :]  # (TH+4, W+2, Cin) bf16

    # ---- conv1 (3x3, pad 1) over TH+2 haloed rows: 9 shifted bf16 matmuls ----
    acc1 = jnp.zeros(((TH + 2) * W, C), jnp.float32)
    for kh in range(3):
        for kw in range(3):
            patch = xw[kh:kh + TH + 2, kw:kw + W, :].reshape((TH + 2) * W, Cin)
            acc1 = acc1 + jnp.dot(patch, w1_ref[kh, kw],
                                  preferred_element_type=jnp.float32)

    # bn1 (scale already folded into w1) + relu
    y = jnp.maximum(acc1 + b1_ref[...], 0.0).reshape(TH + 2, W, C)

    # Halo rows outside the real image must be conv2's zero padding, not values
    # convolved out of the 2-row input pad.
    gr = r * TH - 1 + lax.broadcasted_iota(jnp.int32, (TH + 2, 1, 1), 0)
    y = jnp.where((gr >= 0) & (gr < H), y, 0.0)

    # Stage the padded conv1 activation in bf16. Only the 1-col border needs zeroing.
    mid_ref[:, 0:1, :] = jnp.zeros((TH + 2, 1, C), mid_ref.dtype)
    mid_ref[:, W + 1:W + 2, :] = jnp.zeros((TH + 2, 1, C), mid_ref.dtype)
    mid_ref[:, 1:W + 1, :] = y.astype(mid_ref.dtype)

    # ---- conv2 (3x3, pad 1) ----
    acc2 = jnp.zeros((TH * W, C), jnp.float32)
    for kh in range(3):
        for kw in range(3):
            patch = mid_ref[kh:kh + TH, kw:kw + W, :].reshape(TH * W, C)
            acc2 = acc2 + jnp.dot(patch, w2_ref[kh, kw],
                                  preferred_element_type=jnp.float32)

    # bn2 (folded) + identity residual (sliced from the same input window) + relu
    res = x_ref[pl.ds(row0 + 2, TH), pl.ds(1, W), :].astype(jnp.float32)
    z = (acc2 + b2_ref[...]).reshape(TH, W, C) + res
    out_ref[...] = jnp.maximum(z, 0.0).astype(out_ref.dtype)


def _pick_tile_rows(H, W, C, acc_budget_bytes=128 * 1024):
    """Largest row tile dividing H whose f32 conv accumulator stays ~vreg-sized."""
    for th in (32, 16, 8, 4, 2, 1):
        if H % th == 0 and (th + 2) * W * C * 4 <= acc_budget_bytes:
            return th
    return 1


def basic_block_forward(x_nchw, w1_oihw, w2_oihw, bn1, bn2, eps=1e-5, tile_rows=None):
    """Fused BasicBlock forward. x_nchw: (N, C, H, W) float32 -> (N, C, H, W)."""
    g1, b1, m1, v1 = bn1
    g2, b2, m2, v2 = bn2

    N, Cin, H, W = x_nchw.shape
    C = w1_oihw.shape[0]
    assert Cin == C, "identity residual requires inplanes == planes (stride=1, no downsample)"

    TH = _pick_tile_rows(H, W, C) if tile_rows is None else tile_rows
    assert H % TH == 0, "tile_rows must divide H"
    R = H // TH

    # ---- host-side glue: layout, padding, BN folding, bf16 casts ----
    # TODO(synk): if the surrounding network runs NHWC, drop these transposes.
    x = jnp.transpose(x_nchw, (0, 2, 3, 1)).astype(jnp.float32)            # NHWC
    # rows padded by 2 (conv1 pad + conv2 halo), cols padded by 1 (conv1 pad).
    xpad = jnp.pad(x, ((0, 0), (2, 2), (1, 1), (0, 0))).astype(jnp.bfloat16)

    s1 = g1 / jnp.sqrt(v1 + eps)
    s2 = g2 / jnp.sqrt(v2 + eps)
    # HWIO weights with the BN scale folded into the output channel.
    w1 = (jnp.transpose(w1_oihw, (2, 3, 1, 0)) * s1[None, None, None, :]).astype(jnp.bfloat16)
    w2 = (jnp.transpose(w2_oihw, (2, 3, 1, 0)) * s2[None, None, None, :]).astype(jnp.bfloat16)
    b1v = (b1 - m1 * s1).reshape(1, C).astype(jnp.float32)
    b2v = (b2 - m2 * s2).reshape(1, C).astype(jnp.float32)

    flops = 2 * 2 * 9 * N * H * W * Cin * C
    bytes_accessed = (int(xpad.size) * 2 + int(w1.size) * 2 + int(w2.size) * 2
                      + (int(b1v.size) + int(b2v.size)) * 4 + N * H * W * C * 4)

    out_nhwc = pl.pallas_call(
        _basic_block_kernel,
        out_shape=jax.ShapeDtypeStruct((N, H, W, C), jnp.float32),
        grid_spec=pltpu.PrefetchScalarGridSpec(
            num_scalar_prefetch=0,
            grid=(N, R),
            in_specs=[
                # whole padded image per batch element; block index constant along
                # the row-tile axis -> fetched once per n, resident across tiles.
                pl.BlockSpec((None, H + 4, W + 2, Cin), lambda n, r: (n, 0, 0, 0)),
                pl.BlockSpec((3, 3, Cin, C),            lambda n, r: (0, 0, 0, 0)),
                pl.BlockSpec((3, 3, C, C),              lambda n, r: (0, 0, 0, 0)),
                pl.BlockSpec((1, C),                    lambda n, r: (0, 0)),
                pl.BlockSpec((1, C),                    lambda n, r: (0, 0)),
            ],
            out_specs=pl.BlockSpec((None, TH, W, C), lambda n, r: (n, r, 0, 0)),
            scratch_shapes=[pltpu.VMEM((TH + 2, W + 2, C), jnp.bfloat16)],
        ),
        compiler_params=pltpu.CompilerParams(
            dimension_semantics=("parallel", "parallel"),
            vmem_limit_bytes=32 * 1024 * 1024),
        cost_estimate=pl.CostEstimate(flops=flops, transcendentals=0,
                                      bytes_accessed=bytes_accessed),
    )(xpad, w1, w2, b1v, b2v)

    return jnp.transpose(out_nhwc, (0, 3, 1, 2))                           # NCHW


def _reference_forward(x, w1, w2, bn1, bn2, eps=1e-5):
    """Plain-JAX NCHW reference (mirrors the PyTorch module in eval mode)."""
    def conv(a, w):
        return lax.conv_general_dilated(
            a, w, window_strides=(1, 1), padding=((1, 1), (1, 1)),
            dimension_numbers=('NCHW', 'OIHW', 'NCHW'))

    def bn(a, p):
        g, b, m, v = p
        g = g[None, :, None, None]; b = b[None, :, None, None]
        m = m[None, :, None, None]; v = v[None, :, None, None]
        return (a - m) / jnp.sqrt(v + eps) * g + b

    out = jax.nn.relu(bn(conv(x, w1), bn1))
    out = bn(conv(out, w2), bn2)
    return jax.nn.relu(out + x)


if __name__ == "__main__":
    key = jax.random.PRNGKey(0)
    ks = jax.random.split(key, 8)

    N, C, H, W = 2, 4, 16, 16     # inplanes == planes == 4, stride == 1

    x = jax.random.normal(ks[0], (N, C, H, W), jnp.float32)
    w1 = jax.random.normal(ks[1], (C, C, 3, 3), jnp.float32) * 0.1
    w2 = jax.random.normal(ks[2], (C, C, 3, 3), jnp.float32) * 0.1

    bn1 = (1.0 + 0.1 * jax.random.normal(ks[3], (C,), jnp.float32),   # gamma
           0.1 * jax.random.normal(ks[4], (C,), jnp.float32),         # beta
           jnp.zeros((C,), jnp.float32),                              # running_mean
           jnp.ones((C,), jnp.float32))                               # running_var
    bn2 = (1.0 + 0.1 * jax.random.normal(ks[5], (C,), jnp.float32),
           0.1 * jax.random.normal(ks[6], (C,), jnp.float32),
           jnp.zeros((C,), jnp.float32),
           jnp.ones((C,), jnp.float32))

    # tile_rows=8 -> grid (N=2, row_tiles=2); exercises the halo/mask path.
    out = basic_block_forward(x, w1, w2, bn1, bn2, tile_rows=8)
    out = jax.block_until_ready(out)

    ref = _reference_forward(x, w1, w2, bn1, bn2)
    assert out.shape == (N, C, H, W)
    # Matmul inputs are intentionally bf16 (per the perf review), so compare at a
    # bf16-appropriate tolerance.
    err = float(jnp.max(jnp.abs(out - ref)))
    assert jnp.allclose(out, ref, atol=5e-2, rtol=5e-2), f"mismatch vs reference (max |err| = {err})"

    print("KERNEL_OK")
</pallas_src>

<mosaic_0001>
module attributes {stable_mosaic.version = 11 : i64} {
  func.func @_basic_block_kernel(%arg0: i32, %arg1: i32, %arg2: memref<1x20x18x4xbf16, #tpu.memory_space<vmem>>, %arg3: memref<3x3x4x4xbf16, #tpu.memory_space<vmem>>, %arg4: memref<3x3x4x4xbf16, #tpu.memory_space<vmem>>, %arg5: memref<1x4xf32, #tpu.memory_space<vmem>>, %arg6: memref<1x4xf32, #tpu.memory_space<vmem>>, %arg7: memref<1x8x16x4xf32, #tpu.memory_space<vmem>>, %arg8: memref<10x18x4xbf16, #tpu.memory_space<vmem>>) attributes {dimension_semantics = [#tpu.dimension_semantics<parallel>, #tpu.dimension_semantics<parallel>], iteration_bounds = array<i64: 2, 2>, scalar_prefetch = 0 : i64, scratch_operands = 1 : i64, tpu.core_type = #tpu.core_type<tc>, window_params = [{transform_indices = @transform_0, window_bounds = array<i64: 1, 20, 18, 4>}, {pipeline_mode = #tpu.pipeline_mode<synchronous>, transform_indices = @transform_1, window_bounds = array<i64: 3, 3, 4, 4>}, {pipeline_mode = #tpu.pipeline_mode<synchronous>, transform_indices = @transform_2, window_bounds = array<i64: 3, 3, 4, 4>}, {pipeline_mode = #tpu.pipeline_mode<synchronous>, transform_indices = @transform_3, window_bounds = array<i64: 1, 4>}, {pipeline_mode = #tpu.pipeline_mode<synchronous>, transform_indices = @transform_4, window_bounds = array<i64: 1, 4>}, {transform_indices = @transform_5, window_bounds = array<i64: 1, 8, 16, 4>}]} {
    %c8_i32 = arith.constant 8 : i32
    %0 = arith.muli %arg1, %c8_i32 : i32
    %1 = tpu.assume_multiple %0, 8 : i32
    %c0 = arith.constant 0 : index
    %2 = arith.index_cast %1 : i32 to index
    %c0_0 = arith.constant 0 : index
    %c0_1 = arith.constant 0 : index
    %3 = vector.load %arg2[%c0, %2, %c0_0, %c0_1] : memref<1x20x18x4xbf16, #tpu.memory_space<vmem>>, vector<1x12x18x4xbf16>
    %4 = vector.shape_cast %3 : vector<1x12x18x4xbf16> to vector<12x18x4xbf16>
    %cst = arith.constant 0.000000e+00 : f32
    %5 = vector.broadcast %cst : f32 to vector<160x4xf32>
    %6 = vector.extract_strided_slice %4 {offsets = [0, 0, 0], sizes = [10, 16, 4], strides = [1, 1, 1]} : vector<12x18x4xbf16> to vector<10x16x4xbf16>
    %7 = vector.shape_cast %6 : vector<10x16x4xbf16> to vector<160x4xbf16>
    %c0_2 = arith.constant 0 : index
    %c0_3 = arith.constant 0 : index
    %c0_4 = arith.constant 0 : index
    %c0_5 = arith.constant 0 : index
    %8 = vector.load %arg3[%c0_2, %c0_3, %c0_4, %c0_5] : memref<3x3x4x4xbf16, #tpu.memory_space<vmem>>, vector<1x1x4x4xbf16>
    %9 = vector.shape_cast %8 : vector<1x1x4x4xbf16> to vector<4x4xbf16>
    %cst_6 = arith.constant dense<0.000000e+00> : vector<160x4xf32>
    %10 = tpu.matmul %7, %9, %cst_6 {dimension_numbers = #tpu.dot_dimension_numbers<[1], [0], [0], [1], [0, 0, 1, 1], [], []>} : vector<160x4xbf16>, vector<4x4xbf16>, vector<160x4xf32> -> vector<160x4xf32>
    %11 = arith.addf %5, %10 : vector<160x4xf32>
    %12 = vector.extract_strided_slice %4 {offsets = [0, 1, 0], sizes = [10, 16, 4], strides = [1, 1, 1]} : vector<12x18x4xbf16> to vector<10x16x4xbf16>
    %13 = vector.shape_cast %12 : vector<10x16x4xbf16> to vector<160x4xbf16>
    %c0_7 = arith.constant 0 : index
    %c1 = arith.constant 1 : index
    %c0_8 = arith.constant 0 : index
    %c0_9 = arith.constant 0 : index
    %14 = vector.load %arg3[%c0_7, %c1, %c0_8, %c0_9] : memref<3x3x4x4xbf16, #tpu.memory_space<vmem>>, vector<1x1x4x4xbf16>
    %15 = vector.shape_cast %14 : vector<1x1x4x4xbf16> to vector<4x4xbf16>
    %cst_10 = arith.constant dense<0.000000e+00> : vector<160x4xf32>
    %16 = tpu.matmul %13, %15, %cst_10 {dimension_numbers = #tpu.dot_dimension_numbers<[1], [0], [0], [1], [0, 0, 1, 1], [], []>} : vector<160x4xbf16>, vector<4x4xbf16>, vector<160x4xf32> -> vector<160x4xf32>
    %17 = arith.addf %11, %16 : vector<160x4xf32>
    %18 = vector.extract_strided_slice %4 {offsets = [0, 2, 0], sizes = [10, 16, 4], strides = [1, 1, 1]} : vector<12x18x4xbf16> to vector<10x16x4xbf16>
    %19 = vector.shape_cast %18 : vector<10x16x4xbf16> to vector<160x4xbf16>
    %c0_11 = arith.constant 0 : index
    %c2 = arith.constant 2 : index
    %c0_12 = arith.constant 0 : index
    %c0_13 = arith.constant 0 : index
    %20 = vector.load %arg3[%c0_11, %c2, %c0_12, %c0_13] : memref<3x3x4x4xbf16, #tpu.memory_space<vmem>>, vector<1x1x4x4xbf16>
    %21 = vector.shape_cast %20 : vector<1x1x4x4xbf16> to vector<4x4xbf16>
    %cst_14 = arith.constant dense<0.000000e+00> : vector<160x4xf32>
    %22 = tpu.matmul %19, %21, %cst_14 {dimension_numbers = #tpu.dot_dimension_numbers<[1], [0], [0], [1], [0, 0, 1, 1], [], []>} : vector<160x4xbf16>, vector<4x4xbf16>, vector<160x4xf32> -> vector<160x4xf32>
    %23 = arith.addf %17, %22 : vector<160x4xf32>
    %24 = vector.extract_strided_slice %4 {offsets = [1, 0, 0], sizes = [10, 16, 4], strides = [1, 1, 1]} : vector<12x18x4xbf16> to vector<10x16x4xbf16>
    %25 = vector.shape_cast %24 : vector<10x16x4xbf16> to vector<160x4xbf16>
    %c1_15 = arith.constant 1 : index
    %c0_16 = arith.constant 0 : index
    %c0_17 = arith.constant 0 : index
    %c0_18 = arith.constant 0 : index
    %26 = vector.load %arg3[%c1_15, %c0_16, %c0_17, %c0_18] : memref<3x3x4x4xbf16, #tpu.memory_space<vmem>>, vector<1x1x4x4xbf16>
    %27 = vector.shape_cast %26 : vector<1x1x4x4xbf16> to vector<4x4xbf16>
    %cst_19 = arith.constant dense<0.000000e+00> : vector<160x4xf32>
    %28 = tpu.matmul %25, %27, %cst_19 {dimension_numbers = #tpu.dot_dimension_numbers<[1], [0], [0], [1], [0, 0, 1, 1], [], []>} : vector<160x4xbf16>, vector<4x4xbf16>, vector<160x4xf32> -> vector<160x4xf32>
    %29 = arith.addf %23, %28 : vector<160x4xf32>
    %30 = vector.extract_strided_slice %4 {offsets = [1, 1, 0], sizes = [10, 16, 4], strides = [1, 1, 1]} : vector<12x18x4xbf16> to vector<10x16x4xbf16>
    %31 = vector.shape_cast %30 : vector<10x16x4xbf16> to vector<160x4xbf16>
    %c1_20 = arith.constant 1 : index
    %c1_21 = arith.constant 1 : index
    %c0_22 = arith.constant 0 : index
    %c0_23 = arith.constant 0 : index
    %32 = vector.load %arg3[%c1_20, %c1_21, %c0_22, %c0_23] : memref<3x3x4x4xbf16, #tpu.memory_space<vmem>>, vector<1x1x4x4xbf16>
    %33 = vector.shape_cast %32 : vector<1x1x4x4xbf16> to vector<4x4xbf16>
    %cst_24 = arith.constant dense<0.000000e+00> : vector<160x4xf32>
    %34 = tpu.matmul %31, %33, %cst_24 {dimension_numbers = #tpu.dot_dimension_numbers<[1], [0], [0], [1], [0, 0, 1, 1], [], []>} : vector<160x4xbf16>, vector<4x4xbf16>, vector<160x4xf32> -> vector<160x4xf32>
    %35 = arith.addf %29, %34 : vector<160x4xf32>
    %36 = vector.extract_strided_slice %4 {offsets = [1, 2, 0], sizes = [10, 16, 4], strides = [1, 1, 1]} : vector<12x18x4xbf16> to vector<10x16x4xbf16>
    %37 = vector.shape_cast %36 : vector<10x16x4xbf16> to vector<160x4xbf16>
    %c1_25 = arith.constant 1 : index
    %c2_26 = arith.constant 2 : index
    %c0_27 = arith.constant 0 : index
    %c0_28 = arith.constant 0 : index
    %38 = vector.load %arg3[%c1_25, %c2_26, %c0_27, %c0_28] : memref<3x3x4x4xbf16, #tpu.memory_space<vmem>>, vector<1x1x4x4xbf16>
    %39 = vector.shape_cast %38 : vector<1x1x4x4xbf16> to vector<4x4xbf16>
    %cst_29 = arith.constant dense<0.000000e+00> : vector<160x4xf32>
    %40 = tpu.matmul %37, %39, %cst_29 {dimension_numbers = #tpu.dot_dimension_numbers<[1], [0], [0], [1], [0, 0, 1, 1], [], []>} : vector<160x4xbf16>, vector<4x4xbf16>, vector<160x4xf32> -> vector<160x4xf32>
    %41 = arith.addf %35, %40 : vector<160x4xf32>
    %42 = vector.extract_strided_slice %4 {offsets = [2, 0, 0], sizes = [10, 16, 4], strides = [1, 1, 1]} : vector<12x18x4xbf16> to vector<10x16x4xbf16>
    %43 = vector.shape_cast %42 : vector<10x16x4xbf16> to vector<160x4xbf16>
    %c2_30 = arith.constant 2 : index
    %c0_31 = arith.constant 0 : index
    %c0_32 = arith.constant 0 : index
    %c0_33 = arith.constant 0 : index
    %44 = vector.load %arg3[%c2_30, %c0_31, %c0_32, %c0_33] : memref<3x3x4x4xbf16, #tpu.memory_space<vmem>>, vector<1x1x4x4xbf16>
    %45 = vector.shape_cast %44 : vector<1x1x4x4xbf16> to vector<4x4xbf16>
    %cst_34 = arith.constant dense<0.000000e+00> : vector<160x4xf32>
    %46 = tpu.matmul %43, %45, %cst_34 {dimension_numbers = #tpu.dot_dimension_numbers<[1], [0], [0], [1], [0, 0, 1, 1], [], []>} : vector<160x4xbf16>, vector<4x4xbf16>, vector<160x4xf32> -> vector<160x4xf32>
    %47 = arith.addf %41, %46 : vector<160x4xf32>
    %48 = vector.extract_strided_slice %4 {offsets = [2, 1, 0], sizes = [10, 16, 4], strides = [1, 1, 1]} : vector<12x18x4xbf16> to vector<10x16x4xbf16>
    %49 = vector.shape_cast %48 : vector<10x16x4xbf16> to vector<160x4xbf16>
    %c2_35 = arith.constant 2 : index
    %c1_36 = arith.constant 1 : index
    %c0_37 = arith.constant 0 : index
    %c0_38 = arith.constant 0 : index
    %50 = vector.load %arg3[%c2_35, %c1_36, %c0_37, %c0_38] : memref<3x3x4x4xbf16, #tpu.memory_space<vmem>>, vector<1x1x4x4xbf16>
    %51 = vector.shape_cast %50 : vector<1x1x4x4xbf16> to vector<4x4xbf16>
    %cst_39 = arith.constant dense<0.000000e+00> : vector<160x4xf32>
    %52 = tpu.matmul %49, %51, %cst_39 {dimension_numbers = #tpu.dot_dimension_numbers<[1], [0], [0], [1], [0, 0, 1, 1], [], []>} : vector<160x4xbf16>, vector<4x4xbf16>, vector<160x4xf32> -> vector<160x4xf32>
    %53 = arith.addf %47, %52 : vector<160x4xf32>
    %54 = vector.extract_strided_slice %4 {offsets = [2, 2, 0], sizes = [10, 16, 4], strides = [1, 1, 1]} : vector<12x18x4xbf16> to vector<10x16x4xbf16>
    %55 = vector.shape_cast %54 : vector<10x16x4xbf16> to vector<160x4xbf16>
    %c2_40 = arith.constant 2 : index
    %c2_41 = arith.constant 2 : index
    %c0_42 = arith.constant 0 : index
    %c0_43 = arith.constant 0 : index
    %56 = vector.load %arg3[%c2_40, %c2_41, %c0_42, %c0_43] : memref<3x3x4x4xbf16, #tpu.memory_space<vmem>>, vector<1x1x4x4xbf16>
    %57 = vector.shape_cast %56 : vector<1x1x4x4xbf16> to vector<4x4xbf16>
    %cst_44 = arith.constant dense<0.000000e+00> : vector<160x4xf32>
    %58 = tpu.matmul %55, %57, %cst_44 {dimension_numbers = #tpu.dot_dimension_numbers<[1], [0], [0], [1], [0, 0, 1, 1], [], []>} : vector<160x4xbf16>, vector<4x4xbf16>, vector<160x4xf32> -> vector<160x4xf32>
    %59 = arith.addf %53, %58 : vector<160x4xf32>
    %c0_45 = arith.constant 0 : index
    %c0_46 = arith.constant 0 : index
    %60 = vector.load %arg5[%c0_45, %c0_46] : memref<1x4xf32, #tpu.memory_space<vmem>>, vector<1x4xf32>
    %61 = vector.broadcast %60 : vector<1x4xf32> to vector<160x4xf32>
    %62 = arith.addf %59, %61 : vector<160x4xf32>
    %cst_47 = arith.constant 0.000000e+00 : f32
    %63 = vector.broadcast %cst_47 : f32 to vector<160x4xf32>
    %64 = arith.maximumf %62, %63 : vector<160x4xf32>
    %65 = vector.shape_cast %64 : vector<160x4xf32> to vector<10x16x4xf32>
    %c8_i32_48 = arith.constant 8 : i32
    %66 = arith.muli %arg1, %c8_i32_48 : i32
    %c1_i32 = arith.constant 1 : i32
    %67 = arith.subi %66, %c1_i32 : i32
    %68 = tpu.iota {dimensions = array<i32: 0>} : vector<10x1x1xi32>
    %69 = vector.broadcast %67 : i32 to vector<10x1x1xi32>
    %70 = arith.addi %69, %68 : vector<10x1x1xi32>
    %c0_i32 = arith.constant 0 : i32
    %71 = vector.broadcast %c0_i32 : i32 to vector<10x1x1xi32>
    %72 = arith.cmpi sge, %70, %71 : vector<10x1x1xi32>
    %c16_i32 = arith.constant 16 : i32
    %73 = vector.broadcast %c16_i32 : i32 to vector<10x1x1xi32>
    %74 = arith.cmpi slt, %70, %73 : vector<10x1x1xi32>
    %75 = arith.andi %72, %74 : vector<10x1x1xi1>
    %cst_49 = arith.constant 0.000000e+00 : f32
    %76 = vector.shape_cast %75 : vector<10x1x1xi1> to vector<10x1x1xi1>
    %77 = vector.broadcast %76 : vector<10x1x1xi1> to vector<10x16x4xi1>
    %78 = vector.broadcast %cst_49 : f32 to vector<10x16x4xf32>
    %79 = arith.select %77, %65, %78 : vector<10x16x4xi1>, vector<10x16x4xf32>
    %cst_50 = arith.constant 0.000000e+00 : bf16
    %80 = vector.broadcast %cst_50 : bf16 to vector<10x1x4xbf16>
    %c0_51 = arith.constant 0 : index
    %c0_52 = arith.constant 0 : index
    %c0_53 = arith.constant 0 : index
    %81 = vector.load %arg8[%c0_51, %c0_52, %c0_53] : memref<10x18x4xbf16, #tpu.memory_space<vmem>>, vector<10x1x4xbf16>
    tpu.vector_store %arg8[%c0_51, %c0_52, %c0_53], %80 {strides = array<i32>} : memref<10x18x4xbf16, #tpu.memory_space<vmem>>, vector<10x1x4xbf16>,
    %cst_54 = arith.constant 0.000000e+00 : bf16
    %82 = vector.broadcast %cst_54 : bf16 to vector<10x1x4xbf16>
    %c0_55 = arith.constant 0 : index
    %c17 = arith.constant 17 : index
    %c0_56 = arith.constant 0 : index
    %83 = vector.load %arg8[%c0_55, %c17, %c0_56] : memref<10x18x4xbf16, #tpu.memory_space<vmem>>, vector<10x1x4xbf16>
    tpu.vector_store %arg8[%c0_55, %c17, %c0_56], %82 {strides = array<i32>} : memref<10x18x4xbf16, #tpu.memory_space<vmem>>, vector<10x1x4xbf16>,
    %84 = arith.truncf %79 : vector<10x16x4xf32> to vector<10x16x4xbf16>
    %c0_57 = arith.constant 0 : index
    %c1_58 = arith.constant 1 : index
    %c0_59 = arith.constant 0 : index
    %85 = vector.load %arg8[%c0_57, %c1_58, %c0_59] : memref<10x18x4xbf16, #tpu.memory_space<vmem>>, vector<10x16x4xbf16>
    tpu.vector_store %arg8[%c0_57, %c1_58, %c0_59], %84 {strides = array<i32>} : memref<10x18x4xbf16, #tpu.memory_space<vmem>>, vector<10x16x4xbf16>,
    %cst_60 = arith.constant 0.000000e+00 : f32
    %86 = vector.broadcast %cst_60 : f32 to vector<128x4xf32>
    %c0_61 = arith.constant 0 : index
    %c0_62 = arith.constant 0 : index
    %c0_63 = arith.constant 0 : index
    %87 = vector.load %arg8[%c0_61, %c0_62, %c0_63] : memref<10x18x4xbf16, #tpu.memory_space<vmem>>, vector<8x16x4xbf16>
    %88 = vector.shape_cast %87 : vector<8x16x4xbf16> to vector<128x4xbf16>
    %c0_64 = arith.constant 0 : index
    %c0_65 = arith.constant 0 : index
    %c0_66 = arith.constant 0 : index
    %c0_67 = arith.constant 0 : index
    %89 = vector.load %arg4[%c0_64, %c0_65, %c0_66, %c0_67] : memref<3x3x4x4xbf16, #tpu.memory_space<vmem>>, vector<1x1x4x4xbf16>
    %90 = vector.shape_cast %89 : vector<1x1x4x4xbf16> to vector<4x4xbf16>
    %cst_68 = arith.constant dense<0.000000e+00> : vector<128x4xf32>
    %91 = tpu.matmul %88, %90, %cst_68 {dimension_numbers = #tpu.dot_dimension_numbers<[1], [0], [0], [1], [0, 0, 1, 1], [], []>} : vector<128x4xbf16>, vector<4x4xbf16>, vector<128x4xf32> -> vector<128x4xf32>
    %92 = arith.addf %86, %91 : vector<128x4xf32>
    %c0_69 = arith.constant 0 : index
    %c1_70 = arith.constant 1 : index
    %c0_71 = arith.constant 0 : index
    %93 = vector.load %arg8[%c0_69, %c1_70, %c0_71] : memref<10x18x4xbf16, #tpu.memory_space<vmem>>, vector<8x16x4xbf16>
    %94 = vector.shape_cast %93 : vector<8x16x4xbf16> to vector<128x4xbf16>
    %c0_72 = arith.constant 0 : index
    %c1_73 = arith.constant 1 : index
    %c0_74 = arith.constant 0 : index
    %c0_75 = arith.constant 0 : index
    %95 = vector.load %arg4[%c0_72, %c1_73, %c0_74, %c0_75] : memref<3x3x4x4xbf16, #tpu.memory_space<vmem>>, vector<1x1x4x4xbf16>
    %96 = vector.shape_cast %95 : vector<1x1x4x4xbf16> to vector<4x4xbf16>
    %cst_76 = arith.constant dense<0.000000e+00> : vector<128x4xf32>
    %97 = tpu.matmul %94, %96, %cst_76 {dimension_numbers = #tpu.dot_dimension_numbers<[1], [0], [0], [1], [0, 0, 1, 1], [], []>} : vector<128x4xbf16>, vector<4x4xbf16>, vector<128x4xf32> -> vector<128x4xf32>
    %98 = arith.addf %92, %97 : vector<128x4xf32>
    %c0_77 = arith.constant 0 : index
    %c2_78 = arith.constant 2 : index
    %c0_79 = arith.constant 0 : index
    %99 = vector.load %arg8[%c0_77, %c2_78, %c0_79] : memref<10x18x4xbf16, #tpu.memory_space<vmem>>, vector<8x16x4xbf16>
    %100 = vector.shape_cast %99 : vector<8x16x4xbf16> to vector<128x4xbf16>
    %c0_80 = arith.constant 0 : index
    %c2_81 = arith.constant 2 : index
    %c0_82 = arith.constant 0 : index
    %c0_83 = arith.constant 0 : index
    %101 = vector.load %arg4[%c0_80, %c2_81, %c0_82, %c0_83] : memref<3x3x4x4xbf16, #tpu.memory_space<vmem>>, vector<1x1x4x4xbf16>
    %102 = vector.shape_cast %101 : vector<1x1x4x4xbf16> to vector<4x4xbf16>
    %cst_84 = arith.constant dense<0.000000e+00> : vector<128x4xf32>
    %103 = tpu.matmul %100, %102, %cst_84 {dimension_numbers = #tpu.dot_dimension_numbers<[1], [0], [0], [1], [0, 0, 1, 1], [], []>} : vector<128x4xbf16>, vector<4x4xbf16>, vector<128x4xf32> -> vector<128x4xf32>
    %104 = arith.addf %98, %103 : vector<128x4xf32>
    %c1_85 = arith.constant 1 : index
    %c0_86 = arith.constant 0 : index
    %c0_87 = arith.constant 0 : index
    %105 = vector.load %arg8[%c1_85, %c0_86, %c0_87] : memref<10x18x4xbf16, #tpu.memory_space<vmem>>, vector<8x16x4xbf16>
    %106 = vector.shape_cast %105 : vector<8x16x4xbf16> to vector<128x4xbf16>
    %c1_88 = arith.constant 1 : index
    %c0_89 = arith.constant 0 : index
    %c0_90 = arith.constant 0 : index
    %c0_91 = arith.constant 0 : index
    %107 = vector.load %arg4[%c1_88, %c0_89, %c0_90, %c0_91] : memref<3x3x4x4xbf16, #tpu.memory_space<vmem>>, vector<1x1x4x4xbf16>
    %108 = vector.shape_cast %107 : vector<1x1x4x4xbf16> to vector<4x4xbf16>
    %cst_92 = arith.constant dense<0.000000e+00> : vector<128x4xf32>
    %109 = tpu.matmul %106, %108, %cst_92 {dimension_numbers = #tpu.dot_dimension_numbers<[1], [0], [0], [1], [0, 0, 1, 1], [], []>} : vector<128x4xbf16>, vector<4x4xbf16>, vector<128x4xf32> -> vector<128x4xf32>
    %110 = arith.addf %104, %109 : vector<128x4xf32>
    %c1_93 = arith.constant 1 : index
    %c1_94 = arith.constant 1 : index
    %c0_95 = arith.constant 0 : index
    %111 = vector.load %arg8[%c1_93, %c1_94, %c0_95] : memref<10x18x4xbf16, #tpu.memory_space<vmem>>, vector<8x16x4xbf16>
    %112 = vector.shape_cast %111 : vector<8x16x4xbf16> to vector<128x4xbf16>
    %c1_96 = arith.constant 1 : index
    %c1_97 = arith.constant 1 : index
    %c0_98 = arith.constant 0 : index
    %c0_99 = arith.constant 0 : index
    %113 = vector.load %arg4[%c1_96, %c1_97, %c0_98, %c0_99] : memref<3x3x4x4xbf16, #tpu.memory_space<vmem>>, vector<1x1x4x4xbf16>
    %114 = vector.shape_cast %113 : vector<1x1x4x4xbf16> to vector<4x4xbf16>
    %cst_100 = arith.constant dense<0.000000e+00> : vector<128x4xf32>
    %115 = tpu.matmul %112, %114, %cst_100 {dimension_numbers = #tpu.dot_dimension_numbers<[1], [0], [0], [1], [0, 0, 1, 1], [], []>} : vector<128x4xbf16>, vector<4x4xbf16>, vector<128x4xf32> -> vector<128x4xf32>
    %116 = arith.addf %110, %115 : vector<128x4xf32>
    %c1_101 = arith.constant 1 : index
    %c2_102 = arith.constant 2 : index
    %c0_103 = arith.constant 0 : index
    %117 = vector.load %arg8[%c1_101, %c2_102, %c0_103] : memref<10x18x4xbf16, #tpu.memory_space<vmem>>, vector<8x16x4xbf16>
    %118 = vector.shape_cast %117 : vector<8x16x4xbf16> to vector<128x4xbf16>
    %c1_104 = arith.constant 1 : index
    %c2_105 = arith.constant 2 : index
    %c0_106 = arith.constant 0 : index
    %c0_107 = arith.constant 0 : index
    %119 = vector.load %arg4[%c1_104, %c2_105, %c0_106, %c0_107] : memref<3x3x4x4xbf16, #tpu.memory_space<vmem>>, vector<1x1x4x4xbf16>
    %120 = vector.shape_cast %119 : vector<1x1x4x4xbf16> to vector<4x4xbf16>
    %cst_108 = arith.constant dense<0.000000e+00> : vector<128x4xf32>
    %121 = tpu.matmul %118, %120, %cst_108 {dimension_numbers = #tpu.dot_dimension_numbers<[1], [0], [0], [1], [0, 0, 1, 1], [], []>} : vector<128x4xbf16>, vector<4x4xbf16>, vector<128x4xf32> -> vector<128x4xf32>
    %122 = arith.addf %116, %121 : vector<128x4xf32>
    %c2_109 = arith.constant 2 : index
    %c0_110 = arith.constant 0 : index
    %c0_111 = arith.constant 0 : index
    %123 = vector.load %arg8[%c2_109, %c0_110, %c0_111] : memref<10x18x4xbf16, #tpu.memory_space<vmem>>, vector<8x16x4xbf16>
    %124 = vector.shape_cast %123 : vector<8x16x4xbf16> to vector<128x4xbf16>
    %c2_112 = arith.constant 2 : index
    %c0_113 = arith.constant 0 : index
    %c0_114 = arith.constant 0 : index
    %c0_115 = arith.constant 0 : index
    %125 = vector.load %arg4[%c2_112, %c0_113, %c0_114, %c0_115] : memref<3x3x4x4xbf16, #tpu.memory_space<vmem>>, vector<1x1x4x4xbf16>
    %126 = vector.shape_cast %125 : vector<1x1x4x4xbf16> to vector<4x4xbf16>
    %cst_116 = arith.constant dense<0.000000e+00> : vector<128x4xf32>
    %127 = tpu.matmul %124, %126, %cst_116 {dimension_numbers = #tpu.dot_dimension_numbers<[1], [0], [0], [1], [0, 0, 1, 1], [], []>} : vector<128x4xbf16>, vector<4x4xbf16>, vector<128x4xf32> -> vector<128x4xf32>
    %128 = arith.addf %122, %127 : vector<128x4xf32>
    %c2_117 = arith.constant 2 : index
    %c1_118 = arith.constant 1 : index
    %c0_119 = arith.constant 0 : index
    %129 = vector.load %arg8[%c2_117, %c1_118, %c0_119] : memref<10x18x4xbf16, #tpu.memory_space<vmem>>, vector<8x16x4xbf16>
    %130 = vector.shape_cast %129 : vector<8x16x4xbf16> to vector<128x4xbf16>
    %c2_120 = arith.constant 2 : index
    %c1_121 = arith.constant 1 : index
    %c0_122 = arith.constant 0 : index
    %c0_123 = arith.constant 0 : index
    %131 = vector.load %arg4[%c2_120, %c1_121, %c0_122, %c0_123] : memref<3x3x4x4xbf16, #tpu.memory_space<vmem>>, vector<1x1x4x4xbf16>
    %132 = vector.shape_cast %131 : vector<1x1x4x4xbf16> to vector<4x4xbf16>
    %cst_124 = arith.constant dense<0.000000e+00> : vector<128x4xf32>
    %133 = tpu.matmul %130, %132, %cst_124 {dimension_numbers = #tpu.dot_dimension_numbers<[1], [0], [0], [1], [0, 0, 1, 1], [], []>} : vector<128x4xbf16>, vector<4x4xbf16>, vector<128x4xf32> -> vector<128x4xf32>
    %134 = arith.addf %128, %133 : vector<128x4xf32>
    %c2_125 = arith.constant 2 : index
    %c2_126 = arith.constant 2 : index
    %c0_127 = arith.constant 0 : index
    %135 = vector.load %arg8[%c2_125, %c2_126, %c0_127] : memref<10x18x4xbf16, #tpu.memory_space<vmem>>, vector<8x16x4xbf16>
    %136 = vector.shape_cast %135 : vector<8x16x4xbf16> to vector<128x4xbf16>
    %c2_128 = arith.constant 2 : index
    %c2_129 = arith.constant 2 : index
    %c0_130 = arith.constant 0 : index
    %c0_131 = arith.constant 0 : index
    %137 = vector.load %arg4[%c2_128, %c2_129, %c0_130, %c0_131] : memref<3x3x4x4xbf16, #tpu.memory_space<vmem>>, vector<1x1x4x4xbf16>
    %138 = vector.shape_cast %137 : vector<1x1x4x4xbf16> to vector<4x4xbf16>
    %cst_132 = arith.constant dense<0.000000e+00> : vector<128x4xf32>
    %139 = tpu.matmul %136, %138, %cst_132 {dimension_numbers = #tpu.dot_dimension_numbers<[1], [0], [0], [1], [0, 0, 1, 1], [], []>} : vector<128x4xbf16>, vector<4x4xbf16>, vector<128x4xf32> -> vector<128x4xf32>
    %140 = arith.addf %134, %139 : vector<128x4xf32>
    %c2_i32 = arith.constant 2 : i32
    %141 = arith.addi %1, %c2_i32 : i32
    %c0_133 = arith.constant 0 : index
    %142 = arith.index_cast %141 : i32 to index
    %c1_134 = arith.constant 1 : index
    %c0_135 = arith.constant 0 : index
    %143 = vector.load %arg2[%c0_133, %142, %c1_134, %c0_135] : memref<1x20x18x4xbf16, #tpu.memory_space<vmem>>, vector<1x8x16x4xbf16>
    %144 = vector.shape_cast %143 : vector<1x8x16x4xbf16> to vector<8x16x4xbf16>
    %145 = arith.extf %144 : vector<8x16x4xbf16> to vector<8x16x4xf32>
    %c0_136 = arith.constant 0 : index
    %c0_137 = arith.constant 0 : index
    %146 = vector.load %arg6[%c0_136, %c0_137] : memref<1x4xf32, #tpu.memory_space<vmem>>, vector<1x4xf32>
    %147 = vector.broadcast %146 : vector<1x4xf32> to vector<128x4xf32>
    %148 = arith.addf %140, %147 : vector<128x4xf32>
    %149 = vector.shape_cast %148 : vector<128x4xf32> to vector<8x16x4xf32>
    %150 = arith.addf %149, %145 : vector<8x16x4xf32>
    %cst_138 = arith.constant 0.000000e+00 : f32
    %151 = vector.broadcast %cst_138 : f32 to vector<8x16x4xf32>
    %152 = arith.maximumf %150, %151 : vector<8x16x4xf32>
    %c0_139 = arith.constant 0 : index
    %c0_140 = arith.constant 0 : index
    %c0_141 = arith.constant 0 : index
    %c0_142 = arith.constant 0 : index
    %153 = vector.load %arg7[%c0_139, %c0_140, %c0_141, %c0_142] : memref<1x8x16x4xf32, #tpu.memory_space<vmem>>, vector<1x8x16x4xf32>
    %154 = vector.shape_cast %153 : vector<1x8x16x4xf32> to vector<8x16x4xf32>
    %155 = vector.shape_cast %152 : vector<8x16x4xf32> to vector<1x8x16x4xf32>
    tpu.vector_store %arg7[%c0_139, %c0_140, %c0_141, %c0_142], %155 {strides = array<i32>} : memref<1x8x16x4xf32, #tpu.memory_space<vmem>>, vector<1x8x16x4xf32>,
    return
  }
  func.func @transform_0(%arg0: i32, %arg1: i32) -> (i32, i32, i32, i32) {
    %c0_i32 = arith.constant 0 : i32
    %c0_i32_0 = arith.constant 0 : i32
    %c0_i32_1 = arith.constant 0 : i32
    %c0_i32_2 = arith.constant 0 : i32
    return %arg0, %c0_i32, %c0_i32_0, %c0_i32_1 : i32, i32, i32, i32
  }
  func.func @transform_1(%arg0: i32, %arg1: i32) -> (i32, i32, i32, i32) {
    %c0_i32 = arith.constant 0 : i32
    %c0_i32_0 = arith.constant 0 : i32
    %c0_i32_1 = arith.constant 0 : i32
    %c0_i32_2 = arith.constant 0 : i32
    %c0_i32_3 = arith.constant 0 : i32
    return %c0_i32, %c0_i32_0, %c0_i32_1, %c0_i32_2 : i32, i32, i32, i32
  }
  func.func @transform_2(%arg0: i32, %arg1: i32) -> (i32, i32, i32, i32) {
    %c0_i32 = arith.constant 0 : i32
    %c0_i32_0 = arith.constant 0 : i32
    %c0_i32_1 = arith.constant 0 : i32
    %c0_i32_2 = arith.constant 0 : i32
    %c0_i32_3 = arith.constant 0 : i32
    return %c0_i32, %c0_i32_0, %c0_i32_1, %c0_i32_2 : i32, i32, i32, i32
  }
  func.func @transform_3(%arg0: i32, %arg1: i32) -> (i32, i32) {
    %c0_i32 = arith.constant 0 : i32
    %c0_i32_0 = arith.constant 0 : i32
    %c0_i32_1 = arith.constant 0 : i32
    return %c0_i32, %c0_i32_0 : i32, i32
  }
  func.func @transform_4(%arg0: i32, %arg1: i32) -> (i32, i32) {
    %c0_i32 = arith.constant 0 : i32
    %c0_i32_0 = arith.constant 0 : i32
    %c0_i32_1 = arith.constant 0 : i32
    return %c0_i32, %c0_i32_0 : i32, i32
  }
  func.func @transform_5(%arg0: i32, %arg1: i32) -> (i32, i32, i32, i32) {
    %c0_i32 = arith.constant 0 : i32
    %c0_i32_0 = arith.constant 0 : i32
    %c0_i32_1 = arith.constant 0 : i32
    return %arg0, %arg1, %c0_i32, %c0_i32_0 : i32, i32, i32, i32
  }
}

</mosaic_0001>

<llo_original>
// kernel: tpu_custom_call.1
$region0: #{tpu_custom_call.1}
  #allocation0 [shape = 'u32[]', space=smem, size = 0x4, offset = 0x4, fixed_abs, tag = 'smem constant byte address 0x4 - core index']
  #allocation1 [shape = 'u32[144,128]{1,0:T(1,128)}', space=vmem, size = 0x12000, scoped, tag = 'internal scratch']
  #allocation2 [shape = 'bf16[10,18,4]{2,1,0:T(8,128)(2,1)}', space=vmem, size = 0xf000, scoped, tag = 'scratch operand']
  %s0 = inlined_call_operand.vmem [shape: bf16[2,20,18,4], index: 0, kind: input, shape index: {}]
  %s1 = inlined_call_operand.vmem [shape: bf16[3,3,4,4], index: 1, kind: input, shape index: {}]
  %s2 = inlined_call_operand.vmem [shape: bf16[3,3,4,4], index: 2, kind: input, shape index: {}]
  %s3 = inlined_call_operand.vmem [shape: f32[1,4], index: 3, kind: input, shape index: {}]
  %s4 = inlined_call_operand.vmem [shape: f32[1,4], index: 4, kind: input, shape index: {}]
  %s5 = inlined_call_operand.vmem [shape: f32[2,16,16,4], index: 5, kind: output, shape index: {}]
  %s6 = sld [smem:[#allocation0]]
  $region53: #{tpu_custom_call.1} parent=0
    _
  %s8 = ssub.s32 1, %s6
  %s9 = scalar_select 0, %s8, %s6
  loop: start=0, step=1, limit=6
  $region2: #{tpu_custom_call.1} parent=0 // loop_pre_header
    _
  $region3: #{tpu_custom_call.1} parent=0 // loop_header
    %s11 = sphi 0, %s15
    %p12 = scmp.ge.s32.totalorder %s11, 6
    %s18 = sphi 0, %s30
    %s19 = sphi 0, %s26
    %s20 = sphi 0, %s18
    %s21 = sphi 0, %s19
    %s22 = sphi 0, %s20
    %s23 = sphi 0, %s21
    %s33 = sphi 0, %s35
    %s36 = sphi 0, %s33
    %s37 = sphi 0, %s36
    %s53 = sphi 0, %s37
    %s57 = sphi 0, %s57
    %s59 = sphi 0, %s57
    %s60 = sphi 0, %s59
    %s74 = sphi 0, %s60
    %s78 = sphi 0, %s78
    %s80 = sphi 0, %s78
    %s81 = sphi 0, %s80
    %s95 = sphi 0, %s81
    %s99 = sphi 0, %s99
    %s101 = sphi 0, %s99
    %s102 = sphi 0, %s101
    %s116 = sphi 0, %s102
    %s120 = sphi 0, %s120
    %s122 = sphi 0, %s120
    %s123 = sphi 0, %s122
    %s137 = sphi 0, %s123
    %s145 = sphi 0, %s147
    %s148 = sphi 0, %s145
    %s149 = sphi 0, %s148
    %s165 = sphi 0, %s149
  $region4: #{tpu_custom_call.1} parent=0 // loop_header_branch
    %14 = sbr.rel (%p12) target = $region8
  $region5: #{tpu_custom_call.1} parent=0 // loop_body
    %s16 = ssub.s32 %s11, 1
    %s17 = ssub.s32 %s11, 2
    %s24 = sadd.s32 1, %s19
    %p25 = scmp.ge.s32.totalorder %s24, 2
    %s26 = scalar_select %p25, 0, %s24
    %s27 = sadd.s32 1, %s18
    %s28 = scalar_select %p25, %s27, %s18
    %p29 = scmp.ge.s32.totalorder %s28, 2
    %s30 = scalar_select %p29, 0, %s28
    %s31 = ssub.s32 %s18, %s30
    %p32 = scmp.eq.s32.totalorder %s31, 0
    %s34 = sadd.s32 %s33, 1
    %s35 = scalar_select %p32, %s33, %s34
    %p38 = pneg %p32
    %p39 = scmp.eq.s32.totalorder %s11, 3
    %p40 = por %p38, %p39
    %p41 = scmp.ne.s32.totalorder %s33, %s36
    %p42 = scmp.eq.s32.totalorder %s11, 0
    %p43 = por %p41, %p42
    %p44 = scmp.ne.s32.totalorder %s33, %s36
    %p45 = scmp.eq.s32.totalorder %s16, 3
    %p46 = por %p44, %p45
    %p47 = scmp.ne.s32.totalorder %s36, %s37
    %p48 = scmp.eq.s32.totalorder %s16, 0
    %p49 = por %p47, %p48
    %p50 = scmp.ne.s32.totalorder %s36, %s37
    %p51 = scmp.eq.s32.totalorder %s17, 3
    %p52 = por %p50, %p51
    %p54 = scmp.ne.s32.totalorder %s37, %s53
    %p55 = scmp.eq.s32.totalorder %s17, 0
    %p56 = por %p54, %p55
    %s58 = sadd.s32 %s57, 1
    %p61 = scmp.eq.s32.totalorder %s11, 3
    %p62 = scmp.ne.s32.totalorder %s57, %s59
    %p63 = scmp.eq.s32.totalorder %s11, 0
    %p64 = por %p62, %p63
    %p65 = scmp.ne.s32.totalorder %s57, %s59
    %p66 = scmp.eq.s32.totalorder %s16, 3
    %p67 = por %p65, %p66
    %p68 = scmp.ne.s32.totalorder %s59, %s60
    %p69 = scmp.eq.s32.totalorder %s16, 0
    %p70 = por %p68, %p69
    %p71 = scmp.ne.s32.totalorder %s59, %s60
    %p72 = scmp.eq.s32.totalorder %s17, 3
    %p73 = por %p71, %p72
    %p75 = scmp.ne.s32.totalorder %s60, %s74
    %p76 = scmp.eq.s32.totalorder %s17, 0
    %p77 = por %p75, %p76
    %s79 = sadd.s32 %s78, 1
    %p82 = scmp.eq.s32.totalorder %s11, 3
    %p83 = scmp.ne.s32.totalorder %s78, %s80
    %p84 = scmp.eq.s32.totalorder %s11, 0
    %p85 = por %p83, %p84
    %p86 = scmp.ne.s32.totalorder %s78, %s80
    %p87 = scmp.eq.s32.totalorder %s16, 3
    %p88 = por %p86, %p87
    %p89 = scmp.ne.s32.totalorder %s80, %s81
    %p90 = scmp.eq.s32.totalorder %s16, 0
    %p91 = por %p89, %p90
    %p92 = scmp.ne.s32.totalorder %s80, %s81
    %p93 = scmp.eq.s32.totalorder %s17, 3
    %p94 = por %p92, %p93
    %p96 = scmp.ne.s32.totalorder %s81, %s95
    %p97 = scmp.eq.s32.totalorder %s17, 0
    %p98 = por %p96, %p97
    %s100 = sadd.s32 %s99, 1
    %p103 = scmp.eq.s32.totalorder %s11, 3
    %p104 = scmp.ne.s32.totalorder %s99, %s101
    %p105 = scmp.eq.s32.totalorder %s11, 0
    %p106 = por %p104, %p105
    %p107 = scmp.ne.s32.totalorder %s99, %s101
    %p108 = scmp.eq.s32.totalorder %s16, 3
    %p109 = por %p107, %p108
    %p110 = scmp.ne.s32.totalorder %s101, %s102
    %p111 = scmp.eq.s32.totalorder %s16, 0
    %p112 = por %p110, %p111
    %p113 = scmp.ne.s32.totalorder %s101, %s102
    %p114 = scmp.eq.s32.totalorder %s17, 3
    %p115 = por %p113, %p114
    %p117 = scmp.ne.s32.totalorder %s102, %s116
    %p118 = scmp.eq.s32.totalorder %s17, 0
    %p119 = por %p117, %p118
    %s121 = sadd.s32 %s120, 1
    %p124 = scmp.eq.s32.totalorder %s11, 3
    %p125 = scmp.ne.s32.totalorder %s120, %s122
    %p126 = scmp.eq.s32.totalorder %s11, 0
    %p127 = por %p125, %p126
    %p128 = scmp.ne.s32.totalorder %s120, %s122
    %p129 = scmp.eq.s32.totalorder %s16, 3
    %p130 = por %p128, %p129
    %p131 = scmp.ne.s32.totalorder %s122, %s123
    %p132 = scmp.eq.s32.totalorder %s16, 0
    %p133 = por %p131, %p132
    %p134 = scmp.ne.s32.totalorder %s122, %s123
    %p135 = scmp.eq.s32.totalorder %s17, 3
    %p136 = por %p134, %p135
    %p138 = scmp.ne.s32.totalorder %s123, %s137
    %p139 = scmp.eq.s32.totalorder %s17, 0
    %p140 = por %p138, %p139
    %s141 = ssub.s32 %s18, %s30
    %s142 = ssub.s32 %s19, %s26
    %s143 = sor.u32 %s141, %s142
    %p144 = scmp.eq.s32.totalorder %s143, 0
    %s146 = sadd.s32 %s145, 1
    %s147 = scalar_select %p144, %s145, %s146
    %p150 = pneg %p144
    %p151 = scmp.eq.s32.totalorder %s11, 3
    %p152 = por %p150, %p151
    %p153 = scmp.ne.s32.totalorder %s145, %s148
    %p154 = scmp.eq.s32.totalorder %s11, 0
    %p155 = por %p153, %p154
    %p156 = scmp.ne.s32.totalorder %s145, %s148
    %p157 = scmp.eq.s32.totalorder %s16, 3
    %p158 = por %p156, %p157
    %p159 = scmp.ne.s32.totalorder %s148, %s149
    %p160 = scmp.eq.s32.totalorder %s16, 0
    %p161 = por %p159, %p160
    %p162 = scmp.ne.s32.totalorder %s148, %s149
    %p163 = scmp.eq.s32.totalorder %s17, 3
    %p164 = por %p162, %p163
    %p166 = scmp.ne.s32.totalorder %s149, %s165
    %p167 = scmp.eq.s32.totalorder %s17, 0
    %p168 = por %p166, %p167
    %p169 = scmp.le.s32.totalorder 1, %s11
    %p170 = scmp.lt.s32.totalorder %s11, 5
    %p171 = pnand %p169, %p170
    %p172 = pneg %p171
    // Predicated region
    $region9: #{tpu_custom_call.1} parent=5 // pred_check
      _
    $region10: #{tpu_custom_call.1} parent=5 // pred_check_branch
      %174 = sbr.rel (%p171) target = $region12
    $region11: #{tpu_custom_call.1} parent=5 // pred_region
      %s175 = ssub.s32 %s11, 1
      // Predicated region
      $region13: #{tpu_custom_call.1} parent=11 // pred_check
        %p176 = pneg %p70
      $region14: #{tpu_custom_call.1} parent=11 // pred_check_branch
        %178 = sbr.rel (%p176) target = $region16
      $region15: #{tpu_custom_call.1} parent=11 // pred_region
        _
      $region16: #{tpu_custom_call.1} parent=11 // pred_fallthru
        _
      // Predicated region
      $region17: #{tpu_custom_call.1} parent=11 // pred_check
        %p179 = pneg %p91
      $region18: #{tpu_custom_call.1} parent=11 // pred_check_branch
        %181 = sbr.rel (%p179) target = $region20
      $region19: #{tpu_custom_call.1} parent=11 // pred_region
        _
      $region20: #{tpu_custom_call.1} parent=11 // pred_fallthru
        _
      // Predicated region
      $region21: #{tpu_custom_call.1} parent=11 // pred_check
        %p182 = pneg %p112
      $region22: #{tpu_custom_call.1} parent=11 // pred_check_branch
        %184 = sbr.rel (%p182) target = $region24
      $region23: #{tpu_custom_call.1} parent=11 // pred_region
        _
      $region24: #{tpu_custom_call.1} parent=11 // pred_fallthru
        _
      // Predicated region
      $region25: #{tpu_custom_call.1} parent=11 // pred_check
        %p185 = pneg %p133
      $region26: #{tpu_custom_call.1} parent=11 // pred_check_branch
        %187 = sbr.rel (%p185) target = $region28
      $region27: #{tpu_custom_call.1} parent=11 // pred_region
        _
      $region28: #{tpu_custom_call.1} parent=11 // pred_fallthru
        _
    $region12: #{tpu_custom_call.1} parent=5 // pred_fallthru
      _
    %p188 = scmp.lt.s32.totalorder %s11, 4
    // Predicated region
    $region29: #{tpu_custom_call.1} parent=5 // pred_check
      %p189 = pneg %p188
    $region30: #{tpu_custom_call.1} parent=5 // pred_check_branch
      %191 = sbr.rel (%p189) target = $region32
    $region31: #{tpu_custom_call.1} parent=5 // pred_region
      // Predicated region
      $region33: #{tpu_custom_call.1} parent=31 // pred_check
        %p192 = pneg %p43
      $region34: #{tpu_custom_call.1} parent=31 // pred_check_branch
        %194 = sbr.rel (%p192) target = $region36
      $region35: #{tpu_custom_call.1} parent=31 // pred_region
        %p195 = scmp.lt.s32.totalorder %s18, 1
        %s196 = scalar_select %p195, %s18, 1
        %s197 = smul.addr %s196, 60
        %s198 = smul.addr %s197, 4
        %s199 = scalar_lea.vmem %s0, %s198
      $region36: #{tpu_custom_call.1} parent=31 // pred_fallthru
        _
    $region32: #{tpu_custom_call.1} parent=5 // pred_fallthru
      _
    %p200 = scmp.le.s32.totalorder 1, %s11
    %p201 = scmp.lt.s32.totalorder %s11, 5
    %p202 = pnand %p200, %p201
    %p203 = pneg %p202
    // Predicated region
    $region37: #{tpu_custom_call.1} parent=5 // pred_check
      _
    $region38: #{tpu_custom_call.1} parent=5 // pred_check_branch
      %205 = sbr.rel (%p202) target = $region40
    $region39: #{tpu_custom_call.1} parent=5 // pred_region
      %s206 = ssub.s32 %s11, 1
      %p207 = scmp.lt.s32.totalorder %s20, 1
      %s208 = scalar_select %p207, %s20, 1
      %s209 = smul.addr %s208, 60
      %s210 = smul.addr %s209, 4
      %s211 = scalar_lea.vmem %s0, %s210
      %p212 = pneg %p49
      %p213 = pneg %p46
      %p214 = pneg %p70
      %p215 = pneg %p67
      %p216 = pneg %p91
      %p217 = pneg %p88
      %p218 = pneg %p112
      %p219 = pneg %p109
      %p220 = pneg %p133
      %p221 = pneg %p130
      %p222 = pneg %p161
      %p223 = pneg %p158
      %s224 = smul.u32 8, %s21
      %p225 = scmp.lt.s32.totalorder %s20, 1
      %s226 = scalar_select %p225, %s20, 1
      %p227 = scmp.lt.s32.totalorder %s224, 15
      %s228 = scalar_select %p227, %s224, 15
      %s229 = smul.addr %s228, 2
      %s230 = smul.addr %s226, 32
      %s231 = sadd.s32 %s229, %s230
      %s232 = smul.addr %s231, 8
      %s233 = scalar_lea.vmem %s5, %s232
      %p234 = scmp.lt.s32.totalorder %s20, 1
      %s235 = scalar_select %p234, %s20, 1
      %s236 = smul.addr %s235, 60
      %s237 = smul.addr %s236, 4
      %s238 = scalar_lea.vmem %s0, %s237
      %s239 = smul.u32 8, %s21
      %p240 = scmp.lt.s32.totalorder %s20, 1
      %s241 = scalar_select %p240, %s20, 1
      %p242 = scmp.lt.s32.totalorder %s239, 15
      %s243 = scalar_select %p242, %s239, 15
      %s244 = smul.addr %s243, 2
      %s245 = smul.addr %s241, 32
      %s246 = sadd.s32 %s244, %s245
      %s247 = smul.addr %s246, 8
      %s248 = scalar_lea.vmem %s5, %s247
      %s249 = smul.u32 8, %s21
      %s251 = smul.u32 %s21, 8
      %s252 = smul.u32 %s251, 3
      %s253 = smul.addr %s252, 4
      %s254 = scalar_lea.vmem %s238, %s253
      %v255 = vld [vmem:[%s254] sm:$0xf]
      %v256 = vld [vmem:[%s254 + $0x4] sm:$0xf]
      %v257 = vld [vmem:[%s254 + $0x8] sm:$0x1]
      %v258 = vld [vmem:[%s254 + $0xc] sm:$0xf]
      %v259 = vld [vmem:[%s254 + $0x10] sm:$0xf]
      %v260 = vld [vmem:[%s254 + $0x14] sm:$0x1]
      %v261 = vld [vmem:[%s254 + $0x18] sm:$0xf]
      %v262 = vld [vmem:[%s254 + $0x1c] sm:$0xf]
      %v263 = vld [vmem:[%s254 + $0x20] sm:$0x1]
      %v264 = vld [vmem:[%s254 + $0x24] sm:$0xf]
      %v265 = vld [vmem:[%s254 + $0x28] sm:$0xf]
      %v266 = vld [vmem:[%s254 + $0x2c] sm:$0x1]
      %v267 = vld [vmem:[%s254 + $0x30] sm:$0xf]
      %v268 = vld [vmem:[%s254 + $0x34] sm:$0xf]
      %v269 = vld [vmem:[%s254 + $0x38] sm:$0x1]
      %v270 = vld [vmem:[%s254 + $0x3c] sm:$0xf]
      %v271 = vld [vmem:[%s254 + $0x40] sm:$0xf]
      %v272 = vld [vmem:[%s254 + $0x44] sm:$0x1]
      %v273 = vld [vmem:[%s254 + $0x48] sm:$0xf]
      %v274 = vld [vmem:[%s254 + $0x4c] sm:$0xf]
      %v275 = vld [vmem:[%s254 + $0x50] sm:$0x1]
      %v276 = vld [vmem:[%s254 + $0x54] sm:$0xf]
      %v277 = vld [vmem:[%s254 + $0x58] sm:$0xf]
      %v278 = vld [vmem:[%s254 + $0x5c] sm:$0x1]
      %v279 = vld [vmem:[%s254 + $0x60] sm:$0xf]
      %v280 = vld [vmem:[%s254 + $0x64] sm:$0xf]
      %v281 = vld [vmem:[%s254 + $0x68] sm:$0x1]
      %v282 = vld [vmem:[%s254 + $0x6c] sm:$0xf]
      %v283 = vld [vmem:[%s254 + $0x70] sm:$0xf]
      %v284 = vld [vmem:[%s254 + $0x74] sm:$0x1]
      %v285 = vld [vmem:[%s254 + $0x78] sm:$0xf]
      %v286 = vld [vmem:[%s254 + $0x7c] sm:$0xf]
      %v287 = vld [vmem:[%s254 + $0x80] sm:$0x1]
      %v288 = vld [vmem:[%s254 + $0x84] sm:$0xf]
      %v289 = vld [vmem:[%s254 + $0x88] sm:$0xf]
      %v290 = vld [vmem:[%s254 + $0x8c] sm:$0x1]
      %v291 = vld [vmem:[%s1] sm:$0x3]
      %vm292 = vsmask.f32 3328
      %vm293 = vsmask.f32 7440
      %vm294 = vmor %vm292, %vm293
      %v296 = vshrl.u32 %v255, 16
      %v298 = vrot.slane %v296, 4
      %v299 = vshll.u32 %v255, 16
      %v301 = vrot.slane %v299, 5
      %v302 = vor.u32 %v298, %v301
      %v303 = vrot.slane %v302, 4
      %v305 = vshll.u32 %v256, 16
      %v307 = vrot.slane %v305, 5
      %v308 = vsel %vm294, %v303, %v307
      %v309 = vshrl.u32 %v256, 16
      %v311 = vrot.slane %v309, 4
      %v312 = vor.u32 %v311, %v307
      %v313 = vrot.slane %v312, 4
      %v315 = vshll.u32 %v257, 16
      %v317 = vrot.slane %v315, 5
      %v318 = vsel %vm294, %v313, %v317
      %v320 = vshrl.u32 %v258, 16
      %v322 = vrot.slane %v320, 4
      %v323 = vshll.u32 %v258, 16
      %v325 = vrot.slane %v323, 5
      %v326 = vor.u32 %v322, %v325
      %v327 = vrot.slane %v326, 4
      %v329 = vshll.u32 %v259, 16
      %v331 = vrot.slane %v329, 5
      %v332 = vsel %vm294, %v327, %v331
      %v333 = vshrl.u32 %v259, 16
      %v335 = vrot.slane %v333, 4
      %v336 = vor.u32 %v335, %v331
      %v337 = vrot.slane %v336, 4
      %v339 = vshll.u32 %v260, 16
      %v341 = vrot.slane %v339, 5
      %v342 = vsel %vm294, %v337, %v341
      %v344 = vshrl.u32 %v261, 16
      %v346 = vrot.slane %v344, 4
      %v347 = vshll.u32 %v261, 16
      %v349 = vrot.slane %v347, 5
      %v350 = vor.u32 %v346, %v349
      %v351 = vrot.slane %v350, 4
      %v353 = vshll.u32 %v262, 16
      %v355 = vrot.slane %v353, 5
      %v356 = vsel %vm294, %v351, %v355
      %v357 = vshrl.u32 %v262, 16
      %v359 = vrot.slane %v357, 4
      %v360 = vor.u32 %v359, %v355
      %v361 = vrot.slane %v360, 4
      %v363 = vshll.u32 %v263, 16
      %v365 = vrot.slane %v363, 5
      %v366 = vsel %vm294, %v361, %v365
      %v368 = vshrl.u32 %v264, 16
      %v370 = vrot.slane %v368, 4
      %v371 = vshll.u32 %v264, 16
      %v373 = vrot.slane %v371, 5
      %v374 = vor.u32 %v370, %v373
      %v375 = vrot.slane %v374, 4
      %v377 = vshll.u32 %v265, 16
      %v379 = vrot.slane %v377, 5
      %v380 = vsel %vm294, %v375, %v379
      %v381 = vshrl.u32 %v265, 16
      %v383 = vrot.slane %v381, 4
      %v384 = vor.u32 %v383, %v379
      %v385 = vrot.slane %v384, 4
      %v387 = vshll.u32 %v266, 16
      %v389 = vrot.slane %v387, 5
      %v390 = vsel %vm294, %v385, %v389
      %v392 = vshrl.u32 %v267, 16
      %v394 = vrot.slane %v392, 4
      %v395 = vshll.u32 %v267, 16
      %v397 = vrot.slane %v395, 5
      %v398 = vor.u32 %v394, %v397
      %v399 = vrot.slane %v398, 4
      %v401 = vshll.u32 %v268, 16
      %v403 = vrot.slane %v401, 5
      %v404 = vsel %vm294, %v399, %v403
      %v405 = vshrl.u32 %v268, 16
      %v407 = vrot.slane %v405, 4
      %v408 = vor.u32 %v407, %v403
      %v409 = vrot.slane %v408, 4
      %v411 = vshll.u32 %v269, 16
      %v413 = vrot.slane %v411, 5
      %v414 = vsel %vm294, %v409, %v413
      %v416 = vshrl.u32 %v270, 16
      %v418 = vrot.slane %v416, 4
      %v419 = vshll.u32 %v270, 16
      %v421 = vrot.slane %v419, 5
      %v422 = vor.u32 %v418, %v421
      %v423 = vrot.slane %v422, 4
      %v425 = vshll.u32 %v271, 16
      %v427 = vrot.slane %v425, 5
      %v428 = vsel %vm294, %v423, %v427
      %v429 = vshrl.u32 %v271, 16
      %v431 = vrot.slane %v429, 4
      %v432 = vor.u32 %v431, %v427
      %v433 = vrot.slane %v432, 4
      %v435 = vshll.u32 %v272, 16
      %v437 = vrot.slane %v435, 5
      %v438 = vsel %vm294, %v433, %v437
      %v440 = vshrl.u32 %v273, 16
      %v442 = vrot.slane %v440, 4
      %v443 = vshll.u32 %v273, 16
      %v445 = vrot.slane %v443, 5
      %v446 = vor.u32 %v442, %v445
      %v447 = vrot.slane %v446, 4
      %v449 = vshll.u32 %v274, 16
      %v451 = vrot.slane %v449, 5
      %v452 = vsel %vm294, %v447, %v451
      %v453 = vshrl.u32 %v274, 16
      %v455 = vrot.slane %v453, 4
      %v456 = vor.u32 %v455, %v451
      %v457 = vrot.slane %v456, 4
      %v459 = vshll.u32 %v275, 16
      %v461 = vrot.slane %v459, 5
      %v462 = vsel %vm294, %v457, %v461
      %v464 = vshrl.u32 %v276, 16
      %v466 = vrot.slane %v464, 4
      %v467 = vshll.u32 %v276, 16
      %v469 = vrot.slane %v467, 5
      %v470 = vor.u32 %v466, %v469
      %v471 = vrot.slane %v470, 4
      %v473 = vshll.u32 %v277, 16
      %v475 = vrot.slane %v473, 5
      %v476 = vsel %vm294, %v471, %v475
      %v477 = vshrl.u32 %v277, 16
      %v479 = vrot.slane %v477, 4
      %v480 = vor.u32 %v479, %v475
      %v481 = vrot.slane %v480, 4
      %v483 = vshll.u32 %v278, 16
      %v485 = vrot.slane %v483, 5
      %v486 = vsel %vm294, %v481, %v485
      %v488 = vshrl.u32 %v279, 16
      %v490 = vrot.slane %v488, 4
      %v491 = vshll.u32 %v279, 16
      %v493 = vrot.slane %v491, 5
      %v494 = vor.u32 %v490, %v493
      %v495 = vrot.slane %v494, 4
      %v497 = vshll.u32 %v280, 16
      %v499 = vrot.slane %v497, 5
      %v500 = vsel %vm294, %v495, %v499
      %v501 = vshrl.u32 %v280, 16
      %v503 = vrot.slane %v501, 4
      %v504 = vor.u32 %v503, %v499
      %v505 = vrot.slane %v504, 4
      %v507 = vshll.u32 %v281, 16
      %v509 = vrot.slane %v507, 5
      %v510 = vsel %vm294, %v505, %v509
      %v512 = vshrl.u32 %v282, 16
      %v514 = vrot.slane %v512, 4
      %v515 = vshll.u32 %v282, 16
      %v517 = vrot.slane %v515, 5
      %v518 = vor.u32 %v514, %v517
      %v519 = vrot.slane %v518, 4
      %v521 = vshll.u32 %v283, 16
      %v523 = vrot.slane %v521, 5
      %v524 = vsel %vm294, %v519, %v523
      %v525 = vshrl.u32 %v283, 16
      %v527 = vrot.slane %v525, 4
      %v528 = vor.u32 %v527, %v523
      %v529 = vrot.slane %v528, 4
      %v531 = vshll.u32 %v284, 16
      %v533 = vrot.slane %v531, 5
      %v534 = vsel %vm294, %v529, %v533
      %s535 = scalar_lea.vmem %s1, 2
      %v536 = vld [vmem:[%s535] sm:$0x3]
      %v537 = vunpack.c.l.b16 %v308
      %v538 = vunpack.c.l.b16 %v318
      %v539 = vunpack.c.l.b16 %v332
      %v540 = vunpack.c.l.b16 %v342
      %v541 = vunpack.c.l.b16 %v356
      %v542 = vunpack.c.l.b16 %v366
      %v543 = vunpack.c.l.b16 %v380
      %v544 = vunpack.c.l.b16 %v390
      %v545 = vunpack.c.l.b16 %v404
      %v546 = vunpack.c.l.b16 %v414
      %v547 = vunpack.c.l.b16 %v428
      %v548 = vunpack.c.l.b16 %v438
      %v549 = vunpack.c.l.b16 %v452
      %v550 = vunpack.c.l.b16 %v462
      %v551 = vunpack.c.l.b16 %v476
      %v552 = vunpack.c.l.b16 %v486
      %v553 = vunpack.c.l.b16 %v500
      %v554 = vunpack.c.l.b16 %v510
      %v555 = vunpack.c.l.b16 %v524
      %v556 = vunpack.c.l.b16 %v534
      %v557 = vpack.c.b16 %v538, %v537
      %v558 = vpack.c.b16 %v540, %v539
      %v559 = vpack.c.b16 %v542, %v541
      %v560 = vpack.c.b16 %v544, %v543
      %v561 = vpack.c.b16 %v546, %v545
      %v562 = vpack.c.b16 %v548, %v547
      %v563 = vpack.c.b16 %v550, %v549
      %v564 = vpack.c.b16 %v552, %v551
      %v565 = vpack.c.b16 %v554, %v553
      %v566 = vpack.c.b16 %v556, %v555
      %vm567 = vcmask 31744
      %v569 = vsel %vm567, %v557, 0
      %v572 = vsel %vm567, %v558, 0
      %v575 = vsel %vm567, %v559, 0
      %v578 = vsel %vm567, %v560, 0
      %v581 = vsel %vm567, %v561, 0
      %v584 = vsel %vm567, %v562, 0
      %v587 = vsel %vm567, %v563, 0
      %v590 = vsel %vm567, %v564, 0
      %v593 = vsel %vm567, %v565, 0
      %v596 = vsel %vm567, %v566, 0
      %vm598 = vcmask 1041408
      %v600 = vsel %vm598, %v536, 0
      %602 = vmatprep.subr.bf16.mxu0 0
      %603 = vmatpush1.bf16.msra.mxu0 %v600
      %604 = vmatprep.subr.bf16.mxu0 0
      %605 = vmatpush1.bf16.msra.mxu0 0
      %606 = vmatprep.subr.bf16.mxu0 0
      %607 = vmatpush1.bf16.msra.mxu0 0
      %608 = vmatprep.subr.bf16.mxu0 0
      %609 = vmatpush1.bf16.msra.mxu0 0
      %610 = vmatprep.subr.bf16.mxu0 0
      %611 = vmatpush1.bf16.msra.mxu0 0
      %612 = vmatprep.subr.bf16.mxu0 0
      %613 = vmatpush1.bf16.msra.mxu0 0
      %614 = vmatprep.subr.bf16.mxu0 0
      %615 = vmatpush1.bf16.msra.mxu0 0
      %616 = vmatprep.subr.bf16.mxu0 0
      %617 = vmatpush1.bf16.msra.mxu0 0
      %618 = vmatprep.subr.bf16.mxu0 0
      %619 = vmatpush1.bf16.msra.mxu0 0
      %620 = vmatprep.subr.bf16.mxu0 0
      %621 = vmatpush1.bf16.msra.mxu0 0
      %622 = vmatprep.subr.bf16.mxu0 0
      %623 = vmatpush1.bf16.msra.mxu0 0
      %624 = vmatprep.subr.bf16.mxu0 0
      %625 = vmatpush1.bf16.msra.mxu0 0
      %626 = vmatprep.subr.bf16.mxu0 0
      %627 = vmatpush1.bf16.msra.mxu0 0
      %628 = vmatprep.subr.bf16.mxu0 0
      %629 = vmatpush1.bf16.msra.mxu0 0
      %630 = vmatprep.subr.bf16.mxu0 0
      %631 = vmatpush1.bf16.msra.mxu0 0
      %632 = vmatprep.subr.bf16.mxu0 0
      %633 = vmatpush1.bf16.msra.mxu0 0
      %634 = vmatprep.mubr.bf16.mxu0 0
      %635 = vmatmul.mubr.bf16.gmra.mrb[0].mxu0 %v569
      %v636 = vpop.f32.mrb[0].mxu0
      %v637 = vadd.f32 0.0, %v636
      %v638 = vpop.f32.mrb[0].mxu0
      %v639 = vpop.f32.mrb[0].mxu0
      %v640 = vadd.f32 0.0, %v639
      %v641 = vpop.f32.mrb[0].mxu0
      %642 = vmatprep.mubr.bf16.mxu0 0
      %643 = vmatmul.mubr.bf16.gmra.mrb[0].mxu0 %v572
      %v644 = vpop.f32.mrb[0].mxu0
      %v645 = vadd.f32 0.0, %v644
      %v646 = vpop.f32.mrb[0].mxu0
      %v647 = vpop.f32.mrb[0].mxu0
      %v648 = vadd.f32 0.0, %v647
      %v649 = vpop.f32.mrb[0].mxu0
      %650 = vmatprep.mubr.bf16.mxu0 0
      %651 = vmatmul.mubr.bf16.gmra.mrb[0].mxu0 %v575
      %v652 = vpop.f32.mrb[0].mxu0
      %v653 = vadd.f32 0.0, %v652
      %v654 = vpop.f32.mrb[0].mxu0
      %v655 = vpop.f32.mrb[0].mxu0
      %v656 = vadd.f32 0.0, %v655
      %v657 = vpop.f32.mrb[0].mxu0
      %658 = vmatprep.mubr.bf16.mxu0 0
      %659 = vmatmul.mubr.bf16.gmra.mrb[0].mxu0 %v578
      %v660 = vpop.f32.mrb[0].mxu0
      %v661 = vadd.f32 0.0, %v660
      %v662 = vpop.f32.mrb[0].mxu0
      %v663 = vpop.f32.mrb[0].mxu0
      %v664 = vadd.f32 0.0, %v663
      %v665 = vpop.f32.mrb[0].mxu0
      %666 = vmatprep.mubr.bf16.mxu0 0
      %667 = vmatmul.mubr.bf16.gmra.mrb[0].mxu0 %v581
      %v668 = vpop.f32.mrb[0].mxu0
      %v669 = vadd.f32 0.0, %v668
      %v670 = vpop.f32.mrb[0].mxu0
      %v671 = vpop.f32.mrb[0].mxu0
      %v672 = vadd.f32 0.0, %v671
      %v673 = vpop.f32.mrb[0].mxu0
      %674 = vmatprep.mubr.bf16.mxu0 0
      %675 = vmatmul.mubr.bf16.gmra.mrb[0].mxu0 %v584
      %v676 = vpop.f32.mrb[0].mxu0
      %v677 = vadd.f32 0.0, %v676
      %v678 = vpop.f32.mrb[0].mxu0
      %v679 = vpop.f32.mrb[0].mxu0
      %v680 = vadd.f32 0.0, %v679
      %v681 = vpop.f32.mrb[0].mxu0
      %682 = vmatprep.mubr.bf16.mxu0 0
      %683 = vmatmul.mubr.bf16.gmra.mrb[0].mxu0 %v587
      %v684 = vpop.f32.mrb[0].mxu0
      %v685 = vadd.f32 0.0, %v684
      %v686 = vpop.f32.mrb[0].mxu0
      %v687 = vpop.f32.mrb[0].mxu0
      %v688 = vadd.f32 0.0, %v687
      %v689 = vpop.f32.mrb[0].mxu0
      %690 = vmatprep.mubr.bf16.mxu0 0
      %691 = vmatmul.mubr.bf16.gmra.mrb[0].mxu0 %v590
      %v692 = vpop.f32.mrb[0].mxu0
      %v693 = vadd.f32 0.0, %v692
      %v694 = vpop.f32.mrb[0].mxu0
      %v695 = vpop.f32.mrb[0].mxu0
      %v696 = vadd.f32 0.0, %v695
      %v697 = vpop.f32.mrb[0].mxu0
      %698 = vmatprep.mubr.bf16.mxu0 0
      %699 = vmatmul.mubr.bf16.gmra.mrb[0].mxu0 %v593
      %v700 = vpop.f32.mrb[0].mxu0
      %v701 = vadd.f32 0.0, %v700
      %v702 = vpop.f32.mrb[0].mxu0
      %v703 = vpop.f32.mrb[0].mxu0
      %v704 = vadd.f32 0.0, %v703
      %v705 = vpop.f32.mrb[0].mxu0
      %706 = vmatprep.mubr.bf16.mxu0 0
      %707 = vmatmul.mubr.bf16.gmra.mrb[0].mxu0 %v596
      %v708 = vpop.f32.mrb[0].mxu0
      %v709 = vadd.f32 0.0, %v708
      %v710 = vpop.f32.mrb[0].mxu0
      %v711 = vpop.f32.mrb[0].mxu0
      %v712 = vadd.f32 0.0, %v711
      %v713 = vpop.f32.mrb[0].mxu0
      %714 = vdwg.mxu0
      %v735 = vunpack.c.l.b16 %v255
      %v736 = vunpack.c.l.b16 %v256
      %v737 = vunpack.c.l.b16 %v258
      %v738 = vunpack.c.l.b16 %v259
      %v739 = vunpack.c.l.b16 %v261
      %v740 = vunpack.c.l.b16 %v262
      %v741 = vunpack.c.l.b16 %v264
      %v742 = vunpack.c.l.b16 %v265
      %v743 = vunpack.c.l.b16 %v267
      %v744 = vunpack.c.l.b16 %v268
      %v745 = vunpack.c.l.b16 %v270
      %v746 = vunpack.c.l.b16 %v271
      %v747 = vunpack.c.l.b16 %v273
      %v748 = vunpack.c.l.b16 %v274
      %v749 = vunpack.c.l.b16 %v276
      %v750 = vunpack.c.l.b16 %v277
      %v751 = vunpack.c.l.b16 %v279
      %v752 = vunpack.c.l.b16 %v280
      %v753 = vunpack.c.l.b16 %v282
      %v754 = vunpack.c.l.b16 %v283
      %v755 = vpack.c.b16 %v736, %v735
      %v756 = vpack.c.b16 %v738, %v737
      %v757 = vpack.c.b16 %v740, %v739
      %v758 = vpack.c.b16 %v742, %v741
      %v759 = vpack.c.b16 %v744, %v743
      %v760 = vpack.c.b16 %v746, %v745
      %v761 = vpack.c.b16 %v748, %v747
      %v762 = vpack.c.b16 %v750, %v749
      %v763 = vpack.c.b16 %v752, %v751
      %v764 = vpack.c.b16 %v754, %v753
      %v766 = vsel %vm567, %v755, 0
      %v769 = vsel %vm567, %v756, 0
      %v772 = vsel %vm567, %v757, 0
      %v775 = vsel %vm567, %v758, 0
      %v778 = vsel %vm567, %v759, 0
      %v781 = vsel %vm567, %v760, 0
      %v784 = vsel %vm567, %v761, 0
      %v787 = vsel %vm567, %v762, 0
      %v790 = vsel %vm567, %v763, 0
      %v793 = vsel %vm567, %v764, 0
      %v796 = vsel %vm598, %v291, 0
      %798 = vmatprep.subr.bf16.mxu0 0
      %799 = vmatpush1.bf16.msra.mxu0 %v796
      %800 = vmatprep.subr.bf16.mxu0 0
      %801 = vmatpush1.bf16.msra.mxu0 0
      %802 = vmatprep.subr.bf16.mxu0 0
      %803 = vmatpush1.bf16.msra.mxu0 0
      %804 = vmatprep.subr.bf16.mxu0 0
      %805 = vmatpush1.bf16.msra.mxu0 0
      %806 = vmatprep.subr.bf16.mxu0 0
      %807 = vmatpush1.bf16.msra.mxu0 0
      %808 = vmatprep.subr.bf16.mxu0 0
      %809 = vmatpush1.bf16.msra.mxu0 0
      %810 = vmatprep.subr.bf16.mxu0 0
      %811 = vmatpush1.bf16.msra.mxu0 0
      %812 = vmatprep.subr.bf16.mxu0 0
      %813 = vmatpush1.bf16.msra.mxu0 0
      %814 = vmatprep.subr.bf16.mxu0 0
      %815 = vmatpush1.bf16.msra.mxu0 0
      %816 = vmatprep.subr.bf16.mxu0 0
      %817 = vmatpush1.bf16.msra.mxu0 0
      %818 = vmatprep.subr.bf16.mxu0 0
      %819 = vmatpush1.bf16.msra.mxu0 0
      %820 = vmatprep.subr.bf16.mxu0 0
      %821 = vmatpush1.bf16.msra.mxu0 0
      %822 = vmatprep.subr.bf16.mxu0 0
      %823 = vmatpush1.bf16.msra.mxu0 0
      %824 = vmatprep.subr.bf16.mxu0 0
      %825 = vmatpush1.bf16.msra.mxu0 0
      %826 = vmatprep.subr.bf16.mxu0 0
      %827 = vmatpush1.bf16.msra.mxu0 0
      %828 = vmatprep.subr.bf16.mxu0 0
      %829 = vmatpush1.bf16.msra.mxu0 0
      %830 = vmatprep.mubr.bf16.mxu0 0
      %831 = vmatmul.mubr.bf16.gmra.mrb[0].mxu0 %v766
      %v832 = vpop.f32.mrb[0].mxu0
      %v833 = vadd.f32 %v637, %v832
      %v834 = vpop.f32.mrb[0].mxu0
      %v835 = vpop.f32.mrb[0].mxu0
      %v836 = vadd.f32 %v640, %v835
      %v837 = vpop.f32.mrb[0].mxu0
      %838 = vmatprep.mubr.bf16.mxu0 0
      %839 = vmatmul.mubr.bf16.gmra.mrb[0].mxu0 %v769
      %v840 = vpop.f32.mrb[0].mxu0
      %v841 = vadd.f32 %v645, %v840
      %v842 = vpop.f32.mrb[0].mxu0
      %v843 = vpop.f32.mrb[0].mxu0
      %v844 = vadd.f32 %v648, %v843
      %v845 = vpop.f32.mrb[0].mxu0
      %846 = vmatprep.mubr.bf16.mxu0 0
      %847 = vmatmul.mubr.bf16.gmra.mrb[0].mxu0 %v772
      %v848 = vpop.f32.mrb[0].mxu0
      %v849 = vadd.f32 %v653, %v848
      %v850 = vpop.f32.mrb[0].mxu0
      %v851 = vpop.f32.mrb[0].mxu0
      %v852 = vadd.f32 %v656, %v851
      %v853 = vpop.f32.mrb[0].mxu0
      %854 = vmatprep.mubr.bf16.mxu0 0
      %855 = vmatmul.mubr.bf16.gmra.mrb[0].mxu0 %v775
      %v856 = vpop.f32.mrb[0].mxu0
      %v857 = vadd.f32 %v661, %v856
      %v858 = vpop.f32.mrb[0].mxu0
      %v859 = vpop.f32.mrb[0].mxu0
      %v860 = vadd.f32 %v664, %v859
      %v861 = vpop.f32.mrb[0].mxu0
      %862 = vmatprep.mubr.bf16.mxu0 0
      %863 = vmatmul.mubr.bf16.gmra.mrb[0].mxu0 %v778
      %v864 = vpop.f32.mrb[0].mxu0
      %v865 = vadd.f32 %v669, %v864
      %v866 = vpop.f32.mrb[0].mxu0
      %v867 = vpop.f32.mrb[0].mxu0
      %v868 = vadd.f32 %v672, %v867
      %v869 = vpop.f32.mrb[0].mxu0
      %870 = vmatprep.mubr.bf16.mxu0 0
      %871 = vmatmul.mubr.bf16.gmra.mrb[0].mxu0 %v781
      %v872 = vpop.f32.mrb[0].mxu0
      %v873 = vadd.f32 %v677, %v872
      %v874 = vpop.f32.mrb[0].mxu0
      %v875 = vpop.f32.mrb[0].mxu0
      %v876 = vadd.f32 %v680, %v875
      %v877 = vpop.f32.mrb[0].mxu0
      %878 = vmatprep.mubr.bf16.mxu0 0
      %879 = vmatmul.mubr.bf16.gmra.mrb[0].mxu0 %v784
      %v880 = vpop.f32.mrb[0].mxu0
      %v881 = vadd.f32 %v685, %v880
      %v882 = vpop.f32.mrb[0].mxu0
      %v883 = vpop.f32.mrb[0].mxu0
      %v884 = vadd.f32 %v688, %v883
      %v885 = vpop.f32.mrb[0].mxu0
      %886 = vmatprep.mubr.bf16.mxu0 0
      %887 = vmatmul.mubr.bf16.gmra.mrb[0].mxu0 %v787
      %v888 = vpop.f32.mrb[0].mxu0
      %v889 = vadd.f32 %v693, %v888
      %v890 = vpop.f32.mrb[0].mxu0
      %v891 = vpop.f32.mrb[0].mxu0
      %v892 = vadd.f32 %v696, %v891
      %v893 = vpop.f32.mrb[0].mxu0
      %894 = vmatprep.mubr.bf16.mxu0 0
      %895 = vmatmul.mubr.bf16.gmra.mrb[0].mxu0 %v790
      %v896 = vpop.f32.mrb[0].mxu0
      %v897 = vadd.f32 %v701, %v896
      %v898 = vpop.f32.mrb[0].mxu0
      %v899 = vpop.f32.mrb[0].mxu0
      %v900 = vadd.f32 %v704, %v899
      %v901 = vpop.f32.mrb[0].mxu0
      %902 = vmatprep.mubr.bf16.mxu0 0
      %903 = vmatmul.mubr.bf16.gmra.mrb[0].mxu0 %v793
      %v904 = vpop.f32.mrb[0].mxu0
      %v905 = vadd.f32 %v709, %v904
      %v906 = vpop.f32.mrb[0].mxu0
      %v907 = vpop.f32.mrb[0].mxu0
      %v908 = vadd.f32 %v712, %v907
      %v909 = vpop.f32.mrb[0].mxu0
      %910 = vdwg.mxu0
      %vm921 = vcmask 1042432
      %vm922 = vcmask 1046532
      %vm923 = vmor %vm921, %vm922
      %v924 = vrot.slane %v255, 5
      %v925 = vrot.slane %v924, 4
      %v926 = vrot.slane %v256, 5
      %v927 = vsel %vm923, %v925, %v926
      %v928 = vrot.slane %v926, 4
      %v929 = vrot.slane %v257, 5
      %v930 = vsel %vm923, %v928, %v929
      %v931 = vrot.slane %v258, 5
      %v932 = vrot.slane %v931, 4
      %v933 = vrot.slane %v259, 5
      %v934 = vsel %vm923, %v932, %v933
      %v935 = vrot.slane %v933, 4
      %v936 = vrot.slane %v260, 5
      %v937 = vsel %vm923, %v935, %v936
      %v938 = vrot.slane %v261, 5
      %v939 = vrot.slane %v938, 4
      %v940 = vrot.slane %v262, 5
      %v941 = vsel %vm923, %v939, %v940
      %v942 = vrot.slane %v940, 4
      %v943 = vrot.slane %v263, 5
      %v944 = vsel %vm923, %v942, %v943
      %v945 = vrot.slane %v264, 5
      %v946 = vrot.slane %v945, 4
      %v947 = vrot.slane %v265, 5
      %v948 = vsel %vm923, %v946, %v947
      %v949 = vrot.slane %v947, 4
      %v950 = vrot.slane %v266, 5
      %v951 = vsel %vm923, %v949, %v950
      %v952 = vrot.slane %v267, 5
      %v953 = vrot.slane %v952, 4
      %v954 = vrot.slane %v268, 5
      %v955 = vsel %vm923, %v953, %v954
      %v956 = vrot.slane %v954, 4
      %v957 = vrot.slane %v269, 5
      %v958 = vsel %vm923, %v956, %v957
      %v959 = vrot.slane %v270, 5
      %v960 = vrot.slane %v959, 4
      %v961 = vrot.slane %v271, 5
      %v962 = vsel %vm923, %v960, %v961
      %v963 = vrot.slane %v961, 4
      %v964 = vrot.slane %v272, 5
      %v965 = vsel %vm923, %v963, %v964
      %v966 = vrot.slane %v273, 5
      %v967 = vrot.slane %v966, 4
      %v968 = vrot.slane %v274, 5
      %v969 = vsel %vm923, %v967, %v968
      %v970 = vrot.slane %v968, 4
      %v971 = vrot.slane %v275, 5
      %v972 = vsel %vm923, %v970, %v971
      %v973 = vrot.slane %v276, 5
      %v974 = vrot.slane %v973, 4
      %v975 = vrot.slane %v277, 5
      %v976 = vsel %vm923, %v974, %v975
      %v977 = vrot.slane %v975, 4
      %v978 = vrot.slane %v278, 5
      %v979 = vsel %vm923, %v977, %v978
      %v980 = vrot.slane %v279, 5
      %v981 = vrot.slane %v980, 4
      %v982 = vrot.slane %v280, 5
      %v983 = vsel %vm923, %v981, %v982
      %v984 = vrot.slane %v982, 4
      %v985 = vrot.slane %v281, 5
      %v986 = vsel %vm923, %v984, %v985
      %v987 = vrot.slane %v282, 5
      %v988 = vrot.slane %v987, 4
      %v989 = vrot.slane %v283, 5
      %v990 = vsel %vm923, %v988, %v989
      %v991 = vrot.slane %v989, 4
      %v992 = vrot.slane %v284, 5
      %v993 = vsel %vm923, %v991, %v992
      %s994 = scalar_lea.vmem %s1, 4
      %v995 = vld [vmem:[%s994] sm:$0x3]
      %v996 = vunpack.c.l.b16 %v927
      %v997 = vunpack.c.l.b16 %v930
      %v998 = vunpack.c.l.b16 %v934
      %v999 = vunpack.c.l.b16 %v937
      %v1000 = vunpack.c.l.b16 %v941
      %v1001 = vunpack.c.l.b16 %v944
      %v1002 = vunpack.c.l.b16 %v948
      %v1003 = vunpack.c.l.b16 %v951
      %v1004 = vunpack.c.l.b16 %v955
      %v1005 = vunpack.c.l.b16 %v958
      %v1006 = vunpack.c.l.b16 %v962
      %v1007 = vunpack.c.l.b16 %v965
      %v1008 = vunpack.c.l.b16 %v969
      %v1009 = vunpack.c.l.b16 %v972
      %v1010 = vunpack.c.l.b16 %v976
      %v1011 = vunpack.c.l.b16 %v979
      %v1012 = vunpack.c.l.b16 %v983
      %v1013 = vunpack.c.l.b16 %v986
      %v1014 = vunpack.c.l.b16 %v990
      %v1015 = vunpack.c.l.b16 %v993
      %v1016 = vpack.c.b16 %v997, %v996
      %v1017 = vpack.c.b16 %v999, %v998
      %v1018 = vpack.c.b16 %v1001, %v1000
      %v1019 = vpack.c.b16 %v1003, %v1002
      %v1020 = vpack.c.b16 %v1005, %v1004
      %v1021 = vpack.c.b16 %v1007, %v1006
      %v1022 = vpack.c.b16 %v1009, %v1008
      %v1023 = vpack.c.b16 %v1011, %v1010
      %v1024 = vpack.c.b16 %v1013, %v1012
      %v1025 = vpack.c.b16 %v1015, %v1014
      %v1027 = vsel %vm567, %v1016, 0
      %v1030 = vsel %vm567, %v1017, 0
      %v1033 = vsel %vm567, %v1018, 0
      %v1036 = vsel %vm567, %v1019, 0
      %v1039 = vsel %vm567, %v1020, 0
      %v1042 = vsel %vm567, %v1021, 0
      %v1045 = vsel %vm567, %v1022, 0
      %v1048 = vsel %vm567, %v1023, 0
      %v1051 = vsel %vm567, %v1024, 0
      %v1054 = vsel %vm567, %v1025, 0
      %v1057 = vsel %vm598, %v995, 0
      %1059 = vmatprep.subr.bf16.mxu0 0
      %1060 = vmatpush1.bf16.msra.mxu0 %v1057
      %1061 = vmatprep.subr.bf16.mxu0 0
      %1062 = vmatpush1.bf16.msra.mxu0 0
      %1063 = vmatprep.subr.bf16.mxu0 0
      %1064 = vmatpush1.bf16.msra.mxu0 0
      %1065 = vmatprep.subr.bf16.mxu0 0
      %1066 = vmatpush1.bf16.msra.mxu0 0
      %1067 = vmatprep.subr.bf16.mxu0 0
      %1068 = vmatpush1.bf16.msra.mxu0 0
      %1069 = vmatprep.subr.bf16.mxu0 0
      %1070 = vmatpush1.bf16.msra.mxu0 0
      %1071 = vmatprep.subr.bf16.mxu0 0
      %1072 = vmatpush1.bf16.msra.mxu0 0
      %1073 = vmatprep.subr.bf16.mxu0 0
      %1074 = vmatpush1.bf16.msra.mxu0 0
      %1075 = vmatprep.subr.bf16.mxu0 0
      %1076 = vmatpush1.bf16.msra.mxu0 0
      %1077 = vmatprep.subr.bf16.mxu0 0
      %1078 = vmatpush1.bf16.msra.mxu0 0
      %1079 = vmatprep.subr.bf16.mxu0 0
      %1080 = vmatpush1.bf16.msra.mxu0 0
      %1081 = vmatprep.subr.bf16.mxu0 0
      %1082 = vmatpush1.bf16.msra.mxu0 0
      %1083 = vmatprep.subr.bf16.mxu0 0
      %1084 = vmatpush1.bf16.msra.mxu0 0
      %1085 = vmatprep.subr.bf16.mxu0 0
      %1086 = vmatpush1.bf16.msra.mxu0 0
      %1087 = vmatprep.subr.bf16.mxu0 0
      %1088 = vmatpush1.bf16.msra.mxu0 0
      %1089 = vmatprep.subr.bf16.mxu0 0
      %1090 = vmatpush1.bf16.msra.mxu0 0
      %1091 = vmatprep.mubr.bf16.mxu0 0
      %1092 = vmatmul.mubr.bf16.gmra.mrb[0].mxu0 %v1027
      %v1093 = vpop.f32.mrb[0].mxu0
      %v1094 = vadd.f32 0.0, %v1093
      %v1095 = vpop.f32.mrb[0].mxu0
      %v1096 = vpop.f32.mrb[0].mxu0
      %v1097 = vadd.f32 0.0, %v1096
      %v1098 = vpop.f32.mrb[0].mxu0
      %1099 = vmatprep.mubr.bf16.mxu0 0
      %1100 = vmatmul.mubr.bf16.gmra.mrb[0].mxu0 %v1030
      %v1101 = vpop.f32.mrb[0].mxu0
      %v1102 = vadd.f32 0.0, %v1101
      %v1103 = vpop.f32.mrb[0].mxu0
      %v1104 = vpop.f32.mrb[0].mxu0
      %v1105 = vadd.f32 0.0, %v1104
      %v1106 = vpop.f32.mrb[0].mxu0
      %1107 = vmatprep.mubr.bf16.mxu0 0
      %1108 = vmatmul.mubr.bf16.gmra.mrb[0].mxu0 %v1033
      %v1109 = vpop.f32.mrb[0].mxu0
      %v1110 = vadd.f32 0.0, %v1109
      %v1111 = vpop.f32.mrb[0].mxu0
      %v1112 = vpop.f32.mrb[0].mxu0
      %v1113 = vadd.f32 0.0, %v1112
      %v1114 = vpop.f32.mrb[0].mxu0
      %1115 = vmatprep.mubr.bf16.mxu0 0
      %1116 = vmatmul.mubr.bf16.gmra.mrb[0].mxu0 %v1036
      %v1117 = vpop.f32.mrb[0].mxu0
      %v1118 = vadd.f32 0.0, %v1117
      %v1119 = vpop.f32.mrb[0].mxu0
      %v1120 = vpop.f32.mrb[0].mxu0
      %v1121 = vadd.f32 0.0, %v1120
      %v1122 = vpop.f32.mrb[0].mxu0
      %1123 = vmatprep.mubr.bf16.mxu0 0
      %1124 = vmatmul.mubr.bf16.gmra.mrb[0].mxu0 %v1039
      %v1125 = vpop.f32.mrb[0].mxu0
      %v1126 = vadd.f32 0.0, %v1125
      %v1127 = vpop.f32.mrb[0].mxu0
      %v1128 = vpop.f32.mrb[0].mxu0
      %v1129 = vadd.f32 0.0, %v1128
      %v1130 = vpop.f32.mrb[0].mxu0
      %1131 = vmatprep.mubr.bf16.mxu0 0
      %1132 = vmatmul.mubr.bf16.gmra.mrb[0].mxu0 %v1042
      %v1133 = vpop.f32.mrb[0].mxu0
      %v1134 = vadd.f32 0.0, %v1133
      %v1135 = vpop.f32.mrb[0].mxu0
      %v1136 = vpop.f32.mrb[0].mxu0
      %v1137 = vadd.f32 0.0, %v1136
      %v1138 = vpop.f32.mrb[0].mxu0
      %1139 = vmatprep.mubr.bf16.mxu0 0
      %1140 = vmatmul.mubr.bf16.gmra.mrb[0].mxu0 %v1045
      %v1141 = vpop.f32.mrb[0].mxu0
      %v1142 = vadd.f32 0.0, %v1141
      %v1143 = vpop.f32.mrb[0].mxu0
      %v1144 = vpop.f32.mrb[0].mxu0
      %v1145 = vadd.f32 0.0, %v1144
      %v1146 = vpop.f32.mrb[0].mxu0
      %1147 = vmatprep.mubr.bf16.mxu0 0
      %1148 = vmatmul.mubr.bf16.gmra.mrb[0].mxu0 %v1048
      %v1149 = vpop.f32.mrb[0].mxu0
      %v1150 = vadd.f32 0.0, %v1149
      %v1151 = vpop.f32.mrb[0].mxu0
      %v1152 = vpop.f32.mrb[0].mxu0
      %v1153 = vadd.f32 0.0, %v1152
      %v1154 = vpop.f32.mrb[0].mxu0
      %1155 = vmatprep.mubr.bf16.mxu0 0
      %1156 = vmatmul.mubr.bf16.gmra.mrb[0].mxu0 %v1051
      %v1157 = vpop.f32.mrb[0].mxu0
      %v1158 = vadd.f32 0.0, %v1157
      %v1159 = vpop.f32.mrb[0].mxu0
      %v1160 = vpop.f32.mrb[0].mxu0
      %v1161 = vadd.f32 0.0, %v1160
      %v1162 = vpop.f32.mrb[0].mxu0
      %1163 = vmatprep.mubr.bf16.mxu0 0
      %1164 = vmatmul.mubr.bf16.gmra.mrb[0].mxu0 %v1054
      %v1165 = vpop.f32.mrb[0].mxu0
      %v1166 = vadd.f32 0.0, %v1165
      %v1167 = vpop.f32.mrb[0].mxu0
      %v1168 = vpop.f32.mrb[0].mxu0
      %v1169 = vadd.f32 0.0, %v1168
      %v1170 = vpop.f32.mrb[0].mxu0
      %1171 = vdwg.mxu0
      %v1172 = vadd.f32 %v833, %v1094
      %v1173 = vadd.f32 %v836, %v1097
      %v1174 = vadd.f32 %v841, %v1102
      %v1175 = vadd.f32 %v844, %v1105
      %v1176 = vadd.f32 %v849, %v1110
      %v1177 = vadd.f32 %v852, %v1113
      %v1178 = vadd.f32 %v857, %v1118
      %v1179 = vadd.f32 %v860, %v1121
      %v1180 = vadd.f32 %v865, %v1126
      %v1181 = vadd.f32 %v868, %v1129
      %v1182 = vadd.f32 %v873, %v1134
      %v1183 = vadd.f32 %v876, %v1137
      %v1184 = vadd.f32 %v881, %v1142
      %v1185 = vadd.f32 %v884, %v1145
      %v1186 = vadd.f32 %v889, %v1150
      %v1187 = vadd.f32 %v892, %v1153
      %v1188 = vadd.f32 %v897, %v1158
      %v1189 = vadd.f32 %v900, %v1161
      %v1190 = vadd.f32 %v905, %v1166
      %v1191 = vadd.f32 %v908, %v1169
      %s1192 = scalar_lea.vmem %s1, 6
      %v1193 = vld [vmem:[%s1192] sm:$0x3]
      %v1196 = vunpack.c.l.b16 %v285
      %v1197 = vunpack.c.l.b16 %v286
      %v1198 = vpack.c.b16 %v1197, %v1196
      %v1200 = vsel %vm567, %v1198, 0
      %v1203 = vsel %vm598, %v1193, 0
      %1205 = vmatprep.subr.bf16.mxu0 0
      %1206 = vmatpush1.bf16.msra.mxu0 %v1203
      %1207 = vmatprep.subr.bf16.mxu0 0
      %1208 = vmatpush1.bf16.msra.mxu0 0
      %1209 = vmatprep.subr.bf16.mxu0 0
      %1210 = vmatpush1.bf16.msra.mxu0 0
      %1211 = vmatprep.subr.bf16.mxu0 0
      %1212 = vmatpush1.bf16.msra.mxu0 0
      %1213 = vmatprep.subr.bf16.mxu0 0
      %1214 = vmatpush1.bf16.msra.mxu0 0
      %1215 = vmatprep.subr.bf16.mxu0 0
      %1216 = vmatpush1.bf16.msra.mxu0 0
      %1217 = vmatprep.subr.bf16.mxu0 0
      %1218 = vmatpush1.bf16.msra.mxu0 0
      %1219 = vmatprep.subr.bf16.mxu0 0
      %1220 = vmatpush1.bf16.msra.mxu0 0
      %1221 = vmatprep.subr.bf16.mxu0 0
      %1222 = vmatpush1.bf16.msra.mxu0 0
      %1223 = vmatprep.subr.bf16.mxu0 0
      %1224 = vmatpush1.bf16.msra.mxu0 0
      %1225 = vmatprep.subr.bf16.mxu0 0
      %1226 = vmatpush1.bf16.msra.mxu0 0
      %1227 = vmatprep.subr.bf16.mxu0 0
      %1228 = vmatpush1.bf16.msra.mxu0 0
      %1229 = vmatprep.subr.bf16.mxu0 0
      %1230 = vmatpush1.bf16.msra.mxu0 0
      %1231 = vmatprep.subr.bf16.mxu0 0
      %1232 = vmatpush1.bf16.msra.mxu0 0
      %1233 = vmatprep.subr.bf16.mxu0 0
      %1234 = vmatpush1.bf16.msra.mxu0 0
      %1235 = vmatprep.subr.bf16.mxu0 0
      %1236 = vmatpush1.bf16.msra.mxu0 0
      %1237 = vmatprep.mubr.bf16.mxu0 0
      %1238 = vmatmul.mubr.bf16.gmra.mrb[0].mxu0 %v769
      %v1239 = vpop.f32.mrb[0].mxu0
      %v1240 = vadd.f32 0.0, %v1239
      %v1241 = vpop.f32.mrb[0].mxu0
      %v1242 = vpop.f32.mrb[0].mxu0
      %v1243 = vadd.f32 0.0, %v1242
      %v1244 = vpop.f32.mrb[0].mxu0
      %1245 = vmatprep.mubr.bf16.mxu0 0
      %1246 = vmatmul.mubr.bf16.gmra.mrb[0].mxu0 %v772
      %v1247 = vpop.f32.mrb[0].mxu0
      %v1248 = vadd.f32 0.0, %v1247
      %v1249 = vpop.f32.mrb[0].mxu0
      %v1250 = vpop.f32.mrb[0].mxu0
      %v1251 = vadd.f32 0.0, %v1250
      %v1252 = vpop.f32.mrb[0].mxu0
      %1253 = vmatprep.mubr.bf16.mxu0 0
      %1254 = vmatmul.mubr.bf16.gmra.mrb[0].mxu0 %v775
      %v1255 = vpop.f32.mrb[0].mxu0
      %v1256 = vadd.f32 0.0, %v1255
      %v1257 = vpop.f32.mrb[0].mxu0
      %v1258 = vpop.f32.mrb[0].mxu0
      %v1259 = vadd.f32 0.0, %v1258
      %v1260 = vpop.f32.mrb[0].mxu0
      %1261 = vmatprep.mubr.bf16.mxu0 0
      %1262 = vmatmul.mubr.bf16.gmra.mrb[0].mxu0 %v778
      %v1263 = vpop.f32.mrb[0].mxu0
      %v1264 = vadd.f32 0.0, %v1263
      %v1265 = vpop.f32.mrb[0].mxu0
      %v1266 = vpop.f32.mrb[0].mxu0
      %v1267 = vadd.f32 0.0, %v1266
      %v1268 = vpop.f32.mrb[0].mxu0
      %1269 = vmatprep.mubr.bf16.mxu0 0
      %1270 = vmatmul.mubr.bf16.gmra.mrb[0].mxu0 %v781
      %v1271 = vpop.f32.mrb[0].mxu0
      %v1272 = vadd.f32 0.0, %v1271
      %v1273 = vpop.f32.mrb[0].mxu0
      %v1274 = vpop.f32.mrb[0].mxu0
      %v1275 = vadd.f32 0.0, %v1274
      %v1276 = vpop.f32.mrb[0].mxu0
      %1277 = vmatprep.mubr.bf16.mxu0 0
      %1278 = vmatmul.mubr.bf16.gmra.mrb[0].mxu0 %v784
      %v1279 = vpop.f32.mrb[0].mxu0
      %v1280 = vadd.f32 0.0, %v1279
      %v1281 = vpop.f32.mrb[0].mxu0
      %v1282 = vpop.f32.mrb[0].mxu0
      %v1283 = vadd.f32 0.0, %v1282
      %v1284 = vpop.f32.mrb[0].mxu0
      %1285 = vmatprep.mubr.bf16.mxu0 0
      %1286 = vmatmul.mubr.bf16.gmra.mrb[0].mxu0 %v787
      %v1287 = vpop.f32.mrb[0].mxu0
      %v1288 = vadd.f32 0.0, %v1287
      %v1289 = vpop.f32.mrb[0].mxu0
      %v1290 = vpop.f32.mrb[0].mxu0
      %v1291 = vadd.f32 0.0, %v1290
      %v1292 = vpop.f32.mrb[0].mxu0
      %1293 = vmatprep.mubr.bf16.mxu0 0
      %1294 = vmatmul.mubr.bf16.gmra.mrb[0].mxu0 %v790
      %v1295 = vpop.f32.mrb[0].mxu0
      %v1296 = vadd.f32 0.0, %v1295
      %v1297 = vpop.f32.mrb[0].mxu0
      %v1298 = vpop.f32.mrb[0].mxu0
      %v1299 = vadd.f32 0.0, %v1298
      %v1300 = vpop.f32.mrb[0].mxu0
      %1301 = vmatprep.mubr.bf16.mxu0 0
      %1302 = vmatmul.mubr.bf16.gmra.mrb[0].mxu0 %v793
      %v1303 = vpop.f32.mrb[0].mxu0
      %v1304 = vadd.f32 0.0, %v1303
      %v1305 = vpop.f32.mrb[0].mxu0
      %v1306 = vpop.f32.mrb[0].mxu0
      %v1307 = vadd.f32 0.0, %v1306
      %v1308 = vpop.f32.mrb[0].mxu0
      %1309 = vmatprep.mubr.bf16.mxu0 0
      %1310 = vmatmul.mubr.bf16.gmra.mrb[0].mxu0 %v1200
      %v1311 = vpop.f32.mrb[0].mxu0
      %v1312 = vadd.f32 0.0, %v1311
      %v1313 = vpop.f32.mrb[0].mxu0
      %v1314 = vpop.f32.mrb[0].mxu0
      %v1315 = vadd.f32 0.0, %v1314
      %v1316 = vpop.f32.mrb[0].mxu0
      %1317 = vdwg.mxu0
      %v1318 = vadd.f32 %v1172, %v1240
      %v1319 = vadd.f32 %v1173, %v1243
      %v1320 = vadd.f32 %v1174, %v1248
      %v1321 = vadd.f32 %v1175, %v1251
      %v1322 = vadd.f32 %v1176, %v1256
      %v1323 = vadd.f32 %v1177, %v1259
      %v1324 = vadd.f32 %v1178, %v1264
      %v1325 = vadd.f32 %v1179, %v1267
      %v1326 = vadd.f32 %v1180, %v1272
      %v1327 = vadd.f32 %v1181, %v1275
      %v1328 = vadd.f32 %v1182, %v1280
      %v1329 = vadd.f32 %v1183, %v1283
      %v1330 = vadd.f32 %v1184, %v1288
      %v1331 = vadd.f32 %v1185, %v1291
      %v1332 = vadd.f32 %v1186, %v1296
      %v1333 = vadd.f32 %v1187, %v1299
      %v1334 = vadd.f32 %v1188, %v1304
      %v1335 = vadd.f32 %v1189, %v1307
      %v1336 = vadd.f32 %v1190, %v1312
      %v1337 = vadd.f32 %v1191, %v1315
      %v1339 = vshrl.u32 %v285, 16
      %v1341 = vrot.slane %v1339, 4
      %v1342 = vshll.u32 %v285, 16
      %v1344 = vrot.slane %v1342, 5
      %v1345 = vor.u32 %v1341, %v1344
      %v1346 = vrot.slane %v1345, 4
      %v1348 = vshll.u32 %v286, 16
      %v1350 = vrot.slane %v1348, 5
      %v1351 = vsel %vm294, %v1346, %v1350
      %v1352 = vshrl.u32 %v286, 16
      %v1354 = vrot.slane %v1352, 4
      %v1355 = vor.u32 %v1354, %v1350
      %v1356 = vrot.slane %v1355, 4
      %v1358 = vshll.u32 %v287, 16
      %v1360 = vrot.slane %v1358, 5
      %v1361 = vsel %vm294, %v1356, %v1360
      %s1362 = scalar_lea.vmem %s1, 8
      %v1363 = vld [vmem:[%s1362] sm:$0x3]
      %v1364 = vunpack.c.l.b16 %v1351
      %v1365 = vunpack.c.l.b16 %v1361
      %v1366 = vpack.c.b16 %v1365, %v1364
      %v1368 = vsel %vm567, %v1366, 0
      %v1371 = vsel %vm598, %v1363, 0
      %1373 = vmatprep.subr.bf16.mxu0 0
      %1374 = vmatpush1.bf16.msra.mxu0 %v1371
      %1375 = vmatprep.subr.bf16.mxu0 0
      %1376 = vmatpush1.bf16.msra.mxu0 0
      %1377 = vmatprep.subr.bf16.mxu0 0
      %1378 = vmatpush1.bf16.msra.mxu0 0
      %1379 = vmatprep.subr.bf16.mxu0 0
      %1380 = vmatpush1.bf16.msra.mxu0 0
      %1381 = vmatprep.subr.bf16.mxu0 0
      %1382 = vmatpush1.bf16.msra.mxu0 0
      %1383 = vmatprep.subr.bf16.mxu0 0
      %1384 = vmatpush1.bf16.msra.mxu0 0
      %1385 = vmatprep.subr.bf16.mxu0 0
      %1386 = vmatpush1.bf16.msra.mxu0 0
      %1387 = vmatprep.subr.bf16.mxu0 0
      %1388 = vmatpush1.bf16.msra.mxu0 0
      %1389 = vmatprep.subr.bf16.mxu0 0
      %1390 = vmatpush1.bf16.msra.mxu0 0
      %1391 = vmatprep.subr.bf16.mxu0 0
      %1392 = vmatpush1.bf16.msra.mxu0 0
      %1393 = vmatprep.subr.bf16.mxu0 0
      %1394 = vmatpush1.bf16.msra.mxu0 0
      %1395 = vmatprep.subr.bf16.mxu0 0
      %1396 = vmatpush1.bf16.msra.mxu0 0
      %1397 = vmatprep.subr.bf16.mxu0 0
      %1398 = vmatpush1.bf16.msra.mxu0 0
      %1399 = vmatprep.subr.bf16.mxu0 0
      %1400 = vmatpush1.bf16.msra.mxu0 0
      %1401 = vmatprep.subr.bf16.mxu0 0
      %1402 = vmatpush1.bf16.msra.mxu0 0
      %1403 = vmatprep.subr.bf16.mxu0 0
      %1404 = vmatpush1.bf16.msra.mxu0 0
      %1405 = vmatprep.mubr.bf16.mxu0 0
      %1406 = vmatmul.mubr.bf16.gmra.mrb[0].mxu0 %v572
      %v1407 = vpop.f32.mrb[0].mxu0
      %v1408 = vadd.f32 0.0, %v1407
      %v1409 = vpop.f32.mrb[0].mxu0
      %v1410 = vpop.f32.mrb[0].mxu0
      %v1411 = vadd.f32 0.0, %v1410
      %v1412 = vpop.f32.mrb[0].mxu0
      %1413 = vmatprep.mubr.bf16.mxu0 0
      %1414 = vmatmul.mubr.bf16.gmra.mrb[0].mxu0 %v575
      %v1415 = vpop.f32.mrb[0].mxu0
      %v1416 = vadd.f32 0.0, %v1415
      %v1417 = vpop.f32.mrb[0].mxu0
      %v1418 = vpop.f32.mrb[0].mxu0
      %v1419 = vadd.f32 0.0, %v1418
      %v1420 = vpop.f32.mrb[0].mxu0
      %1421 = vmatprep.mubr.bf16.mxu0 0
      %1422 = vmatmul.mubr.bf16.gmra.mrb[0].mxu0 %v578
      %v1423 = vpop.f32.mrb[0].mxu0
      %v1424 = vadd.f32 0.0, %v1423
      %v1425 = vpop.f32.mrb[0].mxu0
      %v1426 = vpop.f32.mrb[0].mxu0
      %v1427 = vadd.f32 0.0, %v1426
      %v1428 = vpop.f32.mrb[0].mxu0
      %1429 = vmatprep.mubr.bf16.mxu0 0
      %1430 = vmatmul.mubr.bf16.gmra.mrb[0].mxu0 %v581
      %v1431 = vpop.f32.mrb[0].mxu0
      %v1432 = vadd.f32 0.0, %v1431
      %v1433 = vpop.f32.mrb[0].mxu0
      %v1434 = vpop.f32.mrb[0].mxu0
      %v1435 = vadd.f32 0.0, %v1434
      %v1436 = vpop.f32.mrb[0].mxu0
      %1437 = vmatprep.mubr.bf16.mxu0 0
      %1438 = vmatmul.mubr.bf16.gmra.mrb[0].mxu0 %v584
      %v1439 = vpop.f32.mrb[0].mxu0
      %v1440 = vadd.f32 0.0, %v1439
      %v1441 = vpop.f32.mrb[0].mxu0
      %v1442 = vpop.f32.mrb[0].mxu0
      %v1443 = vadd.f32 0.0, %v1442
      %v1444 = vpop.f32.mrb[0].mxu0
      %1445 = vmatprep.mubr.bf16.mxu0 0
      %1446 = vmatmul.mubr.bf16.gmra.mrb[0].mxu0 %v587
      %v1447 = vpop.f32.mrb[0].mxu0
      %v1448 = vadd.f32 0.0, %v1447
      %v1449 = vpop.f32.mrb[0].mxu0
      %v1450 = vpop.f32.mrb[0].mxu0
      %v1451 = vadd.f32 0.0, %v1450
      %v1452 = vpop.f32.mrb[0].mxu0
      %1453 = vmatprep.mubr.bf16.mxu0 0
      %1454 = vmatmul.mubr.bf16.gmra.mrb[0].mxu0 %v590
      %v1455 = vpop.f32.mrb[0].mxu0
      %v1456 = vadd.f32 0.0, %v1455
      %v1457 = vpop.f32.mrb[0].mxu0
      %v1458 = vpop.f32.mrb[0].mxu0
      %v1459 = vadd.f32 0.0, %v1458
      %v1460 = vpop.f32.mrb[0].mxu0
      %1461 = vmatprep.mubr.bf16.mxu0 0
      %1462 = vmatmul.mubr.bf16.gmra.mrb[0].mxu0 %v593
      %v1463 = vpop.f32.mrb[0].mxu0
      %v1464 = vadd.f32 0.0, %v1463
      %v1465 = vpop.f32.mrb[0].mxu0
      %v1466 = vpop.f32.mrb[0].mxu0
      %v1467 = vadd.f32 0.0, %v1466
      %v1468 = vpop.f32.mrb[0].mxu0
      %1469 = vmatprep.mubr.bf16.mxu0 0
      %1470 = vmatmul.mubr.bf16.gmra.mrb[0].mxu0 %v596
      %v1471 = vpop.f32.mrb[0].mxu0
      %v1472 = vadd.f32 0.0, %v1471
      %v1473 = vpop.f32.mrb[0].mxu0
      %v1474 = vpop.f32.mrb[0].mxu0
      %v1475 = vadd.f32 0.0, %v1474
      %v1476 = vpop.f32.mrb[0].mxu0
      %1477 = vmatprep.mubr.bf16.mxu0 0
      %1478 = vmatmul.mubr.bf16.gmra.mrb[0].mxu0 %v1368
      %v1479 = vpop.f32.mrb[0].mxu0
      %v1480 = vadd.f32 0.0, %v1479
      %v1481 = vpop.f32.mrb[0].mxu0
      %v1482 = vpop.f32.mrb[0].mxu0
      %v1483 = vadd.f32 0.0, %v1482
      %v1484 = vpop.f32.mrb[0].mxu0
      %1485 = vdwg.mxu0
      %v1486 = vadd.f32 %v1318, %v1408
      %v1487 = vadd.f32 %v1319, %v1411
      %v1488 = vadd.f32 %v1320, %v1416
      %v1489 = vadd.f32 %v1321, %v1419
      %v1490 = vadd.f32 %v1322, %v1424
      %v1491 = vadd.f32 %v1323, %v1427
      %v1492 = vadd.f32 %v1324, %v1432
      %v1493 = vadd.f32 %v1325, %v1435
      %v1494 = vadd.f32 %v1326, %v1440
      %v1495 = vadd.f32 %v1327, %v1443
      %v1496 = vadd.f32 %v1328, %v1448
      %v1497 = vadd.f32 %v1329, %v1451
      %v1498 = vadd.f32 %v1330, %v1456
      %v1499 = vadd.f32 %v1331, %v1459
      %v1500 = vadd.f32 %v1332, %v1464
      %v1501 = vadd.f32 %v1333, %v1467
      %v1502 = vadd.f32 %v1334, %v1472
      %v1503 = vadd.f32 %v1335, %v1475
      %v1504 = vadd.f32 %v1336, %v1480
      %v1505 = vadd.f32 %v1337, %v1483
      %v1507 = vrot.slane %v285, 5
      %v1508 = vrot.slane %v1507, 4
      %v1509 = vrot.slane %v286, 5
      %v1510 = vsel %vm923, %v1508, %v1509
      %v1511 = vrot.slane %v1509, 4
      %v1512 = vrot.slane %v287, 5
      %v1513 = vsel %vm923, %v1511, %v1512
      %s1514 = scalar_lea.vmem %s1, 10
      %v1515 = vld [vmem:[%s1514] sm:$0x3]
      %v1516 = vunpack.c.l.b16 %v1510
      %v1517 = vunpack.c.l.b16 %v1513
      %v1518 = vpack.c.b16 %v1517, %v1516
      %v1520 = vsel %vm567, %v1518, 0
      %v1523 = vsel %vm598, %v1515, 0
      %1525 = vmatprep.subr.bf16.mxu0 0
      %1526 = vmatpush1.bf16.msra.mxu0 %v1523
      %1527 = vmatprep.subr.bf16.mxu0 0
      %1528 = vmatpush1.bf16.msra.mxu0 0
      %1529 = vmatprep.subr.bf16.mxu0 0
      %1530 = vmatpush1.bf16.msra.mxu0 0
      %1531 = vmatprep.subr.bf16.mxu0 0
      %1532 = vmatpush1.bf16.msra.mxu0 0
      %1533 = vmatprep.subr.bf16.mxu0 0
      %1534 = vmatpush1.bf16.msra.mxu0 0
      %1535 = vmatprep.subr.bf16.mxu0 0
      %1536 = vmatpush1.bf16.msra.mxu0 0
      %1537 = vmatprep.subr.bf16.mxu0 0
      %1538 = vmatpush1.bf16.msra.mxu0 0
      %1539 = vmatprep.subr.bf16.mxu0 0
      %1540 = vmatpush1.bf16.msra.mxu0 0
      %1541 = vmatprep.subr.bf16.mxu0 0
      %1542 = vmatpush1.bf16.msra.mxu0 0
      %1543 = vmatprep.subr.bf16.mxu0 0
      %1544 = vmatpush1.bf16.msra.mxu0 0
      %1545 = vmatprep.subr.bf16.mxu0 0
      %1546 = vmatpush1.bf16.msra.mxu0 0
      %1547 = vmatprep.subr.bf16.mxu0 0
      %1548 = vmatpush1.bf16.msra.mxu0 0
      %1549 = vmatprep.subr.bf16.mxu0 0
      %1550 = vmatpush1.bf16.msra.mxu0 0
      %1551 = vmatprep.subr.bf16.mxu0 0
      %1552 = vmatpush1.bf16.msra.mxu0 0
      %1553 = vmatprep.subr.bf16.mxu0 0
      %1554 = vmatpush1.bf16.msra.mxu0 0
      %1555 = vmatprep.subr.bf16.mxu0 0
      %1556 = vmatpush1.bf16.msra.mxu0 0
      %1557 = vmatprep.mubr.bf16.mxu0 0
      %1558 = vmatmul.mubr.bf16.gmra.mrb[0].mxu0 %v1030
      %v1559 = vpop.f32.mrb[0].mxu0
      %v1560 = vadd.f32 0.0, %v1559
      %v1561 = vpop.f32.mrb[0].mxu0
      %v1562 = vpop.f32.mrb[0].mxu0
      %v1563 = vadd.f32 0.0, %v1562
      %v1564 = vpop.f32.mrb[0].mxu0
      %1565 = vmatprep.mubr.bf16.mxu0 0
      %1566 = vmatmul.mubr.bf16.gmra.mrb[0].mxu0 %v1033
      %v1567 = vpop.f32.mrb[0].mxu0
      %v1568 = vadd.f32 0.0, %v1567
      %v1569 = vpop.f32.mrb[0].mxu0
      %v1570 = vpop.f32.mrb[0].mxu0
      %v1571 = vadd.f32 0.0, %v1570
      %v1572 = vpop.f32.mrb[0].mxu0
      %1573 = vmatprep.mubr.bf16.mxu0 0
      %1574 = vmatmul.mubr.bf16.gmra.mrb[0].mxu0 %v1036
      %v1575 = vpop.f32.mrb[0].mxu0
      %v1576 = vadd.f32 0.0, %v1575
      %v1577 = vpop.f32.mrb[0].mxu0
      %v1578 = vpop.f32.mrb[0].mxu0
      %v1579 = vadd.f32 0.0, %v1578
      %v1580 = vpop.f32.mrb[0].mxu0
      %1581 = vmatprep.mubr.bf16.mxu0 0
      %1582 = vmatmul.mubr.bf16.gmra.mrb[0].mxu0 %v1039
      %v1583 = vpop.f32.mrb[0].mxu0
      %v1584 = vadd.f32 0.0, %v1583
      %v1585 = vpop.f32.mrb[0].mxu0
      %v1586 = vpop.f32.mrb[0].mxu0
      %v1587 = vadd.f32 0.0, %v1586
      %v1588 = vpop.f32.mrb[0].mxu0
      %1589 = vmatprep.mubr.bf16.mxu0 0
      %1590 = vmatmul.mubr.bf16.gmra.mrb[0].mxu0 %v1042
      %v1591 = vpop.f32.mrb[0].mxu0
      %v1592 = vadd.f32 0.0, %v1591
      %v1593 = vpop.f32.mrb[0].mxu0
      %v1594 = vpop.f32.mrb[0].mxu0
      %v1595 = vadd.f32 0.0, %v1594
      %v1596 = vpop.f32.mrb[0].mxu0
      %1597 = vmatprep.mubr.bf16.mxu0 0
      %1598 = vmatmul.mubr.bf16.gmra.mrb[0].mxu0 %v1045
      %v1599 = vpop.f32.mrb[0].mxu0
      %v1600 = vadd.f32 0.0, %v1599
      %v1601 = vpop.f32.mrb[0].mxu0
      %v1602 = vpop.f32.mrb[0].mxu0
      %v1603 = vadd.f32 0.0, %v1602
      %v1604 = vpop.f32.mrb[0].mxu0
      %1605 = vmatprep.mubr.bf16.mxu0 0
      %1606 = vmatmul.mubr.bf16.gmra.mrb[0].mxu0 %v1048
      %v1607 = vpop.f32.mrb[0].mxu0
      %v1608 = vadd.f32 0.0, %v1607
      %v1609 = vpop.f32.mrb[0].mxu0
      %v1610 = vpop.f32.mrb[0].mxu0
      %v1611 = vadd.f32 0.0, %v1610
      %v1612 = vpop.f32.mrb[0].mxu0
      %1613 = vmatprep.mubr.bf16.mxu0 0
      %1614 = vmatmul.mubr.bf16.gmra.mrb[0].mxu0 %v1051
      %v1615 = vpop.f32.mrb[0].mxu0
      %v1616 = vadd.f32 0.0, %v1615
      %v1617 = vpop.f32.mrb[0].mxu0
      %v1618 = vpop.f32.mrb[0].mxu0
      %v1619 = vadd.f32 0.0, %v1618
      %v1620 = vpop.f32.mrb[0].mxu0
      %1621 = vmatprep.mubr.bf16.mxu0 0
      %1622 = vmatmul.mubr.bf16.gmra.mrb[0].mxu0 %v1054
      %v1623 = vpop.f32.mrb[0].mxu0
      %v1624 = vadd.f32 0.0, %v1623
      %v1625 = vpop.f32.mrb[0].mxu0
      %v1626 = vpop.f32.mrb[0].mxu0
      %v1627 = vadd.f32 0.0, %v1626
      %v1628 = vpop.f32.mrb[0].mxu0
      %1629 = vmatprep.mubr.bf16.mxu0 0
      %1630 = vmatmul.mubr.bf16.gmra.mrb[0].mxu0 %v1520
      %v1631 = vpop.f32.mrb[0].mxu0
      %v1632 = vadd.f32 0.0, %v1631
      %v1633 = vpop.f32.mrb[0].mxu0
      %v1634 = vpop.f32.mrb[0].mxu0
      %v1635 = vadd.f32 0.0, %v1634
      %v1636 = vpop.f32.mrb[0].mxu0
      %1637 = vdwg.mxu0
      %v1638 = vadd.f32 %v1486, %v1560
      %v1639 = vadd.f32 %v1487, %v1563
      %v1640 = vadd.f32 %v1488, %v1568
      %v1641 = vadd.f32 %v1489, %v1571
      %v1642 = vadd.f32 %v1490, %v1576
      %v1643 = vadd.f32 %v1491, %v1579
      %v1644 = vadd.f32 %v1492, %v1584
      %v1645 = vadd.f32 %v1493, %v1587
      %v1646 = vadd.f32 %v1494, %v1592
      %v1647 = vadd.f32 %v1495, %v1595
      %v1648 = vadd.f32 %v1496, %v1600
      %v1649 = vadd.f32 %v1497, %v1603
      %v1650 = vadd.f32 %v1498, %v1608
      %v1651 = vadd.f32 %v1499, %v1611
      %v1652 = vadd.f32 %v1500, %v1616
      %v1653 = vadd.f32 %v1501, %v1619
      %v1654 = vadd.f32 %v1502, %v1624
      %v1655 = vadd.f32 %v1503, %v1627
      %v1656 = vadd.f32 %v1504, %v1632
      %v1657 = vadd.f32 %v1505, %v1635
      %s1658 = scalar_lea.vmem %s1, 12
      %v1659 = vld [vmem:[%s1658] sm:$0x3]
      %v1662 = vunpack.c.l.b16 %v288
      %v1663 = vunpack.c.l.b16 %v289
      %v1664 = vpack.c.b16 %v1663, %v1662
      %v1666 = vsel %vm567, %v1664, 0
      %v1669 = vsel %vm598, %v1659, 0
      %1671 = vmatprep.subr.bf16.mxu0 0
      %1672 = vmatpush1.bf16.msra.mxu0 %v1669
      %1673 = vmatprep.subr.bf16.mxu0 0
      %1674 = vmatpush1.bf16.msra.mxu0 0
      %1675 = vmatprep.subr.bf16.mxu0 0
      %1676 = vmatpush1.bf16.msra.mxu0 0
      %1677 = vmatprep.subr.bf16.mxu0 0
      %1678 = vmatpush1.bf16.msra.mxu0 0
      %1679 = vmatprep.subr.bf16.mxu0 0
      %1680 = vmatpush1.bf16.msra.mxu0 0
      %1681 = vmatprep.subr.bf16.mxu0 0
      %1682 = vmatpush1.bf16.msra.mxu0 0
      %1683 = vmatprep.subr.bf16.mxu0 0
      %1684 = vmatpush1.bf16.msra.mxu0 0
      %1685 = vmatprep.subr.bf16.mxu0 0
      %1686 = vmatpush1.bf16.msra.mxu0 0
      %1687 = vmatprep.subr.bf16.mxu0 0
      %1688 = vmatpush1.bf16.msra.mxu0 0
      %1689 = vmatprep.subr.bf16.mxu0 0
      %1690 = vmatpush1.bf16.msra.mxu0 0
      %1691 = vmatprep.subr.bf16.mxu0 0
      %1692 = vmatpush1.bf16.msra.mxu0 0
      %1693 = vmatprep.subr.bf16.mxu0 0
      %1694 = vmatpush1.bf16.msra.mxu0 0
      %1695 = vmatprep.subr.bf16.mxu0 0
      %1696 = vmatpush1.bf16.msra.mxu0 0
      %1697 = vmatprep.subr.bf16.mxu0 0
      %1698 = vmatpush1.bf16.msra.mxu0 0
      %1699 = vmatprep.subr.bf16.mxu0 0
      %1700 = vmatpush1.bf16.msra.mxu0 0
      %1701 = vmatprep.subr.bf16.mxu0 0
      %1702 = vmatpush1.bf16.msra.mxu0 0
      %1703 = vmatprep.mubr.bf16.mxu0 0
      %1704 = vmatmul.mubr.bf16.gmra.mrb[0].mxu0 %v772
      %v1705 = vpop.f32.mrb[0].mxu0
      %v1706 = vadd.f32 0.0, %v1705
      %v1707 = vpop.f32.mrb[0].mxu0
      %v1708 = vpop.f32.mrb[0].mxu0
      %v1709 = vadd.f32 0.0, %v1708
      %v1710 = vpop.f32.mrb[0].mxu0
      %1711 = vmatprep.mubr.bf16.mxu0 0
      %1712 = vmatmul.mubr.bf16.gmra.mrb[0].mxu0 %v775
      %v1713 = vpop.f32.mrb[0].mxu0
      %v1714 = vadd.f32 0.0, %v1713
      %v1715 = vpop.f32.mrb[0].mxu0
      %v1716 = vpop.f32.mrb[0].mxu0
      %v1717 = vadd.f32 0.0, %v1716
      %v1718 = vpop.f32.mrb[0].mxu0
      %1719 = vmatprep.mubr.bf16.mxu0 0
      %1720 = vmatmul.mubr.bf16.gmra.mrb[0].mxu0 %v778
      %v1721 = vpop.f32.mrb[0].mxu0
      %v1722 = vadd.f32 0.0, %v1721
      %v1723 = vpop.f32.mrb[0].mxu0
      %v1724 = vpop.f32.mrb[0].mxu0
      %v1725 = vadd.f32 0.0, %v1724
      %v1726 = vpop.f32.mrb[0].mxu0
      %1727 = vmatprep.mubr.bf16.mxu0 0
      %1728 = vmatmul.mubr.bf16.gmra.mrb[0].mxu0 %v781
      %v1729 = vpop.f32.mrb[0].mxu0
      %v1730 = vadd.f32 0.0, %v1729
      %v1731 = vpop.f32.mrb[0].mxu0
      %v1732 = vpop.f32.mrb[0].mxu0
      %v1733 = vadd.f32 0.0, %v1732
      %v1734 = vpop.f32.mrb[0].mxu0
      %1735 = vmatprep.mubr.bf16.mxu0 0
      %1736 = vmatmul.mubr.bf16.gmra.mrb[0].mxu0 %v784
      %v1737 = vpop.f32.mrb[0].mxu0
      %v1738 = vadd.f32 0.0, %v1737
      %v1739 = vpop.f32.mrb[0].mxu0
      %v1740 = vpop.f32.mrb[0].mxu0
      %v1741 = vadd.f32 0.0, %v1740
      %v1742 = vpop.f32.mrb[0].mxu0
      %1743 = vmatprep.mubr.bf16.mxu0 0
      %1744 = vmatmul.mubr.bf16.gmra.mrb[0].mxu0 %v787
      %v1745 = vpop.f32.mrb[0].mxu0
      %v1746 = vadd.f32 0.0, %v1745
      %v1747 = vpop.f32.mrb[0].mxu0
      %v1748 = vpop.f32.mrb[0].mxu0
      %v1749 = vadd.f32 0.0, %v1748
      %v1750 = vpop.f32.mrb[0].mxu0
      %1751 = vmatprep.mubr.bf16.mxu0 0
      %1752 = vmatmul.mubr.bf16.gmra.mrb[0].mxu0 %v790
      %v1753 = vpop.f32.mrb[0].mxu0
      %v1754 = vadd.f32 0.0, %v1753
      %v1755 = vpop.f32.mrb[0].mxu0
      %v1756 = vpop.f32.mrb[0].mxu0
      %v1757 = vadd.f32 0.0, %v1756
      %v1758 = vpop.f32.mrb[0].mxu0
      %1759 = vmatprep.mubr.bf16.mxu0 0
      %1760 = vmatmul.mubr.bf16.gmra.mrb[0].mxu0 %v793
      %v1761 = vpop.f32.mrb[0].mxu0
      %v1762 = vadd.f32 0.0, %v1761
      %v1763 = vpop.f32.mrb[0].mxu0
      %v1764 = vpop.f32.mrb[0].mxu0
      %v1765 = vadd.f32 0.0, %v1764
      %v1766 = vpop.f32.mrb[0].mxu0
      %1767 = vmatprep.mubr.bf16.mxu0 0
      %1768 = vmatmul.mubr.bf16.gmra.mrb[0].mxu0 %v1200
      %v1769 = vpop.f32.mrb[0].mxu0
      %v1770 = vadd.f32 0.0, %v1769
      %v1771 = vpop.f32.mrb[0].mxu0
      %v1772 = vpop.f32.mrb[0].mxu0
      %v1773 = vadd.f32 0.0, %v1772
      %v1774 = vpop.f32.mrb[0].mxu0
      %1775 = vmatprep.mubr.bf16.mxu0 0
      %1776 = vmatmul.mubr.bf16.gmra.mrb[0].mxu0 %v1666
      %v1777 = vpop.f32.mrb[0].mxu0
      %v1778 = vadd.f32 0.0, %v1777
      %v1779 = vpop.f32.mrb[0].mxu0
      %v1780 = vpop.f32.mrb[0].mxu0
      %v1781 = vadd.f32 0.0, %v1780
      %v1782 = vpop.f32.mrb[0].mxu0
      %1783 = vdwg.mxu0
      %v1784 = vadd.f32 %v1638, %v1706
      %v1785 = vadd.f32 %v1639, %v1709
      %v1786 = vadd.f32 %v1640, %v1714
      %v1787 = vadd.f32 %v1641, %v1717
      %v1788 = vadd.f32 %v1642, %v1722
      %v1789 = vadd.f32 %v1643, %v1725
      %v1790 = vadd.f32 %v1644, %v1730
      %v1791 = vadd.f32 %v1645, %v1733
      %v1792 = vadd.f32 %v1646, %v1738
      %v1793 = vadd.f32 %v1647, %v1741
      %v1794 = vadd.f32 %v1648, %v1746
      %v1795 = vadd.f32 %v1649, %v1749
      %v1796 = vadd.f32 %v1650, %v1754
      %v1797 = vadd.f32 %v1651, %v1757
      %v1798 = vadd.f32 %v1652, %v1762
      %v1799 = vadd.f32 %v1653, %v1765
      %v1800 = vadd.f32 %v1654, %v1770
      %v1801 = vadd.f32 %v1655, %v1773
      %v1802 = vadd.f32 %v1656, %v1778
      %v1803 = vadd.f32 %v1657, %v1781
      %v1805 = vshrl.u32 %v288, 16
      %v1807 = vrot.slane %v1805, 4
      %v1808 = vshll.u32 %v288, 16
      %v1810 = vrot.slane %v1808, 5
      %v1811 = vor.u32 %v1807, %v1810
      %v1812 = vrot.slane %v1811, 4
      %v1814 = vshll.u32 %v289, 16
      %v1816 = vrot.slane %v1814, 5
      %v1817 = vsel %vm294, %v1812, %v1816
      %v1818 = vshrl.u32 %v289, 16
      %v1820 = vrot.slane %v1818, 4
      %v1821 = vor.u32 %v1820, %v1816
      %v1822 = vrot.slane %v1821, 4
      %v1824 = vshll.u32 %v290, 16
      %v1826 = vrot.slane %v1824, 5
      %v1827 = vsel %vm294, %v1822, %v1826
      %s1828 = scalar_lea.vmem %s1, 14
      %v1829 = vld [vmem:[%s1828] sm:$0x3]
      %v1830 = vunpack.c.l.b16 %v1817
      %v1831 = vunpack.c.l.b16 %v1827
      %v1832 = vpack.c.b16 %v1831, %v1830
      %v1834 = vsel %vm567, %v1832, 0
      %v1837 = vsel %vm598, %v1829, 0
      %1839 = vmatprep.subr.bf16.mxu0 0
      %1840 = vmatpush1.bf16.msra.mxu0 %v1837
      %1841 = vmatprep.subr.bf16.mxu0 0
      %1842 = vmatpush1.bf16.msra.mxu0 0
      %1843 = vmatprep.subr.bf16.mxu0 0
      %1844 = vmatpush1.bf16.msra.mxu0 0
      %1845 = vmatprep.subr.bf16.mxu0 0
      %1846 = vmatpush1.bf16.msra.mxu0 0
      %1847 = vmatprep.subr.bf16.mxu0 0
      %1848 = vmatpush1.bf16.msra.mxu0 0
      %1849 = vmatprep.subr.bf16.mxu0 0
      %1850 = vmatpush1.bf16.msra.mxu0 0
      %1851 = vmatprep.subr.bf16.mxu0 0
      %1852 = vmatpush1.bf16.msra.mxu0 0
      %1853 = vmatprep.subr.bf16.mxu0 0
      %1854 = vmatpush1.bf16.msra.mxu0 0
      %1855 = vmatprep.subr.bf16.mxu0 0
      %1856 = vmatpush1.bf16.msra.mxu0 0
      %1857 = vmatprep.subr.bf16.mxu0 0
      %1858 = vmatpush1.bf16.msra.mxu0 0
      %1859 = vmatprep.subr.bf16.mxu0 0
      %1860 = vmatpush1.bf16.msra.mxu0 0
      %1861 = vmatprep.subr.bf16.mxu0 0
      %1862 = vmatpush1.bf16.msra.mxu0 0
      %1863 = vmatprep.subr.bf16.mxu0 0
      %1864 = vmatpush1.bf16.msra.mxu0 0
      %1865 = vmatprep.subr.bf16.mxu0 0
      %1866 = vmatpush1.bf16.msra.mxu0 0
      %1867 = vmatprep.subr.bf16.mxu0 0
      %1868 = vmatpush1.bf16.msra.mxu0 0
      %1869 = vmatprep.subr.bf16.mxu0 0
      %1870 = vmatpush1.bf16.msra.mxu0 0
      %1871 = vmatprep.mubr.bf16.mxu0 0
      %1872 = vmatmul.mubr.bf16.gmra.mrb[0].mxu0 %v575
      %v1873 = vpop.f32.mrb[0].mxu0
      %v1874 = vadd.f32 0.0, %v1873
      %v1875 = vpop.f32.mrb[0].mxu0
      %v1876 = vpop.f32.mrb[0].mxu0
      %v1877 = vadd.f32 0.0, %v1876
      %v1878 = vpop.f32.mrb[0].mxu0
      %1879 = vmatprep.mubr.bf16.mxu0 0
      %1880 = vmatmul.mubr.bf16.gmra.mrb[0].mxu0 %v578
      %v1881 = vpop.f32.mrb[0].mxu0
      %v1882 = vadd.f32 0.0, %v1881
      %v1883 = vpop.f32.mrb[0].mxu0
      %v1884 = vpop.f32.mrb[0].mxu0
      %v1885 = vadd.f32 0.0, %v1884
      %v1886 = vpop.f32.mrb[0].mxu0
      %1887 = vmatprep.mubr.bf16.mxu0 0
      %1888 = vmatmul.mubr.bf16.gmra.mrb[0].mxu0 %v581
      %v1889 = vpop.f32.mrb[0].mxu0
      %v1890 = vadd.f32 0.0, %v1889
      %v1891 = vpop.f32.mrb[0].mxu0
      %v1892 = vpop.f32.mrb[0].mxu0
      %v1893 = vadd.f32 0.0, %v1892
      %v1894 = vpop.f32.mrb[0].mxu0
      %1895 = vmatprep.mubr.bf16.mxu0 0
      %1896 = vmatmul.mubr.bf16.gmra.mrb[0].mxu0 %v584
      %v1897 = vpop.f32.mrb[0].mxu0
      %v1898 = vadd.f32 0.0, %v1897
      %v1899 = vpop.f32.mrb[0].mxu0
      %v1900 = vpop.f32.mrb[0].mxu0
      %v1901 = vadd.f32 0.0, %v1900
      %v1902 = vpop.f32.mrb[0].mxu0
      %1903 = vmatprep.mubr.bf16.mxu0 0
      %1904 = vmatmul.mubr.bf16.gmra.mrb[0].mxu0 %v587
      %v1905 = vpop.f32.mrb[0].mxu0
      %v1906 = vadd.f32 0.0, %v1905
      %v1907 = vpop.f32.mrb[0].mxu0
      %v1908 = vpop.f32.mrb[0].mxu0
      %v1909 = vadd.f32 0.0, %v1908
      %v1910 = vpop.f32.mrb[0].mxu0
      %1911 = vmatprep.mubr.bf16.mxu0 0
      %1912 = vmatmul.mubr.bf16.gmra.mrb[0].mxu0 %v590
      %v1913 = vpop.f32.mrb[0].mxu0
      %v1914 = vadd.f32 0.0, %v1913
      %v1915 = vpop.f32.mrb[0].mxu0
      %v1916 = vpop.f32.mrb[0].mxu0
      %v1917 = vadd.f32 0.0, %v1916
      %v1918 = vpop.f32.mrb[0].mxu0
      %1919 = vmatprep.mubr.bf16.mxu0 0
      %1920 = vmatmul.mubr.bf16.gmra.mrb[0].mxu0 %v593
      %v1921 = vpop.f32.mrb[0].mxu0
      %v1922 = vadd.f32 0.0, %v1921
      %v1923 = vpop.f32.mrb[0].mxu0
      %v1924 = vpop.f32.mrb[0].mxu0
      %v1925 = vadd.f32 0.0, %v1924
      %v1926 = vpop.f32.mrb[0].mxu0
      %1927 = vmatprep.mubr.bf16.mxu0 0
      %1928 = vmatmul.mubr.bf16.gmra.mrb[0].mxu0 %v596
      %v1929 = vpop.f32.mrb[0].mxu0
      %v1930 = vadd.f32 0.0, %v1929
      %v1931 = vpop.f32.mrb[0].mxu0
      %v1932 = vpop.f32.mrb[0].mxu0
      %v1933 = vadd.f32 0.0, %v1932
      %v1934 = vpop.f32.mrb[0].mxu0
      %1935 = vmatprep.mubr.bf16.mxu0 0
      %1936 = vmatmul.mubr.bf16.gmra.mrb[0].mxu0 %v1368
      %v1937 = vpop.f32.mrb[0].mxu0
      %v1938 = vadd.f32 0.0, %v1937
      %v1939 = vpop.f32.mrb[0].mxu0
      %v1940 = vpop.f32.mrb[0].mxu0
      %v1941 = vadd.f32 0.0, %v1940
      %v1942 = vpop.f32.mrb[0].mxu0
      %1943 = vmatprep.mubr.bf16.mxu0 0
      %1944 = vmatmul.mubr.bf16.gmra.mrb[0].mxu0 %v1834
      %v1945 = vpop.f32.mrb[0].mxu0
      %v1946 = vadd.f32 0.0, %v1945
      %v1947 = vpop.f32.mrb[0].mxu0
      %v1948 = vpop.f32.mrb[0].mxu0
      %v1949 = vadd.f32 0.0, %v1948
      %v1950 = vpop.f32.mrb[0].mxu0
      %1951 = vdwg.mxu0
      %v1952 = vadd.f32 %v1784, %v1874
      %v1953 = vadd.f32 %v1785, %v1877
      %v1954 = vadd.f32 %v1786, %v1882
      %v1955 = vadd.f32 %v1787, %v1885
      %v1956 = vadd.f32 %v1788, %v1890
      %v1957 = vadd.f32 %v1789, %v1893
      %v1958 = vadd.f32 %v1790, %v1898
      %v1959 = vadd.f32 %v1791, %v1901
      %v1960 = vadd.f32 %v1792, %v1906
      %v1961 = vadd.f32 %v1793, %v1909
      %v1962 = vadd.f32 %v1794, %v1914
      %v1963 = vadd.f32 %v1795, %v1917
      %v1964 = vadd.f32 %v1796, %v1922
      %v1965 = vadd.f32 %v1797, %v1925
      %v1966 = vadd.f32 %v1798, %v1930
      %v1967 = vadd.f32 %v1799, %v1933
      %v1968 = vadd.f32 %v1800, %v1938
      %v1969 = vadd.f32 %v1801, %v1941
      %v1970 = vadd.f32 %v1802, %v1946
      %v1971 = vadd.f32 %v1803, %v1949
      %v1973 = vrot.slane %v288, 5
      %v1974 = vrot.slane %v1973, 4
      %v1975 = vrot.slane %v289, 5
      %v1976 = vsel %vm923, %v1974, %v1975
      %v1977 = vrot.slane %v1975, 4
      %v1978 = vrot.slane %v290, 5
      %v1979 = vsel %vm923, %v1977, %v1978
      %s1980 = scalar_lea.vmem %s1, 16
      %v1981 = vld [vmem:[%s1980] sm:$0x3]
      %v1982 = vunpack.c.l.b16 %v1976
      %v1983 = vunpack.c.l.b16 %v1979
      %v1984 = vpack.c.b16 %v1983, %v1982
      %v1986 = vsel %vm567, %v1984, 0
      %v1989 = vsel %vm598, %v1981, 0
      %1991 = vmatprep.subr.bf16.mxu0 0
      %1992 = vmatpush1.bf16.msra.mxu0 %v1989
      %1993 = vmatprep.subr.bf16.mxu0 0
      %1994 = vmatpush1.bf16.msra.mxu0 0
      %1995 = vmatprep.subr.bf16.mxu0 0
      %1996 = vmatpush1.bf16.msra.mxu0 0
      %1997 = vmatprep.subr.bf16.mxu0 0
      %1998 = vmatpush1.bf16.msra.mxu0 0
      %1999 = vmatprep.subr.bf16.mxu0 0
      %2000 = vmatpush1.bf16.msra.mxu0 0
      %2001 = vmatprep.subr.bf16.mxu0 0
      %2002 = vmatpush1.bf16.msra.mxu0 0
      %2003 = vmatprep.subr.bf16.mxu0 0
      %2004 = vmatpush1.bf16.msra.mxu0 0
      %2005 = vmatprep.subr.bf16.mxu0 0
      %2006 = vmatpush1.bf16.msra.mxu0 0
      %2007 = vmatprep.subr.bf16.mxu0 0
      %2008 = vmatpush1.bf16.msra.mxu0 0
      %2009 = vmatprep.subr.bf16.mxu0 0
      %2010 = vmatpush1.bf16.msra.mxu0 0
      %2011 = vmatprep.subr.bf16.mxu0 0
      %2012 = vmatpush1.bf16.msra.mxu0 0
      %2013 = vmatprep.subr.bf16.mxu0 0
      %2014 = vmatpush1.bf16.msra.mxu0 0
      %2015 = vmatprep.subr.bf16.mxu0 0
      %2016 = vmatpush1.bf16.msra.mxu0 0
      %2017 = vmatprep.subr.bf16.mxu0 0
      %2018 = vmatpush1.bf16.msra.mxu0 0
      %2019 = vmatprep.subr.bf16.mxu0 0
      %2020 = vmatpush1.bf16.msra.mxu0 0
      %2021 = vmatprep.subr.bf16.mxu0 0
      %2022 = vmatpush1.bf16.msra.mxu0 0
      %2023 = vmatprep.mubr.bf16.mxu0 0
      %2024 = vmatmul.mubr.bf16.gmra.mrb[0].mxu0 %v1033
      %v2025 = vpop.f32.mrb[0].mxu0
      %v2026 = vadd.f32 0.0, %v2025
      %v2027 = vpop.f32.mrb[0].mxu0
      %v2028 = vpop.f32.mrb[0].mxu0
      %v2029 = vadd.f32 0.0, %v2028
      %v2030 = vpop.f32.mrb[0].mxu0
      %2031 = vmatprep.mubr.bf16.mxu0 0
      %2032 = vmatmul.mubr.bf16.gmra.mrb[0].mxu0 %v1036
      %v2033 = vpop.f32.mrb[0].mxu0
      %v2034 = vadd.f32 0.0, %v2033
      %v2035 = vpop.f32.mrb[0].mxu0
      %v2036 = vpop.f32.mrb[0].mxu0
      %v2037 = vadd.f32 0.0, %v2036
      %v2038 = vpop.f32.mrb[0].mxu0
      %2039 = vmatprep.mubr.bf16.mxu0 0
      %2040 = vmatmul.mubr.bf16.gmra.mrb[0].mxu0 %v1039
      %v2041 = vpop.f32.mrb[0].mxu0
      %v2042 = vadd.f32 0.0, %v2041
      %v2043 = vpop.f32.mrb[0].mxu0
      %v2044 = vpop.f32.mrb[0].mxu0
      %v2045 = vadd.f32 0.0, %v2044
      %v2046 = vpop.f32.mrb[0].mxu0
      %2047 = vmatprep.mubr.bf16.mxu0 0
      %2048 = vmatmul.mubr.bf16.gmra.mrb[0].mxu0 %v1042
      %v2049 = vpop.f32.mrb[0].mxu0
      %v2050 = vadd.f32 0.0, %v2049
      %v2051 = vpop.f32.mrb[0].mxu0
      %v2052 = vpop.f32.mrb[0].mxu0
      %v2053 = vadd.f32 0.0, %v2052
      %v2054 = vpop.f32.mrb[0].mxu0
      %2055 = vmatprep.mubr.bf16.mxu0 0
      %2056 = vmatmul.mubr.bf16.gmra.mrb[0].mxu0 %v1045
      %v2057 = vpop.f32.mrb[0].mxu0
      %v2058 = vadd.f32 0.0, %v2057
      %v2059 = vpop.f32.mrb[0].mxu0
      %v2060 = vpop.f32.mrb[0].mxu0
      %v2061 = vadd.f32 0.0, %v2060
      %v2062 = vpop.f32.mrb[0].mxu0
      %2063 = vmatprep.mubr.bf16.mxu0 0
      %2064 = vmatmul.mubr.bf16.gmra.mrb[0].mxu0 %v1048
      %v2065 = vpop.f32.mrb[0].mxu0
      %v2066 = vadd.f32 0.0, %v2065
      %v2067 = vpop.f32.mrb[0].mxu0
      %v2068 = vpop.f32.mrb[0].mxu0
      %v2069 = vadd.f32 0.0, %v2068
      %v2070 = vpop.f32.mrb[0].mxu0
      %2071 = vmatprep.mubr.bf16.mxu0 0
      %2072 = vmatmul.mubr.bf16.gmra.mrb[0].mxu0 %v1051
      %v2073 = vpop.f32.mrb[0].mxu0
      %v2074 = vadd.f32 0.0, %v2073
      %v2075 = vpop.f32.mrb[0].mxu0
      %v2076 = vpop.f32.mrb[0].mxu0
      %v2077 = vadd.f32 0.0, %v2076
      %v2078 = vpop.f32.mrb[0].mxu0
      %2079 = vmatprep.mubr.bf16.mxu0 0
      %2080 = vmatmul.mubr.bf16.gmra.mrb[0].mxu0 %v1054
      %v2081 = vpop.f32.mrb[0].mxu0
      %v2082 = vadd.f32 0.0, %v2081
      %v2083 = vpop.f32.mrb[0].mxu0
      %v2084 = vpop.f32.mrb[0].mxu0
      %v2085 = vadd.f32 0.0, %v2084
      %v2086 = vpop.f32.mrb[0].mxu0
      %2087 = vmatprep.mubr.bf16.mxu0 0
      %2088 = vmatmul.mubr.bf16.gmra.mrb[0].mxu0 %v1520
      %v2089 = vpop.f32.mrb[0].mxu0
      %v2090 = vadd.f32 0.0, %v2089
      %v2091 = vpop.f32.mrb[0].mxu0
      %v2092 = vpop.f32.mrb[0].mxu0
      %v2093 = vadd.f32 0.0, %v2092
      %v2094 = vpop.f32.mrb[0].mxu0
      %2095 = vmatprep.mubr.bf16.mxu0 0
      %2096 = vmatmul.mubr.bf16.gmra.mrb[0].mxu0 %v1986
      %v2097 = vpop.f32.mrb[0].mxu0
      %v2098 = vadd.f32 0.0, %v2097
      %v2099 = vpop.f32.mrb[0].mxu0
      %v2100 = vpop.f32.mrb[0].mxu0
      %v2101 = vadd.f32 0.0, %v2100
      %v2102 = vpop.f32.mrb[0].mxu0
      %2103 = vdwg.mxu0
      %v2104 = vadd.f32 %v1952, %v2026
      %v2105 = vadd.f32 %v1953, %v2029
      %v2106 = vadd.f32 %v1954, %v2034
      %v2107 = vadd.f32 %v1955, %v2037
      %v2108 = vadd.f32 %v1956, %v2042
      %v2109 = vadd.f32 %v1957, %v2045
      %v2110 = vadd.f32 %v1958, %v2050
      %v2111 = vadd.f32 %v1959, %v2053
      %v2112 = vadd.f32 %v1960, %v2058
      %v2113 = vadd.f32 %v1961, %v2061
      %v2114 = vadd.f32 %v1962, %v2066
      %v2115 = vadd.f32 %v1963, %v2069
      %v2116 = vadd.f32 %v1964, %v2074
      %v2117 = vadd.f32 %v1965, %v2077
      %v2118 = vadd.f32 %v1966, %v2082
      %v2119 = vadd.f32 %v1967, %v2085
      %v2120 = vadd.f32 %v1968, %v2090
      %v2121 = vadd.f32 %v1969, %v2093
      %v2122 = vadd.f32 %v1970, %v2098
      %v2123 = vadd.f32 %v1971, %v2101
      %v2124 = vld [vmem:[%s3] sm:$0x1]
      %v2126 = vlaneseq
      %v2127 = vshrl.u32 %v2126, 7
      %v2128 = vsub.s32 0, %v2127
      %v2129 = vrot.slane %v2124, %v2128
      %v2131 = vadd.f32 %v2104, %v2129
      %v2132 = vadd.f32 %v2105, %v2129
      %v2133 = vadd.f32 %v2106, %v2129
      %v2134 = vadd.f32 %v2107, %v2129
      %v2135 = vadd.f32 %v2108, %v2129
      %v2136 = vadd.f32 %v2109, %v2129
      %v2137 = vadd.f32 %v2110, %v2129
      %v2138 = vadd.f32 %v2111, %v2129
      %v2139 = vadd.f32 %v2112, %v2129
      %v2140 = vadd.f32 %v2113, %v2129
      %v2141 = vadd.f32 %v2114, %v2129
      %v2142 = vadd.f32 %v2115, %v2129
      %v2143 = vadd.f32 %v2116, %v2129
      %v2144 = vadd.f32 %v2117, %v2129
      %v2145 = vadd.f32 %v2118, %v2129
      %v2146 = vadd.f32 %v2119, %v2129
      %v2147 = vadd.f32 %v2120, %v2129
      %v2148 = vadd.f32 %v2121, %v2129
      %v2149 = vadd.f32 %v2122, %v2129
      %v2150 = vadd.f32 %v2123, %v2129
      %v2151 = vmax.f32 %v2131, 0.0
      %v2152 = vmax.f32 %v2132, 0.0
      %v2153 = vmax.f32 %v2133, 0.0
      %v2154 = vmax.f32 %v2134, 0.0
      %v2155 = vmax.f32 %v2135, 0.0
      %v2156 = vmax.f32 %v2136, 0.0
      %v2157 = vmax.f32 %v2137, 0.0
      %v2158 = vmax.f32 %v2138, 0.0
      %v2159 = vmax.f32 %v2139, 0.0
      %v2160 = vmax.f32 %v2140, 0.0
      %v2161 = vmax.f32 %v2141, 0.0
      %v2162 = vmax.f32 %v2142, 0.0
      %v2163 = vmax.f32 %v2143, 0.0
      %v2164 = vmax.f32 %v2144, 0.0
      %v2165 = vmax.f32 %v2145, 0.0
      %v2166 = vmax.f32 %v2146, 0.0
      %v2167 = vmax.f32 %v2147, 0.0
      %v2168 = vmax.f32 %v2148, 0.0
      %v2169 = vmax.f32 %v2149, 0.0
      %v2170 = vmax.f32 %v2150, 0.0
      %s2171 = ssub.s32 %s251, 1
      %v2172 = vstv %s2171
      %v2173 = vadd.s32 %v2172, 1
      %v2174 = vadd.s32 %v2172, 2
      %v2175 = vadd.s32 %v2172, 3
      %v2176 = vadd.s32 %v2172, 4
      %v2177 = vadd.s32 %v2172, 5
      %v2178 = vadd.s32 %v2172, 6
      %v2179 = vadd.s32 %v2172, 7
      %v2180 = vadd.s32 %v2172, 8
      %v2181 = vadd.s32 %v2172, 9
      %vm2182 = vcmp.ge.s32.totalorder %v2172, 0
      %vm2183 = vcmp.ge.s32.totalorder %v2173, 0
      %vm2184 = vcmp.ge.s32.totalorder %v2174, 0
      %vm2185 = vcmp.ge.s32.totalorder %v2175, 0
      %vm2186 = vcmp.ge.s32.totalorder %v2176, 0
      %vm2187 = vcmp.ge.s32.totalorder %v2177, 0
      %vm2188 = vcmp.ge.s32.totalorder %v2178, 0
      %vm2189 = vcmp.ge.s32.totalorder %v2179, 0
      %vm2190 = vcmp.ge.s32.totalorder %v2180, 0
      %vm2191 = vcmp.ge.s32.totalorder %v2181, 0
      %vm2192 = vcmp.lt.s32.totalorder %v2172, 16
      %vm2193 = vcmp.lt.s32.totalorder %v2173, 16
      %vm2194 = vcmp.lt.s32.totalorder %v2174, 16
      %vm2195 = vcmp.lt.s32.totalorder %v2175, 16
      %vm2196 = vcmp.lt.s32.totalorder %v2176, 16
      %vm2197 = vcmp.lt.s32.totalorder %v2177, 16
      %vm2198 = vcmp.lt.s32.totalorder %v2178, 16
      %vm2199 = vcmp.lt.s32.totalorder %v2179, 16
      %vm2200 = vcmp.lt.s32.totalorder %v2180, 16
      %vm2201 = vcmp.lt.s32.totalorder %v2181, 16
      %vm2202 = vmand %vm2182, %vm2192
      %vm2203 = vmand %vm2183, %vm2193
      %vm2204 = vmand %vm2184, %vm2194
      %vm2205 = vmand %vm2185, %vm2195
      %vm2206 = vmand %vm2186, %vm2196
      %vm2207 = vmand %vm2187, %vm2197
      %vm2208 = vmand %vm2188, %vm2198
      %vm2209 = vmand %vm2189, %vm2199
      %vm2210 = vmand %vm2190, %vm2200
      %vm2211 = vmand %vm2191, %vm2201
      %v2212 = vsel %vm2202, 1, 0
      %v2213 = vsel %vm2203, 1, 0
      %v2214 = vsel %vm2204, 1, 0
      %v2215 = vsel %vm2205, 1, 0
      %v2216 = vsel %vm2206, 1, 0
      %v2217 = vsel %vm2207, 1, 0
      %v2218 = vsel %vm2208, 1, 0
      %v2219 = vsel %vm2209, 1, 0
      %v2220 = vsel %vm2210, 1, 0
      %v2221 = vsel %vm2211, 1, 0
      %vm2222 = vcmp.eq.s32.totalorder %v2212, 1
      %vm2223 = vcmp.eq.s32.totalorder %v2213, 1
      %vm2224 = vcmp.eq.s32.totalorder %v2214, 1
      %vm2225 = vcmp.eq.s32.totalorder %v2215, 1
      %vm2226 = vcmp.eq.s32.totalorder %v2216, 1
      %vm2227 = vcmp.eq.s32.totalorder %v2217, 1
      %vm2228 = vcmp.eq.s32.totalorder %v2218, 1
      %vm2229 = vcmp.eq.s32.totalorder %v2219, 1
      %vm2230 = vcmp.eq.s32.totalorder %v2220, 1
      %vm2231 = vcmp.eq.s32.totalorder %v2221, 1
      %v2232 = vsel %vm2222, %v2151, 0.0
      %v2233 = vsel %vm2222, %v2152, 0.0
      %v2234 = vsel %vm2223, %v2153, 0.0
      %v2235 = vsel %vm2223, %v2154, 0.0
      %v2236 = vsel %vm2224, %v2155, 0.0
      %v2237 = vsel %vm2224, %v2156, 0.0
      %v2238 = vsel %vm2225, %v2157, 0.0
      %v2239 = vsel %vm2225, %v2158, 0.0
      %v2240 = vsel %vm2226, %v2159, 0.0
      %v2241 = vsel %vm2226, %v2160, 0.0
      %v2242 = vsel %vm2227, %v2161, 0.0
      %v2243 = vsel %vm2227, %v2162, 0.0
      %v2244 = vsel %vm2228, %v2163, 0.0
      %v2245 = vsel %vm2228, %v2164, 0.0
      %v2246 = vsel %vm2229, %v2165, 0.0
      %v2247 = vsel %vm2229, %v2166, 0.0
      %v2248 = vsel %vm2230, %v2167, 0.0
      %v2249 = vsel %vm2230, %v2168, 0.0
      %v2250 = vsel %vm2231, %v2169, 0.0
      %v2251 = vsel %vm2231, %v2170, 0.0
      %vm2252 = vcmask 24576
      %vm2253 = vsmask.f32 256
      %vm2254 = vmand %vm2252, %vm2253
      %v2255 = vld [vmem:[#allocation2] sm:$0x1]
      %v2256 = vsel %vm2254, 0, %v2255
      %2257 = vst [vmem:[#allocation2] sm:$0x1] %v2256
      %v2258 = vld [vmem:[#allocation2 + $0xc] sm:$0x1]
      %v2259 = vsel %vm2254, 0, %v2258
      %2260 = vst [vmem:[#allocation2 + $0xc] sm:$0x1] %v2259
      %v2261 = vld [vmem:[#allocation2 + $0x18] sm:$0x1]
      %v2262 = vsel %vm2254, 0, %v2261
      %2263 = vst [vmem:[#allocation2 + $0x18] sm:$0x1] %v2262
      %v2264 = vld [vmem:[#allocation2 + $0x24] sm:$0x1]
      %v2265 = vsel %vm2254, 0, %v2264
      %2266 = vst [vmem:[#allocation2 + $0x24] sm:$0x1] %v2265
      %v2267 = vld [vmem:[#allocation2 + $0x30] sm:$0x1]
      %v2268 = vsel %vm2254, 0, %v2267
      %2269 = vst [vmem:[#allocation2 + $0x30] sm:$0x1] %v2268
      %v2270 = vld [vmem:[#allocation2 + $0x3c] sm:$0x1]
      %v2271 = vsel %vm2254, 0, %v2270
      %2272 = vst [vmem:[#allocation2 + $0x3c] sm:$0x1] %v2271
      %v2273 = vld [vmem:[#allocation2 + $0x48] sm:$0x1]
      %v2274 = vsel %vm2254, 0, %v2273
      %2275 = vst [vmem:[#allocation2 + $0x48] sm:$0x1] %v2274
      %v2276 = vld [vmem:[#allocation2 + $0x54] sm:$0x1]
      %v2277 = vsel %vm2254, 0, %v2276
      %2278 = vst [vmem:[#allocation2 + $0x54] sm:$0x1] %v2277
      %v2279 = vld [vmem:[#allocation2 + $0x60] sm:$0x1]
      %v2280 = vsel %vm2254, 0, %v2279
      %2281 = vst [vmem:[#allocation2 + $0x60] sm:$0x1] %v2280
      %v2282 = vld [vmem:[#allocation2 + $0x6c] sm:$0x1]
      %v2283 = vsel %vm2254, 0, %v2282
      %2284 = vst [vmem:[#allocation2 + $0x6c] sm:$0x1] %v2283
      %vm2285 = vsmask.f32 7938
      %vm2286 = vmand %vm2252, %vm2285
      %v2287 = vld [vmem:[#allocation2 + $0x8] sm:$0x1]
      %v2288 = vsel %vm2286, 0, %v2287
      %2289 = vst [vmem:[#allocation2 + $0x8] sm:$0x1] %v2288
      %v2290 = vld [vmem:[#allocation2 + $0x14] sm:$0x1]
      %v2291 = vsel %vm2286, 0, %v2290
      %2292 = vst [vmem:[#allocation2 + $0x14] sm:$0x1] %v2291
      %v2293 = vld [vmem:[#allocation2 + $0x20] sm:$0x1]
      %v2294 = vsel %vm2286, 0, %v2293
      %2295 = vst [vmem:[#allocation2 + $0x20] sm:$0x1] %v2294
      %v2296 = vld [vmem:[#allocation2 + $0x2c] sm:$0x1]
      %v2297 = vsel %vm2286, 0, %v2296
      %2298 = vst [vmem:[#allocation2 + $0x2c] sm:$0x1] %v2297
      %v2299 = vld [vmem:[#allocation2 + $0x38] sm:$0x1]
      %v2300 = vsel %vm2286, 0, %v2299
      %2301 = vst [vmem:[#allocation2 + $0x38] sm:$0x1] %v2300
      %v2302 = vld [vmem:[#allocation2 + $0x44] sm:$0x1]
      %v2303 = vsel %vm2286, 0, %v2302
      %2304 = vst [vmem:[#allocation2 + $0x44] sm:$0x1] %v2303
      %v2305 = vld [vmem:[#allocation2 + $0x50] sm:$0x1]
      %v2306 = vsel %vm2286, 0, %v2305
      %2307 = vst [vmem:[#allocation2 + $0x50] sm:$0x1] %v2306
      %v2308 = vld [vmem:[#allocation2 + $0x5c] sm:$0x1]
      %v2309 = vsel %vm2286, 0, %v2308
      %2310 = vst [vmem:[#allocation2 + $0x5c] sm:$0x1] %v2309
      %v2311 = vld [vmem:[#allocation2 + $0x68] sm:$0x1]
      %v2312 = vsel %vm2286, 0, %v2311
      %2313 = vst [vmem:[#allocation2 + $0x68] sm:$0x1] %v2312
      %v2314 = vld [vmem:[#allocation2 + $0x74] sm:$0x1]
      %v2315 = vsel %vm2286, 0, %v2314
      %2316 = vst [vmem:[#allocation2 + $0x74] sm:$0x1] %v2315
      %v2317 = vpack.c.bf16 %v2233, %v2232
      %v2318 = vpack.c.bf16 %v2235, %v2234
      %v2319 = vpack.c.bf16 %v2237, %v2236
      %v2320 = vpack.c.bf16 %v2239, %v2238
      %v2321 = vpack.c.bf16 %v2241, %v2240
      %v2322 = vpack.c.bf16 %v2243, %v2242
      %v2323 = vpack.c.bf16 %v2245, %v2244
      %v2324 = vpack.c.bf16 %v2247, %v2246
      %v2325 = vpack.c.bf16 %v2249, %v2248
      %v2326 = vpack.c.bf16 %v2251, %v2250
      %v2337 = vunpack.c.l.b16 %v2317
      %v2338 = vunpack.c.h.b16 %v2317
      %v2339 = vunpack.c.l.b16 %v2318
      %v2340 = vunpack.c.h.b16 %v2318
      %v2341 = vunpack.c.l.b16 %v2319
      %v2342 = vunpack.c.h.b16 %v2319
      %v2343 = vunpack.c.l.b16 %v2320
      %v2344 = vunpack.c.h.b16 %v2320
      %v2345 = vunpack.c.l.b16 %v2321
      %v2346 = vunpack.c.h.b16 %v2321
      %v2347 = vunpack.c.l.b16 %v2322
      %v2348 = vunpack.c.h.b16 %v2322
      %v2349 = vunpack.c.l.b16 %v2323
      %v2350 = vunpack.c.h.b16 %v2323
      %v2351 = vunpack.c.l.b16 %v2324
      %v2352 = vunpack.c.h.b16 %v2324
      %v2353 = vunpack.c.l.b16 %v2325
      %v2354 = vunpack.c.h.b16 %v2325
      %v2355 = vunpack.c.l.b16 %v2326
      %v2356 = vunpack.c.h.b16 %v2326
      %v2357 = vpack.c.b16 %v2337, %v2337
      %v2358 = vpack.c.b16 %v2338, %v2338
      %v2359 = vpack.c.b16 %v2339, %v2339
      %v2360 = vpack.c.b16 %v2340, %v2340
      %v2361 = vpack.c.b16 %v2341, %v2341
      %v2362 = vpack.c.b16 %v2342, %v2342
      %v2363 = vpack.c.b16 %v2343, %v2343
      %v2364 = vpack.c.b16 %v2344, %v2344
      %v2365 = vpack.c.b16 %v2345, %v2345
      %v2366 = vpack.c.b16 %v2346, %v2346
      %v2367 = vpack.c.b16 %v2347, %v2347
      %v2368 = vpack.c.b16 %v2348, %v2348
      %v2369 = vpack.c.b16 %v2349, %v2349
      %v2370 = vpack.c.b16 %v2350, %v2350
      %v2371 = vpack.c.b16 %v2351, %v2351
      %v2372 = vpack.c.b16 %v2352, %v2352
      %v2373 = vpack.c.b16 %v2353, %v2353
      %v2374 = vpack.c.b16 %v2354, %v2354
      %v2375 = vpack.c.b16 %v2355, %v2355
      %v2376 = vpack.c.b16 %v2356, %v2356
      %vm2377 = vsmask.f32 4368
      %vm2378 = vmor %vm2253, %vm2377
      %v2380 = vshrl.u32 %v2357, 16
      %v2382 = vrot.slane %v2380, 7
      %v2383 = vshll.u32 %v2357, 16
      %v2385 = vor.u32 %v2382, %v2383
      %v2386 = vrot.slane %v2382, 4
      %v2388 = vshrl.u32 %v2358, 16
      %v2390 = vrot.slane %v2388, 7
      %v2391 = vshll.u32 %v2358, 16
      %v2393 = vor.u32 %v2390, %v2391
      %v2394 = vsel %vm2378, %v2386, %v2393
      %v2395 = vrot.slane %v2390, 4
      %v2397 = vshrl.u32 %v2359, 16
      %v2399 = vrot.slane %v2397, 7
      %v2400 = vshll.u32 %v2359, 16
      %v2402 = vor.u32 %v2399, %v2400
      %v2403 = vrot.slane %v2399, 4
      %v2405 = vshrl.u32 %v2360, 16
      %v2407 = vrot.slane %v2405, 7
      %v2408 = vshll.u32 %v2360, 16
      %v2410 = vor.u32 %v2407, %v2408
      %v2411 = vsel %vm2378, %v2403, %v2410
      %v2412 = vrot.slane %v2407, 4
      %v2414 = vshrl.u32 %v2361, 16
      %v2416 = vrot.slane %v2414, 7
      %v2417 = vshll.u32 %v2361, 16
      %v2419 = vor.u32 %v2416, %v2417
      %v2420 = vrot.slane %v2416, 4
      %v2422 = vshrl.u32 %v2362, 16
      %v2424 = vrot.slane %v2422, 7
      %v2425 = vshll.u32 %v2362, 16
      %v2427 = vor.u32 %v2424, %v2425
      %v2428 = vsel %vm2378, %v2420, %v2427
      %v2429 = vrot.slane %v2424, 4
      %v2431 = vshrl.u32 %v2363, 16
      %v2433 = vrot.slane %v2431, 7
      %v2434 = vshll.u32 %v2363, 16
      %v2436 = vor.u32 %v2433, %v2434
      %v2437 = vrot.slane %v2433, 4
      %v2439 = vshrl.u32 %v2364, 16
      %v2441 = vrot.slane %v2439, 7
      %v2442 = vshll.u32 %v2364, 16
      %v2444 = vor.u32 %v2441, %v2442
      %v2445 = vsel %vm2378, %v2437, %v2444
      %v2446 = vrot.slane %v2441, 4
      %v2448 = vshrl.u32 %v2365, 16
      %v2450 = vrot.slane %v2448, 7
      %v2451 = vshll.u32 %v2365, 16
      %v2453 = vor.u32 %v2450, %v2451
      %v2454 = vrot.slane %v2450, 4
      %v2456 = vshrl.u32 %v2366, 16
      %v2458 = vrot.slane %v2456, 7
      %v2459 = vshll.u32 %v2366, 16
      %v2461 = vor.u32 %v2458, %v2459
      %v2462 = vsel %vm2378, %v2454, %v2461
      %v2463 = vrot.slane %v2458, 4
      %v2465 = vshrl.u32 %v2367, 16
      %v2467 = vrot.slane %v2465, 7
      %v2468 = vshll.u32 %v2367, 16
      %v2470 = vor.u32 %v2467, %v2468
      %v2471 = vrot.slane %v2467, 4
      %v2473 = vshrl.u32 %v2368, 16
      %v2475 = vrot.slane %v2473, 7
      %v2476 = vshll.u32 %v2368, 16
      %v2478 = vor.u32 %v2475, %v2476
      %v2479 = vsel %vm2378, %v2471, %v2478
      %v2480 = vrot.slane %v2475, 4
      %v2482 = vshrl.u32 %v2369, 16
      %v2484 = vrot.slane %v2482, 7
      %v2485 = vshll.u32 %v2369, 16
      %v2487 = vor.u32 %v2484, %v2485
      %v2488 = vrot.slane %v2484, 4
      %v2490 = vshrl.u32 %v2370, 16
      %v2492 = vrot.slane %v2490, 7
      %v2493 = vshll.u32 %v2370, 16
      %v2495 = vor.u32 %v2492, %v2493
      %v2496 = vsel %vm2378, %v2488, %v2495
      %v2497 = vrot.slane %v2492, 4
      %v2499 = vshrl.u32 %v2371, 16
      %v2501 = vrot.slane %v2499, 7
      %v2502 = vshll.u32 %v2371, 16
      %v2504 = vor.u32 %v2501, %v2502
      %v2505 = vrot.slane %v2501, 4
      %v2507 = vshrl.u32 %v2372, 16
      %v2509 = vrot.slane %v2507, 7
      %v2510 = vshll.u32 %v2372, 16
      %v2512 = vor.u32 %v2509, %v2510
      %v2513 = vsel %vm2378, %v2505, %v2512
      %v2514 = vrot.slane %v2509, 4
      %v2516 = vshrl.u32 %v2373, 16
      %v2518 = vrot.slane %v2516, 7
      %v2519 = vshll.u32 %v2373, 16
      %v2521 = vor.u32 %v2518, %v2519
      %v2522 = vrot.slane %v2518, 4
      %v2524 = vshrl.u32 %v2374, 16
      %v2526 = vrot.slane %v2524, 7
      %v2527 = vshll.u32 %v2374, 16
      %v2529 = vor.u32 %v2526, %v2527
      %v2530 = vsel %vm2378, %v2522, %v2529
      %v2531 = vrot.slane %v2526, 4
      %v2533 = vshrl.u32 %v2375, 16
      %v2535 = vrot.slane %v2533, 7
      %v2536 = vshll.u32 %v2375, 16
      %v2538 = vor.u32 %v2535, %v2536
      %v2539 = vrot.slane %v2535, 4
      %v2541 = vshrl.u32 %v2376, 16
      %v2543 = vrot.slane %v2541, 7
      %v2544 = vshll.u32 %v2376, 16
      %v2546 = vor.u32 %v2543, %v2544
      %v2547 = vsel %vm2378, %v2539, %v2546
      %v2548 = vrot.slane %v2543, 4
      %vm2579 = vcmask 27648
      %vm2580 = vmand %vm2579, %vm2285
      %v2581 = vld [vmem:[#allocation2] sm:$0xf]
      %v2582 = vsel %vm2580, %v2385, %v2581
      %2583 = vst [vmem:[#allocation2] sm:$0xf] %v2582
      %vm2584 = vcmask 27648
      %2585 = vst.msk [vmem:[#allocation2 + $0x4] sm:$0xf] %vm2584, %v2394
      %v2586 = vld [vmem:[#allocation2 + $0x8] sm:$0x1]
      %v2587 = vsel %vm2254, %v2395, %v2586
      %2588 = vst [vmem:[#allocation2 + $0x8] sm:$0x1] %v2587
      %v2589 = vld [vmem:[#allocation2 + $0xc] sm:$0xf]
      %v2590 = vsel %vm2580, %v2402, %v2589
      %2591 = vst [vmem:[#allocation2 + $0xc] sm:$0xf] %v2590
      %2592 = vst.msk [vmem:[#allocation2 + $0x10] sm:$0xf] %vm2584, %v2411
      %v2593 = vld [vmem:[#allocation2 + $0x14] sm:$0x1]
      %v2594 = vsel %vm2254, %v2412, %v2593
      %2595 = vst [vmem:[#allocation2 + $0x14] sm:$0x1] %v2594
      %v2596 = vld [vmem:[#allocation2 + $0x18] sm:$0xf]
      %v2597 = vsel %vm2580, %v2419, %v2596
      %2598 = vst [vmem:[#allocation2 + $0x18] sm:$0xf] %v2597
      %2599 = vst.msk [vmem:[#allocation2 + $0x1c] sm:$0xf] %vm2584, %v2428
      %v2600 = vld [vmem:[#allocation2 + $0x20] sm:$0x1]
      %v2601 = vsel %vm2254, %v2429, %v2600
      %2602 = vst [vmem:[#allocation2 + $0x20] sm:$0x1] %v2601
      %v2603 = vld [vmem:[#allocation2 + $0x24] sm:$0xf]
      %v2604 = vsel %vm2580, %v2436, %v2603
      %2605 = vst [vmem:[#allocation2 + $0x24] sm:$0xf] %v2604
      %2606 = vst.msk [vmem:[#allocation2 + $0x28] sm:$0xf] %vm2584, %v2445
      %v2607 = vld [vmem:[#allocation2 + $0x2c] sm:$0x1]
      %v2608 = vsel %vm2254, %v2446, %v2607
      %2609 = vst [vmem:[#allocation2 + $0x2c] sm:$0x1] %v2608
      %v2610 = vld [vmem:[#allocation2 + $0x30] sm:$0xf]
      %v2611 = vsel %vm2580, %v2453, %v2610
      %2612 = vst [vmem:[#allocation2 + $0x30] sm:$0xf] %v2611
      %2613 = vst.msk [vmem:[#allocation2 + $0x34] sm:$0xf] %vm2584, %v2462
      %v2614 = vld [vmem:[#allocation2 + $0x38] sm:$0x1]
      %v2615 = vsel %vm2254, %v2463, %v2614
      %2616 = vst [vmem:[#allocation2 + $0x38] sm:$0x1] %v2615
      %v2617 = vld [vmem:[#allocation2 + $0x3c] sm:$0xf]
      %v2618 = vsel %vm2580, %v2470, %v2617
      %2619 = vst [vmem:[#allocation2 + $0x3c] sm:$0xf] %v2618
      %2620 = vst.msk [vmem:[#allocation2 + $0x40] sm:$0xf] %vm2584, %v2479
      %v2621 = vld [vmem:[#allocation2 + $0x44] sm:$0x1]
      %v2622 = vsel %vm2254, %v2480, %v2621
      %2623 = vst [vmem:[#allocation2 + $0x44] sm:$0x1] %v2622
      %v2624 = vld [vmem:[#allocation2 + $0x48] sm:$0xf]
      %v2625 = vsel %vm2580, %v2487, %v2624
      %2626 = vst [vmem:[#allocation2 + $0x48] sm:$0xf] %v2625
      %2627 = vst.msk [vmem:[#allocation2 + $0x4c] sm:$0xf] %vm2584, %v2496
      %v2628 = vld [vmem:[#allocation2 + $0x50] sm:$0x1]
      %v2629 = vsel %vm2254, %v2497, %v2628
      %2630 = vst [vmem:[#allocation2 + $0x50] sm:$0x1] %v2629
      %v2631 = vld [vmem:[#allocation2 + $0x54] sm:$0xf]
      %v2632 = vsel %vm2580, %v2504, %v2631
      %2633 = vst [vmem:[#allocation2 + $0x54] sm:$0xf] %v2632
      %2634 = vst.msk [vmem:[#allocation2 + $0x58] sm:$0xf] %vm2584, %v2513
      %v2635 = vld [vmem:[#allocation2 + $0x5c] sm:$0x1]
      %v2636 = vsel %vm2254, %v2514, %v2635
      %2637 = vst [vmem:[#allocation2 + $0x5c] sm:$0x1] %v2636
      %v2638 = vld [vmem:[#allocation2 + $0x60] sm:$0xf]
      %v2639 = vsel %vm2580, %v2521, %v2638
      %2640 = vst [vmem:[#allocation2 + $0x60] sm:$0xf] %v2639
      %2641 = vst.msk [vmem:[#allocation2 + $0x64] sm:$0xf] %vm2584, %v2530
      %v2642 = vld [vmem:[#allocation2 + $0x68] sm:$0x1]
      %v2643 = vsel %vm2254, %v2531, %v2642
      %2644 = vst [vmem:[#allocation2 + $0x68] sm:$0x1] %v2643
      %v2645 = vld [vmem:[#allocation2 + $0x6c] sm:$0xf]
      %v2646 = vsel %vm2580, %v2538, %v2645
      %2647 = vst [vmem:[#allocation2 + $0x6c] sm:$0xf] %v2646
      %2648 = vst.msk [vmem:[#allocation2 + $0x70] sm:$0xf] %vm2584, %v2547
      %v2649 = vld [vmem:[#allocation2 + $0x74] sm:$0x1]
      %v2650 = vsel %vm2254, %v2548, %v2649
      %2651 = vst [vmem:[#allocation2 + $0x74] sm:$0x1] %v2650
      %v2652 = vld [vmem:[#allocation2] sm:$0xf]
      %v2653 = vld [vmem:[#allocation2 + $0x4] sm:$0xf]
      %v2654 = vld [vmem:[#allocation2 + $0xc] sm:$0xf]
      %v2655 = vld [vmem:[#allocation2 + $0x10] sm:$0xf]
      %v2656 = vld [vmem:[#allocation2 + $0x18] sm:$0xf]
      %v2657 = vld [vmem:[#allocation2 + $0x1c] sm:$0xf]
      %v2658 = vld [vmem:[#allocation2 + $0x24] sm:$0xf]
      %v2659 = vld [vmem:[#allocation2 + $0x28] sm:$0xf]
      %v2660 = vld [vmem:[#allocation2 + $0x30] sm:$0xf]
      %v2661 = vld [vmem:[#allocation2 + $0x34] sm:$0xf]
      %v2662 = vld [vmem:[#allocation2 + $0x3c] sm:$0xf]
      %v2663 = vld [vmem:[#allocation2 + $0x40] sm:$0xf]
      %v2664 = vld [vmem:[#allocation2 + $0x48] sm:$0xf]
      %v2665 = vld [vmem:[#allocation2 + $0x4c] sm:$0xf]
      %v2666 = vld [vmem:[#allocation2 + $0x54] sm:$0xf]
      %v2667 = vld [vmem:[#allocation2 + $0x58] sm:$0xf]
      %v2668 = vld [vmem:[%s2] sm:$0x3]
      %v2669 = vld [vmem:[#allocation2 + $0x8] sm:$0x1]
      %v2670 = vld [vmem:[#allocation2 + $0x14] sm:$0x1]
      %v2671 = vld [vmem:[#allocation2 + $0x20] sm:$0x1]
      %v2672 = vld [vmem:[#allocation2 + $0x2c] sm:$0x1]
      %v2673 = vld [vmem:[#allocation2 + $0x38] sm:$0x1]
      %v2674 = vld [vmem:[#allocation2 + $0x44] sm:$0x1]
      %v2675 = vld [vmem:[#allocation2 + $0x50] sm:$0x1]
      %v2676 = vld [vmem:[#allocation2 + $0x5c] sm:$0x1]
      %v2678 = vshrl.u32 %v2652, 16
      %v2680 = vrot.slane %v2678, 4
      %v2681 = vshll.u32 %v2652, 16
      %v2683 = vrot.slane %v2681, 5
      %v2684 = vor.u32 %v2680, %v2683
      %v2685 = vrot.slane %v2684, 4
      %v2687 = vshll.u32 %v2653, 16
      %v2689 = vrot.slane %v2687, 5
      %v2690 = vsel %vm294, %v2685, %v2689
      %v2691 = vshrl.u32 %v2653, 16
      %v2693 = vrot.slane %v2691, 4
      %v2694 = vor.u32 %v2693, %v2689
      %v2695 = vrot.slane %v2694, 4
      %v2697 = vshll.u32 %v2669, 16
      %v2699 = vrot.slane %v2697, 5
      %v2700 = vsel %vm294, %v2695, %v2699
      %v2702 = vshrl.u32 %v2654, 16
      %v2704 = vrot.slane %v2702, 4
      %v2705 = vshll.u32 %v2654, 16
      %v2707 = vrot.slane %v2705, 5
      %v2708 = vor.u32 %v2704, %v2707
      %v2709 = vrot.slane %v2708, 4
      %v2711 = vshll.u32 %v2655, 16
      %v2713 = vrot.slane %v2711, 5
      %v2714 = vsel %vm294, %v2709, %v2713
      %v2715 = vshrl.u32 %v2655, 16
      %v2717 = vrot.slane %v2715, 4
      %v2718 = vor.u32 %v2717, %v2713
      %v2719 = vrot.slane %v2718, 4
      %v2721 = vshll.u32 %v2670, 16
      %v2723 = vrot.slane %v2721, 5
      %v2724 = vsel %vm294, %v2719, %v2723
      %v2726 = vshrl.u32 %v2656, 16
      %v2728 = vrot.slane %v2726, 4
      %v2729 = vshll.u32 %v2656, 16
      %v2731 = vrot.slane %v2729, 5
      %v2732 = vor.u32 %v2728, %v2731
      %v2733 = vrot.slane %v2732, 4
      %v2735 = vshll.u32 %v2657, 16
      %v2737 = vrot.slane %v2735, 5
      %v2738 = vsel %vm294, %v2733, %v2737
      %v2739 = vshrl.u32 %v2657, 16
      %v2741 = vrot.slane %v2739, 4
      %v2742 = vor.u32 %v2741, %v2737
      %v2743 = vrot.slane %v2742, 4
      %v2745 = vshll.u32 %v2671, 16
      %v2747 = vrot.slane %v2745, 5
      %v2748 = vsel %vm294, %v2743, %v2747
      %v2750 = vshrl.u32 %v2658, 16
      %v2752 = vrot.slane %v2750, 4
      %v2753 = vshll.u32 %v2658, 16
      %v2755 = vrot.slane %v2753, 5
      %v2756 = vor.u32 %v2752, %v2755
      %v2757 = vrot.slane %v2756, 4
      %v2759 = vshll.u32 %v2659, 16
      %v2761 = vrot.slane %v2759, 5
      %v2762 = vsel %vm294, %v2757, %v2761
      %v2763 = vshrl.u32 %v2659, 16
      %v2765 = vrot.slane %v2763, 4
      %v2766 = vor.u32 %v2765, %v2761
      %v2767 = vrot.slane %v2766, 4
      %v2769 = vshll.u32 %v2672, 16
      %v2771 = vrot.slane %v2769, 5
      %v2772 = vsel %vm294, %v2767, %v2771
      %v2774 = vshrl.u32 %v2660, 16
      %v2776 = vrot.slane %v2774, 4
      %v2777 = vshll.u32 %v2660, 16
      %v2779 = vrot.slane %v2777, 5
      %v2780 = vor.u32 %v2776, %v2779
      %v2781 = vrot.slane %v2780, 4
      %v2783 = vshll.u32 %v2661, 16
      %v2785 = vrot.slane %v2783, 5
      %v2786 = vsel %vm294, %v2781, %v2785
      %v2787 = vshrl.u32 %v2661, 16
      %v2789 = vrot.slane %v2787, 4
      %v2790 = vor.u32 %v2789, %v2785
      %v2791 = vrot.slane %v2790, 4
      %v2793 = vshll.u32 %v2673, 16
      %v2795 = vrot.slane %v2793, 5
      %v2796 = vsel %vm294, %v2791, %v2795
      %v2798 = vshrl.u32 %v2662, 16
      %v2800 = vrot.slane %v2798, 4
      %v2801 = vshll.u32 %v2662, 16
      %v2803 = vrot.slane %v2801, 5
      %v2804 = vor.u32 %v2800, %v2803
      %v2805 = vrot.slane %v2804, 4
      %v2807 = vshll.u32 %v2663, 16
      %v2809 = vrot.slane %v2807, 5
      %v2810 = vsel %vm294, %v2805, %v2809
      %v2811 = vshrl.u32 %v2663, 16
      %v2813 = vrot.slane %v2811, 4
      %v2814 = vor.u32 %v2813, %v2809
      %v2815 = vrot.slane %v2814, 4
      %v2817 = vshll.u32 %v2674, 16
      %v2819 = vrot.slane %v2817, 5
      %v2820 = vsel %vm294, %v2815, %v2819
      %v2822 = vshrl.u32 %v2664, 16
      %v2824 = vrot.slane %v2822, 4
      %v2825 = vshll.u32 %v2664, 16
      %v2827 = vrot.slane %v2825, 5
      %v2828 = vor.u32 %v2824, %v2827
      %v2829 = vrot.slane %v2828, 4
      %v2831 = vshll.u32 %v2665, 16
      %v2833 = vrot.slane %v2831, 5
      %v2834 = vsel %vm294, %v2829, %v2833
      %v2835 = vshrl.u32 %v2665, 16
      %v2837 = vrot.slane %v2835, 4
      %v2838 = vor.u32 %v2837, %v2833
      %v2839 = vrot.slane %v2838, 4
      %v2841 = vshll.u32 %v2675, 16
      %v2843 = vrot.slane %v2841, 5
      %v2844 = vsel %vm294, %v2839, %v2843
      %v2846 = vshrl.u32 %v2666, 16
      %v2848 = vrot.slane %v2846, 4
      %v2849 = vshll.u32 %v2666, 16
      %v2851 = vrot.slane %v2849, 5
      %v2852 = vor.u32 %v2848, %v2851
      %v2853 = vrot.slane %v2852, 4
      %v2855 = vshll.u32 %v2667, 16
      %v2857 = vrot.slane %v2855, 5
      %v2858 = vsel %vm294, %v2853, %v2857
      %v2859 = vshrl.u32 %v2667, 16
      %v2861 = vrot.slane %v2859, 4
      %v2862 = vor.u32 %v2861, %v2857
      %v2863 = vrot.slane %v2862, 4
      %v2865 = vshll.u32 %v2676, 16
      %v2867 = vrot.slane %v2865, 5
      %v2868 = vsel %vm294, %v2863, %v2867
      %s2869 = scalar_lea.vmem %s2, 2
      %v2870 = vld [vmem:[%s2869] sm:$0x3]
      %v2871 = vunpack.c.l.b16 %v2690
      %v2872 = vunpack.c.l.b16 %v2700
      %v2873 = vunpack.c.l.b16 %v2714
      %v2874 = vunpack.c.l.b16 %v2724
      %v2875 = vunpack.c.l.b16 %v2738
      %v2876 = vunpack.c.l.b16 %v2748
      %v2877 = vunpack.c.l.b16 %v2762
      %v2878 = vunpack.c.l.b16 %v2772
      %v2879 = vunpack.c.l.b16 %v2786
      %v2880 = vunpack.c.l.b16 %v2796
      %v2881 = vunpack.c.l.b16 %v2810
      %v2882 = vunpack.c.l.b16 %v2820
      %v2883 = vunpack.c.l.b16 %v2834
      %v2884 = vunpack.c.l.b16 %v2844
      %v2885 = vunpack.c.l.b16 %v2858
      %v2886 = vunpack.c.l.b16 %v2868
      %v2887 = vpack.c.b16 %v2872, %v2871
      %v2888 = vpack.c.b16 %v2874, %v2873
      %v2889 = vpack.c.b16 %v2876, %v2875
      %v2890 = vpack.c.b16 %v2878, %v2877
      %v2891 = vpack.c.b16 %v2880, %v2879
      %v2892 = vpack.c.b16 %v2882, %v2881
      %v2893 = vpack.c.b16 %v2884, %v2883
      %v2894 = vpack.c.b16 %v2886, %v2885
      %v2896 = vsel %vm567, %v2887, 0
      %v2899 = vsel %vm567, %v2888, 0
      %v2902 = vsel %vm567, %v2889, 0
      %v2905 = vsel %vm567, %v2890, 0
      %v2908 = vsel %vm567, %v2891, 0
      %v2911 = vsel %vm567, %v2892, 0
      %v2914 = vsel %vm567, %v2893, 0
      %v2917 = vsel %vm567, %v2894, 0
      %v2920 = vsel %vm598, %v2870, 0
      %2922 = vmatprep.subr.bf16.mxu0 0
      %2923 = vmatpush1.bf16.msra.mxu0 %v2920
      %2924 = vmatprep.subr.bf16.mxu0 0
      %2925 = vmatpush1.bf16.msra.mxu0 0
      %2926 = vmatprep.subr.bf16.mxu0 0
      %2927 = vmatpush1.bf16.msra.mxu0 0
      %2928 = vmatprep.subr.bf16.mxu0 0
      %2929 = vmatpush1.bf16.msra.mxu0 0
      %2930 = vmatprep.subr.bf16.mxu0 0
      %2931 = vmatpush1.bf16.msra.mxu0 0
      %2932 = vmatprep.subr.bf16.mxu0 0
      %2933 = vmatpush1.bf16.msra.mxu0 0
      %2934 = vmatprep.subr.bf16.mxu0 0
      %2935 = vmatpush1.bf16.msra.mxu0 0
      %2936 = vmatprep.subr.bf16.mxu0 0
      %2937 = vmatpush1.bf16.msra.mxu0 0
      %2938 = vmatprep.subr.bf16.mxu0 0
      %2939 = vmatpush1.bf16.msra.mxu0 0
      %2940 = vmatprep.subr.bf16.mxu0 0
      %2941 = vmatpush1.bf16.msra.mxu0 0
      %2942 = vmatprep.subr.bf16.mxu0 0
      %2943 = vmatpush1.bf16.msra.mxu0 0
      %2944 = vmatprep.subr.bf16.mxu0 0
      %2945 = vmatpush1.bf16.msra.mxu0 0
      %2946 = vmatprep.subr.bf16.mxu0 0
      %2947 = vmatpush1.bf16.msra.mxu0 0
      %2948 = vmatprep.subr.bf16.mxu0 0
      %2949 = vmatpush1.bf16.msra.mxu0 0
      %2950 = vmatprep.subr.bf16.mxu0 0
      %2951 = vmatpush1.bf16.msra.mxu0 0
      %2952 = vmatprep.subr.bf16.mxu0 0
      %2953 = vmatpush1.bf16.msra.mxu0 0
      %2954 = vmatprep.mubr.bf16.mxu0 0
      %2955 = vmatmul.mubr.bf16.gmra.mrb[0].mxu0 %v2896
      %v2956 = vpop.f32.mrb[0].mxu0
      %v2957 = vadd.f32 0.0, %v2956
      %v2958 = vpop.f32.mrb[0].mxu0
      %v2959 = vpop.f32.mrb[0].mxu0
      %v2960 = vadd.f32 0.0, %v2959
      %v2961 = vpop.f32.mrb[0].mxu0
      %2962 = vmatprep.mubr.bf16.mxu0 0
      %2963 = vmatmul.mubr.bf16.gmra.mrb[0].mxu0 %v2899
      %v2964 = vpop.f32.mrb[0].mxu0
      %v2965 = vadd.f32 0.0, %v2964
      %v2966 = vpop.f32.mrb[0].mxu0
      %v2967 = vpop.f32.mrb[0].mxu0
      %v2968 = vadd.f32 0.0, %v2967
      %v2969 = vpop.f32.mrb[0].mxu0
      %2970 = vmatprep.mubr.bf16.mxu0 0
      %2971 = vmatmul.mubr.bf16.gmra.mrb[0].mxu0 %v2902
      %v2972 = vpop.f32.mrb[0].mxu0
      %v2973 = vadd.f32 0.0, %v2972
      %v2974 = vpop.f32.mrb[0].mxu0
      %v2975 = vpop.f32.mrb[0].mxu0
      %v2976 = vadd.f32 0.0, %v2975
      %v2977 = vpop.f32.mrb[0].mxu0
      %2978 = vmatprep.mubr.bf16.mxu0 0
      %2979 = vmatmul.mubr.bf16.gmra.mrb[0].mxu0 %v2905
      %v2980 = vpop.f32.mrb[0].mxu0
      %v2981 = vadd.f32 0.0, %v2980
      %v2982 = vpop.f32.mrb[0].mxu0
      %v2983 = vpop.f32.mrb[0].mxu0
      %v2984 = vadd.f32 0.0, %v2983
      %v2985 = vpop.f32.mrb[0].mxu0
      %2986 = vmatprep.mubr.bf16.mxu0 0
      %2987 = vmatmul.mubr.bf16.gmra.mrb[0].mxu0 %v2908
      %v2988 = vpop.f32.mrb[0].mxu0
      %v2989 = vadd.f32 0.0, %v2988
      %v2990 = vpop.f32.mrb[0].mxu0
      %v2991 = vpop.f32.mrb[0].mxu0
      %v2992 = vadd.f32 0.0, %v2991
      %v2993 = vpop.f32.mrb[0].mxu0
      %2994 = vmatprep.mubr.bf16.mxu0 0
      %2995 = vmatmul.mubr.bf16.gmra.mrb[0].mxu0 %v2911
      %v2996 = vpop.f32.mrb[0].mxu0
      %v2997 = vadd.f32 0.0, %v2996
      %v2998 = vpop.f32.mrb[0].mxu0
      %v2999 = vpop.f32.mrb[0].mxu0
      %v3000 = vadd.f32 0.0, %v2999
      %v3001 = vpop.f32.mrb[0].mxu0
      %3002 = vmatprep.mubr.bf16.mxu0 0
      %3003 = vmatmul.mubr.bf16.gmra.mrb[0].mxu0 %v2914
      %v3004 = vpop.f32.mrb[0].mxu0
      %v3005 = vadd.f32 0.0, %v3004
      %v3006 = vpop.f32.mrb[0].mxu0
      %v3007 = vpop.f32.mrb[0].mxu0
      %v3008 = vadd.f32 0.0, %v3007
      %v3009 = vpop.f32.mrb[0].mxu0
      %3010 = vmatprep.mubr.bf16.mxu0 0
      %3011 = vmatmul.mubr.bf16.gmra.mrb[0].mxu0 %v2917
      %v3012 = vpop.f32.mrb[0].mxu0
      %v3013 = vadd.f32 0.0, %v3012
      %v3014 = vpop.f32.mrb[0].mxu0
      %v3015 = vpop.f32.mrb[0].mxu0
      %v3016 = vadd.f32 0.0, %v3015
      %v3017 = vpop.f32.mrb[0].mxu0
      %3018 = vdwg.mxu0
      %v3035 = vunpack.c.l.b16 %v2652
      %v3036 = vunpack.c.l.b16 %v2653
      %v3037 = vunpack.c.l.b16 %v2654
      %v3038 = vunpack.c.l.b16 %v2655
      %v3039 = vunpack.c.l.b16 %v2656
      %v3040 = vunpack.c.l.b16 %v2657
      %v3041 = vunpack.c.l.b16 %v2658
      %v3042 = vunpack.c.l.b16 %v2659
      %v3043 = vunpack.c.l.b16 %v2660
      %v3044 = vunpack.c.l.b16 %v2661
      %v3045 = vunpack.c.l.b16 %v2662
      %v3046 = vunpack.c.l.b16 %v2663
      %v3047 = vunpack.c.l.b16 %v2664
      %v3048 = vunpack.c.l.b16 %v2665
      %v3049 = vunpack.c.l.b16 %v2666
      %v3050 = vunpack.c.l.b16 %v2667
      %v3051 = vpack.c.b16 %v3036, %v3035
      %v3052 = vpack.c.b16 %v3038, %v3037
      %v3053 = vpack.c.b16 %v3040, %v3039
      %v3054 = vpack.c.b16 %v3042, %v3041
      %v3055 = vpack.c.b16 %v3044, %v3043
      %v3056 = vpack.c.b16 %v3046, %v3045
      %v3057 = vpack.c.b16 %v3048, %v3047
      %v3058 = vpack.c.b16 %v3050, %v3049
      %v3060 = vsel %vm567, %v3051, 0
      %v3063 = vsel %vm567, %v3052, 0
      %v3066 = vsel %vm567, %v3053, 0
      %v3069 = vsel %vm567, %v3054, 0
      %v3072 = vsel %vm567, %v3055, 0
      %v3075 = vsel %vm567, %v3056, 0
      %v3078 = vsel %vm567, %v3057, 0
      %v3081 = vsel %vm567, %v3058, 0
      %v3084 = vsel %vm598, %v2668, 0
      %3086 = vmatprep.subr.bf16.mxu0 0
      %3087 = vmatpush1.bf16.msra.mxu0 %v3084
      %3088 = vmatprep.subr.bf16.mxu0 0
      %3089 = vmatpush1.bf16.msra.mxu0 0
      %3090 = vmatprep.subr.bf16.mxu0 0
      %3091 = vmatpush1.bf16.msra.mxu0 0
      %3092 = vmatprep.subr.bf16.mxu0 0
      %3093 = vmatpush1.bf16.msra.mxu0 0
      %3094 = vmatprep.subr.bf16.mxu0 0
      %3095 = vmatpush1.bf16.msra.mxu0 0
      %3096 = vmatprep.subr.bf16.mxu0 0
      %3097 = vmatpush1.bf16.msra.mxu0 0
      %3098 = vmatprep.subr.bf16.mxu0 0
      %3099 = vmatpush1.bf16.msra.mxu0 0
      %3100 = vmatprep.subr.bf16.mxu0 0
      %3101 = vmatpush1.bf16.msra.mxu0 0
      %3102 = vmatprep.subr.bf16.mxu0 0
      %3103 = vmatpush1.bf16.msra.mxu0 0
      %3104 = vmatprep.subr.bf16.mxu0 0
      %3105 = vmatpush1.bf16.msra.mxu0 0
      %3106 = vmatprep.subr.bf16.mxu0 0
      %3107 = vmatpush1.bf16.msra.mxu0 0
      %3108 = vmatprep.subr.bf16.mxu0 0
      %3109 = vmatpush1.bf16.msra.mxu0 0
      %3110 = vmatprep.subr.bf16.mxu0 0
      %3111 = vmatpush1.bf16.msra.mxu0 0
      %3112 = vmatprep.subr.bf16.mxu0 0
      %3113 = vmatpush1.bf16.msra.mxu0 0
      %3114 = vmatprep.subr.bf16.mxu0 0
      %3115 = vmatpush1.bf16.msra.mxu0 0
      %3116 = vmatprep.subr.bf16.mxu0 0
      %3117 = vmatpush1.bf16.msra.mxu0 0
      %3118 = vmatprep.mubr.bf16.mxu0 0
      %3119 = vmatmul.mubr.bf16.gmra.mrb[0].mxu0 %v3060
      %v3120 = vpop.f32.mrb[0].mxu0
      %v3121 = vadd.f32 %v2957, %v3120
      %v3122 = vpop.f32.mrb[0].mxu0
      %v3123 = vpop.f32.mrb[0].mxu0
      %v3124 = vadd.f32 %v2960, %v3123
      %v3125 = vpop.f32.mrb[0].mxu0
      %3126 = vmatprep.mubr.bf16.mxu0 0
      %3127 = vmatmul.mubr.bf16.gmra.mrb[0].mxu0 %v3063
      %v3128 = vpop.f32.mrb[0].mxu0
      %v3129 = vadd.f32 %v2965, %v3128
      %v3130 = vpop.f32.mrb[0].mxu0
      %v3131 = vpop.f32.mrb[0].mxu0
      %v3132 = vadd.f32 %v2968, %v3131
      %v3133 = vpop.f32.mrb[0].mxu0
      %3134 = vmatprep.mubr.bf16.mxu0 0
      %3135 = vmatmul.mubr.bf16.gmra.mrb[0].mxu0 %v3066
      %v3136 = vpop.f32.mrb[0].mxu0
      %v3137 = vadd.f32 %v2973, %v3136
      %v3138 = vpop.f32.mrb[0].mxu0
      %v3139 = vpop.f32.mrb[0].mxu0
      %v3140 = vadd.f32 %v2976, %v3139
      %v3141 = vpop.f32.mrb[0].mxu0
      %3142 = vmatprep.mubr.bf16.mxu0 0
      %3143 = vmatmul.mubr.bf16.gmra.mrb[0].mxu0 %v3069
      %v3144 = vpop.f32.mrb[0].mxu0
      %v3145 = vadd.f32 %v2981, %v3144
      %v3146 = vpop.f32.mrb[0].mxu0
      %v3147 = vpop.f32.mrb[0].mxu0
      %v3148 = vadd.f32 %v2984, %v3147
      %v3149 = vpop.f32.mrb[0].mxu0
      %3150 = vmatprep.mubr.bf16.mxu0 0
      %3151 = vmatmul.mubr.bf16.gmra.mrb[0].mxu0 %v3072
      %v3152 = vpop.f32.mrb[0].mxu0
      %v3153 = vadd.f32 %v2989, %v3152
      %v3154 = vpop.f32.mrb[0].mxu0
      %v3155 = vpop.f32.mrb[0].mxu0
      %v3156 = vadd.f32 %v2992, %v3155
      %v3157 = vpop.f32.mrb[0].mxu0
      %3158 = vmatprep.mubr.bf16.mxu0 0
      %3159 = vmatmul.mubr.bf16.gmra.mrb[0].mxu0 %v3075
      %v3160 = vpop.f32.mrb[0].mxu0
      %v3161 = vadd.f32 %v2997, %v3160
      %v3162 = vpop.f32.mrb[0].mxu0
      %v3163 = vpop.f32.mrb[0].mxu0
      %v3164 = vadd.f32 %v3000, %v3163
      %v3165 = vpop.f32.mrb[0].mxu0
      %3166 = vmatprep.mubr.bf16.mxu0 0
      %3167 = vmatmul.mubr.bf16.gmra.mrb[0].mxu0 %v3078
      %v3168 = vpop.f32.mrb[0].mxu0
      %v3169 = vadd.f32 %v3005, %v3168
      %v3170 = vpop.f32.mrb[0].mxu0
      %v3171 = vpop.f32.mrb[0].mxu0
      %v3172 = vadd.f32 %v3008, %v3171
      %v3173 = vpop.f32.mrb[0].mxu0
      %3174 = vmatprep.mubr.bf16.mxu0 0
      %3175 = vmatmul.mubr.bf16.gmra.mrb[0].mxu0 %v3081
      %v3176 = vpop.f32.mrb[0].mxu0
      %v3177 = vadd.f32 %v3013, %v3176
      %v3178 = vpop.f32.mrb[0].mxu0
      %v3179 = vpop.f32.mrb[0].mxu0
      %v3180 = vadd.f32 %v3016, %v3179
      %v3181 = vpop.f32.mrb[0].mxu0
      %3182 = vdwg.mxu0
      %v3183 = vld [vmem:[#allocation2] sm:$0xe]
      %v3184 = vld [vmem:[#allocation2 + $0xc] sm:$0xe]
      %v3185 = vld [vmem:[#allocation2 + $0x18] sm:$0xe]
      %v3186 = vld [vmem:[#allocation2 + $0x24] sm:$0xe]
      %v3187 = vld [vmem:[#allocation2 + $0x30] sm:$0xe]
      %v3188 = vld [vmem:[#allocation2 + $0x3c] sm:$0xe]
      %v3189 = vld [vmem:[#allocation2 + $0x48] sm:$0xe]
      %v3190 = vld [vmem:[#allocation2 + $0x54] sm:$0xe]
      %v3207 = vrot.slane %v3183, 5
      %v3208 = vrot.slane %v3207, 4
      %v3209 = vrot.slane %v2653, 5
      %v3210 = vsel %vm923, %v3208, %v3209
      %v3211 = vrot.slane %v3209, 4
      %v3212 = vrot.slane %v2669, 5
      %v3213 = vsel %vm923, %v3211, %v3212
      %v3214 = vrot.slane %v3184, 5
      %v3215 = vrot.slane %v3214, 4
      %v3216 = vrot.slane %v2655, 5
      %v3217 = vsel %vm923, %v3215, %v3216
      %v3218 = vrot.slane %v3216, 4
      %v3219 = vrot.slane %v2670, 5
      %v3220 = vsel %vm923, %v3218, %v3219
      %v3221 = vrot.slane %v3185, 5
      %v3222 = vrot.slane %v3221, 4
      %v3223 = vrot.slane %v2657, 5
      %v3224 = vsel %vm923, %v3222, %v3223
      %v3225 = vrot.slane %v3223, 4
      %v3226 = vrot.slane %v2671, 5
      %v3227 = vsel %vm923, %v3225, %v3226
      %v3228 = vrot.slane %v3186, 5
      %v3229 = vrot.slane %v3228, 4
      %v3230 = vrot.slane %v2659, 5
      %v3231 = vsel %vm923, %v3229, %v3230
      %v3232 = vrot.slane %v3230, 4
      %v3233 = vrot.slane %v2672, 5
      %v3234 = vsel %vm923, %v3232, %v3233
      %v3235 = vrot.slane %v3187, 5
      %v3236 = vrot.slane %v3235, 4
      %v3237 = vrot.slane %v2661, 5
      %v3238 = vsel %vm923, %v3236, %v3237
      %v3239 = vrot.slane %v3237, 4
      %v3240 = vrot.slane %v2673, 5
      %v3241 = vsel %vm923, %v3239, %v3240
      %v3242 = vrot.slane %v3188, 5
      %v3243 = vrot.slane %v3242, 4
      %v3244 = vrot.slane %v2663, 5
      %v3245 = vsel %vm923, %v3243, %v3244
      %v3246 = vrot.slane %v3244, 4
      %v3247 = vrot.slane %v2674, 5
      %v3248 = vsel %vm923, %v3246, %v3247
      %v3249 = vrot.slane %v3189, 5
      %v3250 = vrot.slane %v3249, 4
      %v3251 = vrot.slane %v2665, 5
      %v3252 = vsel %vm923, %v3250, %v3251
      %v3253 = vrot.slane %v3251, 4
      %v3254 = vrot.slane %v2675, 5
      %v3255 = vsel %vm923, %v3253, %v3254
      %v3256 = vrot.slane %v3190, 5
      %v3257 = vrot.slane %v3256, 4
      %v3258 = vrot.slane %v2667, 5
      %v3259 = vsel %vm923, %v3257, %v3258
      %v3260 = vrot.slane %v3258, 4
      %v3261 = vrot.slane %v2676, 5
      %v3262 = vsel %vm923, %v3260, %v3261
      %s3263 = scalar_lea.vmem %s2, 4
      %v3264 = vld [vmem:[%s3263] sm:$0x3]
      %v3265 = vunpack.c.l.b16 %v3210
      %v3266 = vunpack.c.l.b16 %v3213
      %v3267 = vunpack.c.l.b16 %v3217
      %v3268 = vunpack.c.l.b16 %v3220
      %v3269 = vunpack.c.l.b16 %v3224
      %v3270 = vunpack.c.l.b16 %v3227
      %v3271 = vunpack.c.l.b16 %v3231
      %v3272 = vunpack.c.l.b16 %v3234
      %v3273 = vunpack.c.l.b16 %v3238
      %v3274 = vunpack.c.l.b16 %v3241
      %v3275 = vunpack.c.l.b16 %v3245
      %v3276 = vunpack.c.l.b16 %v3248
      %v3277 = vunpack.c.l.b16 %v3252
      %v3278 = vunpack.c.l.b16 %v3255
      %v3279 = vunpack.c.l.b16 %v3259
      %v3280 = vunpack.c.l.b16 %v3262
      %v3281 = vpack.c.b16 %v3266, %v3265
      %v3282 = vpack.c.b16 %v3268, %v3267
      %v3283 = vpack.c.b16 %v3270, %v3269
      %v3284 = vpack.c.b16 %v3272, %v3271
      %v3285 = vpack.c.b16 %v3274, %v3273
      %v3286 = vpack.c.b16 %v3276, %v3275
      %v3287 = vpack.c.b16 %v3278, %v3277
      %v3288 = vpack.c.b16 %v3280, %v3279
      %v3290 = vsel %vm567, %v3281, 0
      %v3293 = vsel %vm567, %v3282, 0
      %v3296 = vsel %vm567, %v3283, 0
      %v3299 = vsel %vm567, %v3284, 0
      %v3302 = vsel %vm567, %v3285, 0
      %v3305 = vsel %vm567, %v3286, 0
      %v3308 = vsel %vm567, %v3287, 0
      %v3311 = vsel %vm567, %v3288, 0
      %v3314 = vsel %vm598, %v3264, 0
      %3316 = vmatprep.subr.bf16.mxu0 0
      %3317 = vmatpush1.bf16.msra.mxu0 %v3314
      %3318 = vmatprep.subr.bf16.mxu0 0
      %3319 = vmatpush1.bf16.msra.mxu0 0
      %3320 = vmatprep.subr.bf16.mxu0 0
      %3321 = vmatpush1.bf16.msra.mxu0 0
      %3322 = vmatprep.subr.bf16.mxu0 0
      %3323 = vmatpush1.bf16.msra.mxu0 0
      %3324 = vmatprep.subr.bf16.mxu0 0
      %3325 = vmatpush1.bf16.msra.mxu0 0
      %3326 = vmatprep.subr.bf16.mxu0 0
      %3327 = vmatpush1.bf16.msra.mxu0 0
      %3328 = vmatprep.subr.bf16.mxu0 0
      %3329 = vmatpush1.bf16.msra.mxu0 0
      %3330 = vmatprep.subr.bf16.mxu0 0
      %3331 = vmatpush1.bf16.msra.mxu0 0
      %3332 = vmatprep.subr.bf16.mxu0 0
      %3333 = vmatpush1.bf16.msra.mxu0 0
      %3334 = vmatprep.subr.bf16.mxu0 0
      %3335 = vmatpush1.bf16.msra.mxu0 0
      %3336 = vmatprep.subr.bf16.mxu0 0
      %3337 = vmatpush1.bf16.msra.mxu0 0
      %3338 = vmatprep.subr.bf16.mxu0 0
      %3339 = vmatpush1.bf16.msra.mxu0 0
      %3340 = vmatprep.subr.bf16.mxu0 0
      %3341 = vmatpush1.bf16.msra.mxu0 0
      %3342 = vmatprep.subr.bf16.mxu0 0
      %3343 = vmatpush1.bf16.msra.mxu0 0
      %3344 = vmatprep.subr.bf16.mxu0 0
      %3345 = vmatpush1.bf16.msra.mxu0 0
      %3346 = vmatprep.subr.bf16.mxu0 0
      %3347 = vmatpush1.bf16.msra.mxu0 0
      %3348 = vmatprep.mubr.bf16.mxu0 0
      %3349 = vmatmul.mubr.bf16.gmra.mrb[0].mxu0 %v3290
      %v3350 = vpop.f32.mrb[0].mxu0
      %v3351 = vadd.f32 0.0, %v3350
      %v3352 = vpop.f32.mrb[0].mxu0
      %v3353 = vpop.f32.mrb[0].mxu0
      %v3354 = vadd.f32 0.0, %v3353
      %v3355 = vpop.f32.mrb[0].mxu0
      %3356 = vmatprep.mubr.bf16.mxu0 0
      %3357 = vmatmul.mubr.bf16.gmra.mrb[0].mxu0 %v3293
      %v3358 = vpop.f32.mrb[0].mxu0
      %v3359 = vadd.f32 0.0, %v3358
      %v3360 = vpop.f32.mrb[0].mxu0
      %v3361 = vpop.f32.mrb[0].mxu0
      %v3362 = vadd.f32 0.0, %v3361
      %v3363 = vpop.f32.mrb[0].mxu0
      %3364 = vmatprep.mubr.bf16.mxu0 0
      %3365 = vmatmul.mubr.bf16.gmra.mrb[0].mxu0 %v3296
      %v3366 = vpop.f32.mrb[0].mxu0
      %v3367 = vadd.f32 0.0, %v3366
      %v3368 = vpop.f32.mrb[0].mxu0
      %v3369 = vpop.f32.mrb[0].mxu0
      %v3370 = vadd.f32 0.0, %v3369
      %v3371 = vpop.f32.mrb[0].mxu0
      %3372 = vmatprep.mubr.bf16.mxu0 0
      %3373 = vmatmul.mubr.bf16.gmra.mrb[0].mxu0 %v3299
      %v3374 = vpop.f32.mrb[0].mxu0
      %v3375 = vadd.f32 0.0, %v3374
      %v3376 = vpop.f32.mrb[0].mxu0
      %v3377 = vpop.f32.mrb[0].mxu0
      %v3378 = vadd.f32 0.0, %v3377
      %v3379 = vpop.f32.mrb[0].mxu0
      %3380 = vmatprep.mubr.bf16.mxu0 0
      %3381 = vmatmul.mubr.bf16.gmra.mrb[0].mxu0 %v3302
      %v3382 = vpop.f32.mrb[0].mxu0
      %v3383 = vadd.f32 0.0, %v3382
      %v3384 = vpop.f32.mrb[0].mxu0
      %v3385 = vpop.f32.mrb[0].mxu0
      %v3386 = vadd.f32 0.0, %v3385
      %v3387 = vpop.f32.mrb[0].mxu0
      %3388 = vmatprep.mubr.bf16.mxu0 0
      %3389 = vmatmul.mubr.bf16.gmra.mrb[0].mxu0 %v3305
      %v3390 = vpop.f32.mrb[0].mxu0
      %v3391 = vadd.f32 0.0, %v3390
      %v3392 = vpop.f32.mrb[0].mxu0
      %v3393 = vpop.f32.mrb[0].mxu0
      %v3394 = vadd.f32 0.0, %v3393
      %v3395 = vpop.f32.mrb[0].mxu0
      %3396 = vmatprep.mubr.bf16.mxu0 0
      %3397 = vmatmul.mubr.bf16.gmra.mrb[0].mxu0 %v3308
      %v3398 = vpop.f32.mrb[0].mxu0
      %v3399 = vadd.f32 0.0, %v3398
      %v3400 = vpop.f32.mrb[0].mxu0
      %v3401 = vpop.f32.mrb[0].mxu0
      %v3402 = vadd.f32 0.0, %v3401
      %v3403 = vpop.f32.mrb[0].mxu0
      %3404 = vmatprep.mubr.bf16.mxu0 0
      %3405 = vmatmul.mubr.bf16.gmra.mrb[0].mxu0 %v3311
      %v3406 = vpop.f32.mrb[0].mxu0
      %v3407 = vadd.f32 0.0, %v3406
      %v3408 = vpop.f32.mrb[0].mxu0
      %v3409 = vpop.f32.mrb[0].mxu0
      %v3410 = vadd.f32 0.0, %v3409
      %v3411 = vpop.f32.mrb[0].mxu0
      %3412 = vdwg.mxu0
      %v3413 = vadd.f32 %v3121, %v3351
      %v3414 = vadd.f32 %v3124, %v3354
      %v3415 = vadd.f32 %v3129, %v3359
      %v3416 = vadd.f32 %v3132, %v3362
      %v3417 = vadd.f32 %v3137, %v3367
      %v3418 = vadd.f32 %v3140, %v3370
      %v3419 = vadd.f32 %v3145, %v3375
      %v3420 = vadd.f32 %v3148, %v3378
      %v3421 = vadd.f32 %v3153, %v3383
      %v3422 = vadd.f32 %v3156, %v3386
      %v3423 = vadd.f32 %v3161, %v3391
      %v3424 = vadd.f32 %v3164, %v3394
      %v3425 = vadd.f32 %v3169, %v3399
      %v3426 = vadd.f32 %v3172, %v3402
      %v3427 = vadd.f32 %v3177, %v3407
      %v3428 = vadd.f32 %v3180, %v3410
      %s3429 = scalar_lea.vmem [#allocation2], 12
      %v3430 = vld [vmem:[%s3429] sm:$0xf]
      %v3431 = vld [vmem:[%s3429 + $0x4] sm:$0xf]
      %v3432 = vld [vmem:[%s3429 + $0xc] sm:$0xf]
      %v3433 = vld [vmem:[%s3429 + $0x10] sm:$0xf]
      %v3434 = vld [vmem:[%s3429 + $0x18] sm:$0xf]
      %v3435 = vld [vmem:[%s3429 + $0x1c] sm:$0xf]
      %v3436 = vld [vmem:[%s3429 + $0x24] sm:$0xf]
      %v3437 = vld [vmem:[%s3429 + $0x28] sm:$0xf]
      %v3438 = vld [vmem:[%s3429 + $0x30] sm:$0xf]
      %v3439 = vld [vmem:[%s3429 + $0x34] sm:$0xf]
      %v3440 = vld [vmem:[%s3429 + $0x3c] sm:$0xf]
      %v3441 = vld [vmem:[%s3429 + $0x40] sm:$0xf]
      %v3442 = vld [vmem:[%s3429 + $0x48] sm:$0xf]
      %v3443 = vld [vmem:[%s3429 + $0x4c] sm:$0xf]
      %v3444 = vld [vmem:[%s3429 + $0x54] sm:$0xf]
      %v3445 = vld [vmem:[%s3429 + $0x58] sm:$0xf]
      %s3446 = scalar_lea.vmem %s2, 6
      %v3447 = vld [vmem:[%s3446] sm:$0x3]
      %v3464 = vunpack.c.l.b16 %v3430
      %v3465 = vunpack.c.l.b16 %v3431
      %v3466 = vunpack.c.l.b16 %v3432
      %v3467 = vunpack.c.l.b16 %v3433
      %v3468 = vunpack.c.l.b16 %v3434
      %v3469 = vunpack.c.l.b16 %v3435
      %v3470 = vunpack.c.l.b16 %v3436
      %v3471 = vunpack.c.l.b16 %v3437
      %v3472 = vunpack.c.l.b16 %v3438
      %v3473 = vunpack.c.l.b16 %v3439
      %v3474 = vunpack.c.l.b16 %v3440
      %v3475 = vunpack.c.l.b16 %v3441
      %v3476 = vunpack.c.l.b16 %v3442
      %v3477 = vunpack.c.l.b16 %v3443
      %v3478 = vunpack.c.l.b16 %v3444
      %v3479 = vunpack.c.l.b16 %v3445
      %v3480 = vpack.c.b16 %v3465, %v3464
      %v3481 = vpack.c.b16 %v3467, %v3466
      %v3482 = vpack.c.b16 %v3469, %v3468
      %v3483 = vpack.c.b16 %v3471, %v3470
      %v3484 = vpack.c.b16 %v3473, %v3472
      %v3485 = vpack.c.b16 %v3475, %v3474
      %v3486 = vpack.c.b16 %v3477, %v3476
      %v3487 = vpack.c.b16 %v3479, %v3478
      %v3489 = vsel %vm567, %v3480, 0
      %v3492 = vsel %vm567, %v3481, 0
      %v3495 = vsel %vm567, %v3482, 0
      %v3498 = vsel %vm567, %v3483, 0
      %v3501 = vsel %vm567, %v3484, 0
      %v3504 = vsel %vm567, %v3485, 0
      %v3507 = vsel %vm567, %v3486, 0
      %v3510 = vsel %vm567, %v3487, 0
      %v3513 = vsel %vm598, %v3447, 0
      %3515 = vmatprep.subr.bf16.mxu0 0
      %3516 = vmatpush1.bf16.msra.mxu0 %v3513
      %3517 = vmatprep.subr.bf16.mxu0 0
      %3518 = vmatpush1.bf16.msra.mxu0 0
      %3519 = vmatprep.subr.bf16.mxu0 0
      %3520 = vmatpush1.bf16.msra.mxu0 0
      %3521 = vmatprep.subr.bf16.mxu0 0
      %3522 = vmatpush1.bf16.msra.mxu0 0
      %3523 = vmatprep.subr.bf16.mxu0 0
      %3524 = vmatpush1.bf16.msra.mxu0 0
      %3525 = vmatprep.subr.bf16.mxu0 0
      %3526 = vmatpush1.bf16.msra.mxu0 0
      %3527 = vmatprep.subr.bf16.mxu0 0
      %3528 = vmatpush1.bf16.msra.mxu0 0
      %3529 = vmatprep.subr.bf16.mxu0 0
      %3530 = vmatpush1.bf16.msra.mxu0 0
      %3531 = vmatprep.subr.bf16.mxu0 0
      %3532 = vmatpush1.bf16.msra.mxu0 0
      %3533 = vmatprep.subr.bf16.mxu0 0
      %3534 = vmatpush1.bf16.msra.mxu0 0
      %3535 = vmatprep.subr.bf16.mxu0 0
      %3536 = vmatpush1.bf16.msra.mxu0 0
      %3537 = vmatprep.subr.bf16.mxu0 0
      %3538 = vmatpush1.bf16.msra.mxu0 0
      %3539 = vmatprep.subr.bf16.mxu0 0
      %3540 = vmatpush1.bf16.msra.mxu0 0
      %3541 = vmatprep.subr.bf16.mxu0 0
      %3542 = vmatpush1.bf16.msra.mxu0 0
      %3543 = vmatprep.subr.bf16.mxu0 0
      %3544 = vmatpush1.bf16.msra.mxu0 0
      %3545 = vmatprep.subr.bf16.mxu0 0
      %3546 = vmatpush1.bf16.msra.mxu0 0
      %3547 = vmatprep.mubr.bf16.mxu0 0
      %3548 = vmatmul.mubr.bf16.gmra.mrb[0].mxu0 %v3489
      %v3549 = vpop.f32.mrb[0].mxu0
      %v3550 = vadd.f32 0.0, %v3549
      %v3551 = vpop.f32.mrb[0].mxu0
      %v3552 = vpop.f32.mrb[0].mxu0
      %v3553 = vadd.f32 0.0, %v3552
      %v3554 = vpop.f32.mrb[0].mxu0
      %3555 = vmatprep.mubr.bf16.mxu0 0
      %3556 = vmatmul.mubr.bf16.gmra.mrb[0].mxu0 %v3492
      %v3557 = vpop.f32.mrb[0].mxu0
      %v3558 = vadd.f32 0.0, %v3557
      %v3559 = vpop.f32.mrb[0].mxu0
      %v3560 = vpop.f32.mrb[0].mxu0
      %v3561 = vadd.f32 0.0, %v3560
      %v3562 = vpop.f32.mrb[0].mxu0
      %3563 = vmatprep.mubr.bf16.mxu0 0
      %3564 = vmatmul.mubr.bf16.gmra.mrb[0].mxu0 %v3495
      %v3565 = vpop.f32.mrb[0].mxu0
      %v3566 = vadd.f32 0.0, %v3565
      %v3567 = vpop.f32.mrb[0].mxu0
      %v3568 = vpop.f32.mrb[0].mxu0
      %v3569 = vadd.f32 0.0, %v3568
      %v3570 = vpop.f32.mrb[0].mxu0
      %3571 = vmatprep.mubr.bf16.mxu0 0
      %3572 = vmatmul.mubr.bf16.gmra.mrb[0].mxu0 %v3498
      %v3573 = vpop.f32.mrb[0].mxu0
      %v3574 = vadd.f32 0.0, %v3573
      %v3575 = vpop.f32.mrb[0].mxu0
      %v3576 = vpop.f32.mrb[0].mxu0
      %v3577 = vadd.f32 0.0, %v3576
      %v3578 = vpop.f32.mrb[0].mxu0
      %3579 = vmatprep.mubr.bf16.mxu0 0
      %3580 = vmatmul.mubr.bf16.gmra.mrb[0].mxu0 %v3501
      %v3581 = vpop.f32.mrb[0].mxu0
      %v3582 = vadd.f32 0.0, %v3581
      %v3583 = vpop.f32.mrb[0].mxu0
      %v3584 = vpop.f32.mrb[0].mxu0
      %v3585 = vadd.f32 0.0, %v3584
      %v3586 = vpop.f32.mrb[0].mxu0
      %3587 = vmatprep.mubr.bf16.mxu0 0
      %3588 = vmatmul.mubr.bf16.gmra.mrb[0].mxu0 %v3504
      %v3589 = vpop.f32.mrb[0].mxu0
      %v3590 = vadd.f32 0.0, %v3589
      %v3591 = vpop.f32.mrb[0].mxu0
      %v3592 = vpop.f32.mrb[0].mxu0
      %v3593 = vadd.f32 0.0, %v3592
      %v3594 = vpop.f32.mrb[0].mxu0
      %3595 = vmatprep.mubr.bf16.mxu0 0
      %3596 = vmatmul.mubr.bf16.gmra.mrb[0].mxu0 %v3507
      %v3597 = vpop.f32.mrb[0].mxu0
      %v3598 = vadd.f32 0.0, %v3597
      %v3599 = vpop.f32.mrb[0].mxu0
      %v3600 = vpop.f32.mrb[0].mxu0
      %v3601 = vadd.f32 0.0, %v3600
      %v3602 = vpop.f32.mrb[0].mxu0
      %3603 = vmatprep.mubr.bf16.mxu0 0
      %3604 = vmatmul.mubr.bf16.gmra.mrb[0].mxu0 %v3510
      %v3605 = vpop.f32.mrb[0].mxu0
      %v3606 = vadd.f32 0.0, %v3605
      %v3607 = vpop.f32.mrb[0].mxu0
      %v3608 = vpop.f32.mrb[0].mxu0
      %v3609 = vadd.f32 0.0, %v3608
      %v3610 = vpop.f32.mrb[0].mxu0
      %3611 = vdwg.mxu0
      %v3612 = vadd.f32 %v3413, %v3550
      %v3613 = vadd.f32 %v3414, %v3553
      %v3614 = vadd.f32 %v3415, %v3558
      %v3615 = vadd.f32 %v3416, %v3561
      %v3616 = vadd.f32 %v3417, %v3566
      %v3617 = vadd.f32 %v3418, %v3569
      %v3618 = vadd.f32 %v3419, %v3574
      %v3619 = vadd.f32 %v3420, %v3577
      %v3620 = vadd.f32 %v3421, %v3582
      %v3621 = vadd.f32 %v3422, %v3585
      %v3622 = vadd.f32 %v3423, %v3590
      %v3623 = vadd.f32 %v3424, %v3593
      %v3624 = vadd.f32 %v3425, %v3598
      %v3625 = vadd.f32 %v3426, %v3601
      %v3626 = vadd.f32 %v3427, %v3606
      %v3627 = vadd.f32 %v3428, %v3609
      %v3628 = vld [vmem:[%s3429] sm:$0xf]
      %v3629 = vld [vmem:[%s3429 + $0x4] sm:$0xf]
      %v3630 = vld [vmem:[%s3429 + $0x8] sm:$0x1]
      %v3631 = vld [vmem:[%s3429 + $0xc] sm:$0xf]
      %v3632 = vld [vmem:[%s3429 + $0x10] sm:$0xf]
      %v3633 = vld [vmem:[%s3429 + $0x14] sm:$0x1]
      %v3634 = vld [vmem:[%s3429 + $0x18] sm:$0xf]
      %v3635 = vld [vmem:[%s3429 + $0x1c] sm:$0xf]
      %v3636 = vld [vmem:[%s3429 + $0x20] sm:$0x1]
      %v3637 = vld [vmem:[%s3429 + $0x24] sm:$0xf]
      %v3638 = vld [vmem:[%s3429 + $0x28] sm:$0xf]
      %v3639 = vld [vmem:[%s3429 + $0x2c] sm:$0x1]
      %v3640 = vld [vmem:[%s3429 + $0x30] sm:$0xf]
      %v3641 = vld [vmem:[%s3429 + $0x34] sm:$0xf]
      %v3642 = vld [vmem:[%s3429 + $0x38] sm:$0x1]
      %v3643 = vld [vmem:[%s3429 + $0x3c] sm:$0xf]
      %v3644 = vld [vmem:[%s3429 + $0x40] sm:$0xf]
      %v3645 = vld [vmem:[%s3429 + $0x44] sm:$0x1]
      %v3646 = vld [vmem:[%s3429 + $0x48] sm:$0xf]
      %v3647 = vld [vmem:[%s3429 + $0x4c] sm:$0xf]
      %v3648 = vld [vmem:[%s3429 + $0x50] sm:$0x1]
      %v3649 = vld [vmem:[%s3429 + $0x54] sm:$0xf]
      %v3650 = vld [vmem:[%s3429 + $0x58] sm:$0xf]
      %v3651 = vld [vmem:[%s3429 + $0x5c] sm:$0x1]
      %v3653 = vshrl.u32 %v3628, 16
      %v3655 = vrot.slane %v3653, 4
      %v3656 = vshll.u32 %v3628, 16
      %v3658 = vrot.slane %v3656, 5
      %v3659 = vor.u32 %v3655, %v3658
      %v3660 = vrot.slane %v3659, 4
      %v3662 = vshll.u32 %v3629, 16
      %v3664 = vrot.slane %v3662, 5
      %v3665 = vsel %vm294, %v3660, %v3664
      %v3666 = vshrl.u32 %v3629, 16
      %v3668 = vrot.slane %v3666, 4
      %v3669 = vor.u32 %v3668, %v3664
      %v3670 = vrot.slane %v3669, 4
      %v3672 = vshll.u32 %v3630, 16
      %v3674 = vrot.slane %v3672, 5
      %v3675 = vsel %vm294, %v3670, %v3674
      %v3677 = vshrl.u32 %v3631, 16
      %v3679 = vrot.slane %v3677, 4
      %v3680 = vshll.u32 %v3631, 16
      %v3682 = vrot.slane %v3680, 5
      %v3683 = vor.u32 %v3679, %v3682
      %v3684 = vrot.slane %v3683, 4
      %v3686 = vshll.u32 %v3632, 16
      %v3688 = vrot.slane %v3686, 5
      %v3689 = vsel %vm294, %v3684, %v3688
      %v3690 = vshrl.u32 %v3632, 16
      %v3692 = vrot.slane %v3690, 4
      %v3693 = vor.u32 %v3692, %v3688
      %v3694 = vrot.slane %v3693, 4
      %v3696 = vshll.u32 %v3633, 16
      %v3698 = vrot.slane %v3696, 5
      %v3699 = vsel %vm294, %v3694, %v3698
      %v3701 = vshrl.u32 %v3634, 16
      %v3703 = vrot.slane %v3701, 4
      %v3704 = vshll.u32 %v3634, 16
      %v3706 = vrot.slane %v3704, 5
      %v3707 = vor.u32 %v3703, %v3706
      %v3708 = vrot.slane %v3707, 4
      %v3710 = vshll.u32 %v3635, 16
      %v3712 = vrot.slane %v3710, 5
      %v3713 = vsel %vm294, %v3708, %v3712
      %v3714 = vshrl.u32 %v3635, 16
      %v3716 = vrot.slane %v3714, 4
      %v3717 = vor.u32 %v3716, %v3712
      %v3718 = vrot.slane %v3717, 4
      %v3720 = vshll.u32 %v3636, 16
      %v3722 = vrot.slane %v3720, 5
      %v3723 = vsel %vm294, %v3718, %v3722
      %v3725 = vshrl.u32 %v3637, 16
      %v3727 = vrot.slane %v3725, 4
      %v3728 = vshll.u32 %v3637, 16
      %v3730 = vrot.slane %v3728, 5
      %v3731 = vor.u32 %v3727, %v3730
      %v3732 = vrot.slane %v3731, 4
      %v3734 = vshll.u32 %v3638, 16
      %v3736 = vrot.slane %v3734, 5
      %v3737 = vsel %vm294, %v3732, %v3736
      %v3738 = vshrl.u32 %v3638, 16
      %v3740 = vrot.slane %v3738, 4
      %v3741 = vor.u32 %v3740, %v3736
      %v3742 = vrot.slane %v3741, 4
      %v3744 = vshll.u32 %v3639, 16
      %v3746 = vrot.slane %v3744, 5
      %v3747 = vsel %vm294, %v3742, %v3746
      %v3749 = vshrl.u32 %v3640, 16
      %v3751 = vrot.slane %v3749, 4
      %v3752 = vshll.u32 %v3640, 16
      %v3754 = vrot.slane %v3752, 5
      %v3755 = vor.u32 %v3751, %v3754
      %v3756 = vrot.slane %v3755, 4
      %v3758 = vshll.u32 %v3641, 16
      %v3760 = vrot.slane %v3758, 5
      %v3761 = vsel %vm294, %v3756, %v3760
      %v3762 = vshrl.u32 %v3641, 16
      %v3764 = vrot.slane %v3762, 4
      %v3765 = vor.u32 %v3764, %v3760
      %v3766 = vrot.slane %v3765, 4
      %v3768 = vshll.u32 %v3642, 16
      %v3770 = vrot.slane %v3768, 5
      %v3771 = vsel %vm294, %v3766, %v3770
      %v3773 = vshrl.u32 %v3643, 16
      %v3775 = vrot.slane %v3773, 4
      %v3776 = vshll.u32 %v3643, 16
      %v3778 = vrot.slane %v3776, 5
      %v3779 = vor.u32 %v3775, %v3778
      %v3780 = vrot.slane %v3779, 4
      %v3782 = vshll.u32 %v3644, 16
      %v3784 = vrot.slane %v3782, 5
      %v3785 = vsel %vm294, %v3780, %v3784
      %v3786 = vshrl.u32 %v3644, 16
      %v3788 = vrot.slane %v3786, 4
      %v3789 = vor.u32 %v3788, %v3784
      %v3790 = vrot.slane %v3789, 4
      %v3792 = vshll.u32 %v3645, 16
      %v3794 = vrot.slane %v3792, 5
      %v3795 = vsel %vm294, %v3790, %v3794
      %v3797 = vshrl.u32 %v3646, 16
      %v3799 = vrot.slane %v3797, 4
      %v3800 = vshll.u32 %v3646, 16
      %v3802 = vrot.slane %v3800, 5
      %v3803 = vor.u32 %v3799, %v3802
      %v3804 = vrot.slane %v3803, 4
      %v3806 = vshll.u32 %v3647, 16
      %v3808 = vrot.slane %v3806, 5
      %v3809 = vsel %vm294, %v3804, %v3808
      %v3810 = vshrl.u32 %v3647, 16
      %v3812 = vrot.slane %v3810, 4
      %v3813 = vor.u32 %v3812, %v3808
      %v3814 = vrot.slane %v3813, 4
      %v3816 = vshll.u32 %v3648, 16
      %v3818 = vrot.slane %v3816, 5
      %v3819 = vsel %vm294, %v3814, %v3818
      %v3821 = vshrl.u32 %v3649, 16
      %v3823 = vrot.slane %v3821, 4
      %v3824 = vshll.u32 %v3649, 16
      %v3826 = vrot.slane %v3824, 5
      %v3827 = vor.u32 %v3823, %v3826
      %v3828 = vrot.slane %v3827, 4
      %v3830 = vshll.u32 %v3650, 16
      %v3832 = vrot.slane %v3830, 5
      %v3833 = vsel %vm294, %v3828, %v3832
      %v3834 = vshrl.u32 %v3650, 16
      %v3836 = vrot.slane %v3834, 4
      %v3837 = vor.u32 %v3836, %v3832
      %v3838 = vrot.slane %v3837, 4
      %v3840 = vshll.u32 %v3651, 16
      %v3842 = vrot.slane %v3840, 5
      %v3843 = vsel %vm294, %v3838, %v3842
      %s3844 = scalar_lea.vmem %s2, 8
      %v3845 = vld [vmem:[%s3844] sm:$0x3]
      %v3846 = vunpack.c.l.b16 %v3665
      %v3847 = vunpack.c.l.b16 %v3675
      %v3848 = vunpack.c.l.b16 %v3689
      %v3849 = vunpack.c.l.b16 %v3699
      %v3850 = vunpack.c.l.b16 %v3713
      %v3851 = vunpack.c.l.b16 %v3723
      %v3852 = vunpack.c.l.b16 %v3737
      %v3853 = vunpack.c.l.b16 %v3747
      %v3854 = vunpack.c.l.b16 %v3761
      %v3855 = vunpack.c.l.b16 %v3771
      %v3856 = vunpack.c.l.b16 %v3785
      %v3857 = vunpack.c.l.b16 %v3795
      %v3858 = vunpack.c.l.b16 %v3809
      %v3859 = vunpack.c.l.b16 %v3819
      %v3860 = vunpack.c.l.b16 %v3833
      %v3861 = vunpack.c.l.b16 %v3843
      %v3862 = vpack.c.b16 %v3847, %v3846
      %v3863 = vpack.c.b16 %v3849, %v3848
      %v3864 = vpack.c.b16 %v3851, %v3850
      %v3865 = vpack.c.b16 %v3853, %v3852
      %v3866 = vpack.c.b16 %v3855, %v3854
      %v3867 = vpack.c.b16 %v3857, %v3856
      %v3868 = vpack.c.b16 %v3859, %v3858
      %v3869 = vpack.c.b16 %v3861, %v3860
      %v3871 = vsel %vm567, %v3862, 0
      %v3874 = vsel %vm567, %v3863, 0
      %v3877 = vsel %vm567, %v3864, 0
      %v3880 = vsel %vm567, %v3865, 0
      %v3883 = vsel %vm567, %v3866, 0
      %v3886 = vsel %vm567, %v3867, 0
      %v3889 = vsel %vm567, %v3868, 0
      %v3892 = vsel %vm567, %v3869, 0
      %v3895 = vsel %vm598, %v3845, 0
      %3897 = vmatprep.subr.bf16.mxu0 0
      %3898 = vmatpush1.bf16.msra.mxu0 %v3895
      %3899 = vmatprep.subr.bf16.mxu0 0
      %3900 = vmatpush1.bf16.msra.mxu0 0
      %3901 = vmatprep.subr.bf16.mxu0 0
      %3902 = vmatpush1.bf16.msra.mxu0 0
      %3903 = vmatprep.subr.bf16.mxu0 0
      %3904 = vmatpush1.bf16.msra.mxu0 0
      %3905 = vmatprep.subr.bf16.mxu0 0
      %3906 = vmatpush1.bf16.msra.mxu0 0
      %3907 = vmatprep.subr.bf16.mxu0 0
      %3908 = vmatpush1.bf16.msra.mxu0 0
      %3909 = vmatprep.subr.bf16.mxu0 0
      %3910 = vmatpush1.bf16.msra.mxu0 0
      %3911 = vmatprep.subr.bf16.mxu0 0
      %3912 = vmatpush1.bf16.msra.mxu0 0
      %3913 = vmatprep.subr.bf16.mxu0 0
      %3914 = vmatpush1.bf16.msra.mxu0 0
      %3915 = vmatprep.subr.bf16.mxu0 0
      %3916 = vmatpush1.bf16.msra.mxu0 0
      %3917 = vmatprep.subr.bf16.mxu0 0
      %3918 = vmatpush1.bf16.msra.mxu0 0
      %3919 = vmatprep.subr.bf16.mxu0 0
      %3920 = vmatpush1.bf16.msra.mxu0 0
      %3921 = vmatprep.subr.bf16.mxu0 0
      %3922 = vmatpush1.bf16.msra.mxu0 0
      %3923 = vmatprep.subr.bf16.mxu0 0
      %3924 = vmatpush1.bf16.msra.mxu0 0
      %3925 = vmatprep.subr.bf16.mxu0 0
      %3926 = vmatpush1.bf16.msra.mxu0 0
      %3927 = vmatprep.subr.bf16.mxu0 0
      %3928 = vmatpush1.bf16.msra.mxu0 0
      %3929 = vmatprep.mubr.bf16.mxu0 0
      %3930 = vmatmul.mubr.bf16.gmra.mrb[0].mxu0 %v3871
      %v3931 = vpop.f32.mrb[0].mxu0
      %v3932 = vadd.f32 0.0, %v3931
      %v3933 = vpop.f32.mrb[0].mxu0
      %v3934 = vpop.f32.mrb[0].mxu0
      %v3935 = vadd.f32 0.0, %v3934
      %v3936 = vpop.f32.mrb[0].mxu0
      %3937 = vmatprep.mubr.bf16.mxu0 0
      %3938 = vmatmul.mubr.bf16.gmra.mrb[0].mxu0 %v3874
      %v3939 = vpop.f32.mrb[0].mxu0
      %v3940 = vadd.f32 0.0, %v3939
      %v3941 = vpop.f32.mrb[0].mxu0
      %v3942 = vpop.f32.mrb[0].mxu0
      %v3943 = vadd.f32 0.0, %v3942
      %v3944 = vpop.f32.mrb[0].mxu0
      %3945 = vmatprep.mubr.bf16.mxu0 0
      %3946 = vmatmul.mubr.bf16.gmra.mrb[0].mxu0 %v3877
      %v3947 = vpop.f32.mrb[0].mxu0
      %v3948 = vadd.f32 0.0, %v3947
      %v3949 = vpop.f32.mrb[0].mxu0
      %v3950 = vpop.f32.mrb[0].mxu0
      %v3951 = vadd.f32 0.0, %v3950
      %v3952 = vpop.f32.mrb[0].mxu0
      %3953 = vmatprep.mubr.bf16.mxu0 0
      %3954 = vmatmul.mubr.bf16.gmra.mrb[0].mxu0 %v3880
      %v3955 = vpop.f32.mrb[0].mxu0
      %v3956 = vadd.f32 0.0, %v3955
      %v3957 = vpop.f32.mrb[0].mxu0
      %v3958 = vpop.f32.mrb[0].mxu0
      %v3959 = vadd.f32 0.0, %v3958
      %v3960 = vpop.f32.mrb[0].mxu0
      %3961 = vmatprep.mubr.bf16.mxu0 0
      %3962 = vmatmul.mubr.bf16.gmra.mrb[0].mxu0 %v3883
      %v3963 = vpop.f32.mrb[0].mxu0
      %v3964 = vadd.f32 0.0, %v3963
      %v3965 = vpop.f32.mrb[0].mxu0
      %v3966 = vpop.f32.mrb[0].mxu0
      %v3967 = vadd.f32 0.0, %v3966
      %v3968 = vpop.f32.mrb[0].mxu0
      %3969 = vmatprep.mubr.bf16.mxu0 0
      %3970 = vmatmul.mubr.bf16.gmra.mrb[0].mxu0 %v3886
      %v3971 = vpop.f32.mrb[0].mxu0
      %v3972 = vadd.f32 0.0, %v3971
      %v3973 = vpop.f32.mrb[0].mxu0
      %v3974 = vpop.f32.mrb[0].mxu0
      %v3975 = vadd.f32 0.0, %v3974
      %v3976 = vpop.f32.mrb[0].mxu0
      %3977 = vmatprep.mubr.bf16.mxu0 0
      %3978 = vmatmul.mubr.bf16.gmra.mrb[0].mxu0 %v3889
      %v3979 = vpop.f32.mrb[0].mxu0
      %v3980 = vadd.f32 0.0, %v3979
      %v3981 = vpop.f32.mrb[0].mxu0
      %v3982 = vpop.f32.mrb[0].mxu0
      %v3983 = vadd.f32 0.0, %v3982
      %v3984 = vpop.f32.mrb[0].mxu0
      %3985 = vmatprep.mubr.bf16.mxu0 0
      %3986 = vmatmul.mubr.bf16.gmra.mrb[0].mxu0 %v3892
      %v3987 = vpop.f32.mrb[0].mxu0
      %v3988 = vadd.f32 0.0, %v3987
      %v3989 = vpop.f32.mrb[0].mxu0
      %v3990 = vpop.f32.mrb[0].mxu0
      %v3991 = vadd.f32 0.0, %v3990
      %v3992 = vpop.f32.mrb[0].mxu0
      %3993 = vdwg.mxu0
      %v3994 = vadd.f32 %v3612, %v3932
      %v3995 = vadd.f32 %v3613, %v3935
      %v3996 = vadd.f32 %v3614, %v3940
      %v3997 = vadd.f32 %v3615, %v3943
      %v3998 = vadd.f32 %v3616, %v3948
      %v3999 = vadd.f32 %v3617, %v3951
      %v4000 = vadd.f32 %v3618, %v3956
      %v4001 = vadd.f32 %v3619, %v3959
      %v4002 = vadd.f32 %v3620, %v3964
      %v4003 = vadd.f32 %v3621, %v3967
      %v4004 = vadd.f32 %v3622, %v3972
      %v4005 = vadd.f32 %v3623, %v3975
      %v4006 = vadd.f32 %v3624, %v3980
      %v4007 = vadd.f32 %v3625, %v3983
      %v4008 = vadd.f32 %v3626, %v3988
      %v4009 = vadd.f32 %v3627, %v3991
      %v4010 = vld [vmem:[%s3429] sm:$0xe]
      %v4011 = vld [vmem:[%s3429 + $0xc] sm:$0xe]
      %v4012 = vld [vmem:[%s3429 + $0x18] sm:$0xe]
      %v4013 = vld [vmem:[%s3429 + $0x24] sm:$0xe]
      %v4014 = vld [vmem:[%s3429 + $0x30] sm:$0xe]
      %v4015 = vld [vmem:[%s3429 + $0x3c] sm:$0xe]
      %v4016 = vld [vmem:[%s3429 + $0x48] sm:$0xe]
      %v4017 = vld [vmem:[%s3429 + $0x54] sm:$0xe]
      %v4042 = vrot.slane %v4010, 5
      %v4043 = vrot.slane %v4042, 4
      %v4044 = vrot.slane %v3629, 5
      %v4045 = vsel %vm923, %v4043, %v4044
      %v4046 = vrot.slane %v4044, 4
      %v4047 = vrot.slane %v3630, 5
      %v4048 = vsel %vm923, %v4046, %v4047
      %v4049 = vrot.slane %v4011, 5
      %v4050 = vrot.slane %v4049, 4
      %v4051 = vrot.slane %v3632, 5
      %v4052 = vsel %vm923, %v4050, %v4051
      %v4053 = vrot.slane %v4051, 4
      %v4054 = vrot.slane %v3633, 5
      %v4055 = vsel %vm923, %v4053, %v4054
      %v4056 = vrot.slane %v4012, 5
      %v4057 = vrot.slane %v4056, 4
      %v4058 = vrot.slane %v3635, 5
      %v4059 = vsel %vm923, %v4057, %v4058
      %v4060 = vrot.slane %v4058, 4
      %v4061 = vrot.slane %v3636, 5
      %v4062 = vsel %vm923, %v4060, %v4061
      %v4063 = vrot.slane %v4013, 5
      %v4064 = vrot.slane %v4063, 4
      %v4065 = vrot.slane %v3638, 5
      %v4066 = vsel %vm923, %v4064, %v4065
      %v4067 = vrot.slane %v4065, 4
      %v4068 = vrot.slane %v3639, 5
      %v4069 = vsel %vm923, %v4067, %v4068
      %v4070 = vrot.slane %v4014, 5
      %v4071 = vrot.slane %v4070, 4
      %v4072 = vrot.slane %v3641, 5
      %v4073 = vsel %vm923, %v4071, %v4072
      %v4074 = vrot.slane %v4072, 4
      %v4075 = vrot.slane %v3642, 5
      %v4076 = vsel %vm923, %v4074, %v4075
      %v4077 = vrot.slane %v4015, 5
      %v4078 = vrot.slane %v4077, 4
      %v4079 = vrot.slane %v3644, 5
      %v4080 = vsel %vm923, %v4078, %v4079
      %v4081 = vrot.slane %v4079, 4
      %v4082 = vrot.slane %v3645, 5
      %v4083 = vsel %vm923, %v4081, %v4082
      %v4084 = vrot.slane %v4016, 5
      %v4085 = vrot.slane %v4084, 4
      %v4086 = vrot.slane %v3647, 5
      %v4087 = vsel %vm923, %v4085, %v4086
      %v4088 = vrot.slane %v4086, 4
      %v4089 = vrot.slane %v3648, 5
      %v4090 = vsel %vm923, %v4088, %v4089
      %v4091 = vrot.slane %v4017, 5
      %v4092 = vrot.slane %v4091, 4
      %v4093 = vrot.slane %v3650, 5
      %v4094 = vsel %vm923, %v4092, %v4093
      %v4095 = vrot.slane %v4093, 4
      %v4096 = vrot.slane %v3651, 5
      %v4097 = vsel %vm923, %v4095, %v4096
      %s4098 = scalar_lea.vmem %s2, 10
      %v4099 = vld [vmem:[%s4098] sm:$0x3]
      %v4100 = vunpack.c.l.b16 %v4045
      %v4101 = vunpack.c.l.b16 %v4048
      %v4102 = vunpack.c.l.b16 %v4052
      %v4103 = vunpack.c.l.b16 %v4055
      %v4104 = vunpack.c.l.b16 %v4059
      %v4105 = vunpack.c.l.b16 %v4062
      %v4106 = vunpack.c.l.b16 %v4066
      %v4107 = vunpack.c.l.b16 %v4069
      %v4108 = vunpack.c.l.b16 %v4073
      %v4109 = vunpack.c.l.b16 %v4076
      %v4110 = vunpack.c.l.b16 %v4080
      %v4111 = vunpack.c.l.b16 %v4083
      %v4112 = vunpack.c.l.b16 %v4087
      %v4113 = vunpack.c.l.b16 %v4090
      %v4114 = vunpack.c.l.b16 %v4094
      %v4115 = vunpack.c.l.b16 %v4097
      %v4116 = vpack.c.b16 %v4101, %v4100
      %v4117 = vpack.c.b16 %v4103, %v4102
      %v4118 = vpack.c.b16 %v4105, %v4104
      %v4119 = vpack.c.b16 %v4107, %v4106
      %v4120 = vpack.c.b16 %v4109, %v4108
      %v4121 = vpack.c.b16 %v4111, %v4110
      %v4122 = vpack.c.b16 %v4113, %v4112
      %v4123 = vpack.c.b16 %v4115, %v4114
      %v4125 = vsel %vm567, %v4116, 0
      %v4128 = vsel %vm567, %v4117, 0
      %v4131 = vsel %vm567, %v4118, 0
      %v4134 = vsel %vm567, %v4119, 0
      %v4137 = vsel %vm567, %v4120, 0
      %v4140 = vsel %vm567, %v4121, 0
      %v4143 = vsel %vm567, %v4122, 0
      %v4146 = vsel %vm567, %v4123, 0
      %v4149 = vsel %vm598, %v4099, 0
      %4151 = vmatprep.subr.bf16.mxu0 0
      %4152 = vmatpush1.bf16.msra.mxu0 %v4149
      %4153 = vmatprep.subr.bf16.mxu0 0
      %4154 = vmatpush1.bf16.msra.mxu0 0
      %4155 = vmatprep.subr.bf16.mxu0 0
      %4156 = vmatpush1.bf16.msra.mxu0 0
      %4157 = vmatprep.subr.bf16.mxu0 0
      %4158 = vmatpush1.bf16.msra.mxu0 0
      %4159 = vmatprep.subr.bf16.mxu0 0
      %4160 = vmatpush1.bf16.msra.mxu0 0
      %4161 = vmatprep.subr.bf16.mxu0 0
      %4162 = vmatpush1.bf16.msra.mxu0 0
      %4163 = vmatprep.subr.bf16.mxu0 0
      %4164 = vmatpush1.bf16.msra.mxu0 0
      %4165 = vmatprep.subr.bf16.mxu0 0
      %4166 = vmatpush1.bf16.msra.mxu0 0
      %4167 = vmatprep.subr.bf16.mxu0 0
      %4168 = vmatpush1.bf16.msra.mxu0 0
      %4169 = vmatprep.subr.bf16.mxu0 0
      %4170 = vmatpush1.bf16.msra.mxu0 0
      %4171 = vmatprep.subr.bf16.mxu0 0
      %4172 = vmatpush1.bf16.msra.mxu0 0
      %4173 = vmatprep.subr.bf16.mxu0 0
      %4174 = vmatpush1.bf16.msra.mxu0 0
      %4175 = vmatprep.subr.bf16.mxu0 0
      %4176 = vmatpush1.bf16.msra.mxu0 0
      %4177 = vmatprep.subr.bf16.mxu0 0
      %4178 = vmatpush1.bf16.msra.mxu0 0
      %4179 = vmatprep.subr.bf16.mxu0 0
      %4180 = vmatpush1.bf16.msra.mxu0 0
      %4181 = vmatprep.subr.bf16.mxu0 0
      %4182 = vmatpush1.bf16.msra.mxu0 0
      %4183 = vmatprep.mubr.bf16.mxu0 0
      %4184 = vmatmul.mubr.bf16.gmra.mrb[0].mxu0 %v4125
      %v4185 = vpop.f32.mrb[0].mxu0
      %v4186 = vadd.f32 0.0, %v4185
      %v4187 = vpop.f32.mrb[0].mxu0
      %v4188 = vpop.f32.mrb[0].mxu0
      %v4189 = vadd.f32 0.0, %v4188
      %v4190 = vpop.f32.mrb[0].mxu0
      %4191 = vmatprep.mubr.bf16.mxu0 0
      %4192 = vmatmul.mubr.bf16.gmra.mrb[0].mxu0 %v4128
      %v4193 = vpop.f32.mrb[0].mxu0
      %v4194 = vadd.f32 0.0, %v4193
      %v4195 = vpop.f32.mrb[0].mxu0
      %v4196 = vpop.f32.mrb[0].mxu0
      %v4197 = vadd.f32 0.0, %v4196
      %v4198 = vpop.f32.mrb[0].mxu0
      %4199 = vmatprep.mubr.bf16.mxu0 0
      %4200 = vmatmul.mubr.bf16.gmra.mrb[0].mxu0 %v4131
      %v4201 = vpop.f32.mrb[0].mxu0
      %v4202 = vadd.f32 0.0, %v4201
      %v4203 = vpop.f32.mrb[0].mxu0
      %v4204 = vpop.f32.mrb[0].mxu0
      %v4205 = vadd.f32 0.0, %v4204
      %v4206 = vpop.f32.mrb[0].mxu0
      %4207 = vmatprep.mubr.bf16.mxu0 0
      %4208 = vmatmul.mubr.bf16.gmra.mrb[0].mxu0 %v4134
      %v4209 = vpop.f32.mrb[0].mxu0
      %v4210 = vadd.f32 0.0, %v4209
      %v4211 = vpop.f32.mrb[0].mxu0
      %v4212 = vpop.f32.mrb[0].mxu0
      %v4213 = vadd.f32 0.0, %v4212
      %v4214 = vpop.f32.mrb[0].mxu0
      %4215 = vmatprep.mubr.bf16.mxu0 0
      %4216 = vmatmul.mubr.bf16.gmra.mrb[0].mxu0 %v4137
      %v4217 = vpop.f32.mrb[0].mxu0
      %v4218 = vadd.f32 0.0, %v4217
      %v4219 = vpop.f32.mrb[0].mxu0
      %v4220 = vpop.f32.mrb[0].mxu0
      %v4221 = vadd.f32 0.0, %v4220
      %v4222 = vpop.f32.mrb[0].mxu0
      %4223 = vmatprep.mubr.bf16.mxu0 0
      %4224 = vmatmul.mubr.bf16.gmra.mrb[0].mxu0 %v4140
      %v4225 = vpop.f32.mrb[0].mxu0
      %v4226 = vadd.f32 0.0, %v4225
      %v4227 = vpop.f32.mrb[0].mxu0
      %v4228 = vpop.f32.mrb[0].mxu0
      %v4229 = vadd.f32 0.0, %v4228
      %v4230 = vpop.f32.mrb[0].mxu0
      %4231 = vmatprep.mubr.bf16.mxu0 0
      %4232 = vmatmul.mubr.bf16.gmra.mrb[0].mxu0 %v4143
      %v4233 = vpop.f32.mrb[0].mxu0
      %v4234 = vadd.f32 0.0, %v4233
      %v4235 = vpop.f32.mrb[0].mxu0
      %v4236 = vpop.f32.mrb[0].mxu0
      %v4237 = vadd.f32 0.0, %v4236
      %v4238 = vpop.f32.mrb[0].mxu0
      %4239 = vmatprep.mubr.bf16.mxu0 0
      %4240 = vmatmul.mubr.bf16.gmra.mrb[0].mxu0 %v4146
      %v4241 = vpop.f32.mrb[0].mxu0
      %v4242 = vadd.f32 0.0, %v4241
      %v4243 = vpop.f32.mrb[0].mxu0
      %v4244 = vpop.f32.mrb[0].mxu0
      %v4245 = vadd.f32 0.0, %v4244
      %v4246 = vpop.f32.mrb[0].mxu0
      %4247 = vdwg.mxu0
      %v4248 = vadd.f32 %v3994, %v4186
      %v4249 = vadd.f32 %v3995, %v4189
      %v4250 = vadd.f32 %v3996, %v4194
      %v4251 = vadd.f32 %v3997, %v4197
      %v4252 = vadd.f32 %v3998, %v4202
      %v4253 = vadd.f32 %v3999, %v4205
      %v4254 = vadd.f32 %v4000, %v4210
      %v4255 = vadd.f32 %v4001, %v4213
      %v4256 = vadd.f32 %v4002, %v4218
      %v4257 = vadd.f32 %v4003, %v4221
      %v4258 = vadd.f32 %v4004, %v4226
      %v4259 = vadd.f32 %v4005, %v4229
      %v4260 = vadd.f32 %v4006, %v4234
      %v4261 = vadd.f32 %v4007, %v4237
      %v4262 = vadd.f32 %v4008, %v4242
      %v4263 = vadd.f32 %v4009, %v4245
      %s4264 = scalar_lea.vmem [#allocation2], 24
      %v4265 = vld [vmem:[%s4264] sm:$0xf]
      %v4266 = vld [vmem:[%s4264 + $0x4] sm:$0xf]
      %v4267 = vld [vmem:[%s4264 + $0xc] sm:$0xf]
      %v4268 = vld [vmem:[%s4264 + $0x10] sm:$0xf]
      %v4269 = vld [vmem:[%s4264 + $0x18] sm:$0xf]
      %v4270 = vld [vmem:[%s4264 + $0x1c] sm:$0xf]
      %v4271 = vld [vmem:[%s4264 + $0x24] sm:$0xf]
      %v4272 = vld [vmem:[%s4264 + $0x28] sm:$0xf]
      %v4273 = vld [vmem:[%s4264 + $0x30] sm:$0xf]
      %v4274 = vld [vmem:[%s4264 + $0x34] sm:$0xf]
      %v4275 = vld [vmem:[%s4264 + $0x3c] sm:$0xf]
      %v4276 = vld [vmem:[%s4264 + $0x40] sm:$0xf]
      %v4277 = vld [vmem:[%s4264 + $0x48] sm:$0xf]
      %v4278 = vld [vmem:[%s4264 + $0x4c] sm:$0xf]
      %v4279 = vld [vmem:[%s4264 + $0x54] sm:$0xf]
      %v4280 = vld [vmem:[%s4264 + $0x58] sm:$0xf]
      %s4281 = scalar_lea.vmem %s2, 12
      %v4282 = vld [vmem:[%s4281] sm:$0x3]
      %v4299 = vunpack.c.l.b16 %v4265
      %v4300 = vunpack.c.l.b16 %v4266
      %v4301 = vunpack.c.l.b16 %v4267
      %v4302 = vunpack.c.l.b16 %v4268
      %v4303 = vunpack.c.l.b16 %v4269
      %v4304 = vunpack.c.l.b16 %v4270
      %v4305 = vunpack.c.l.b16 %v4271
      %v4306 = vunpack.c.l.b16 %v4272
      %v4307 = vunpack.c.l.b16 %v4273
      %v4308 = vunpack.c.l.b16 %v4274
      %v4309 = vunpack.c.l.b16 %v4275
      %v4310 = vunpack.c.l.b16 %v4276
      %v4311 = vunpack.c.l.b16 %v4277
      %v4312 = vunpack.c.l.b16 %v4278
      %v4313 = vunpack.c.l.b16 %v4279
      %v4314 = vunpack.c.l.b16 %v4280
      %v4315 = vpack.c.b16 %v4300, %v4299
      %v4316 = vpack.c.b16 %v4302, %v4301
      %v4317 = vpack.c.b16 %v4304, %v4303
      %v4318 = vpack.c.b16 %v4306, %v4305
      %v4319 = vpack.c.b16 %v4308, %v4307
      %v4320 = vpack.c.b16 %v4310, %v4309
      %v4321 = vpack.c.b16 %v4312, %v4311
      %v4322 = vpack.c.b16 %v4314, %v4313
      %v4324 = vsel %vm567, %v4315, 0
      %v4327 = vsel %vm567, %v4316, 0
      %v4330 = vsel %vm567, %v4317, 0
      %v4333 = vsel %vm567, %v4318, 0
      %v4336 = vsel %vm567, %v4319, 0
      %v4339 = vsel %vm567, %v4320, 0
      %v4342 = vsel %vm567, %v4321, 0
      %v4345 = vsel %vm567, %v4322, 0
      %v4348 = vsel %vm598, %v4282, 0
      %4350 = vmatprep.subr.bf16.mxu0 0
      %4351 = vmatpush1.bf16.msra.mxu0 %v4348
      %4352 = vmatprep.subr.bf16.mxu0 0
      %4353 = vmatpush1.bf16.msra.mxu0 0
      %4354 = vmatprep.subr.bf16.mxu0 0
      %4355 = vmatpush1.bf16.msra.mxu0 0
      %4356 = vmatprep.subr.bf16.mxu0 0
      %4357 = vmatpush1.bf16.msra.mxu0 0
      %4358 = vmatprep.subr.bf16.mxu0 0
      %4359 = vmatpush1.bf16.msra.mxu0 0
      %4360 = vmatprep.subr.bf16.mxu0 0
      %4361 = vmatpush1.bf16.msra.mxu0 0
      %4362 = vmatprep.subr.bf16.mxu0 0
      %4363 = vmatpush1.bf16.msra.mxu0 0
      %4364 = vmatprep.subr.bf16.mxu0 0
      %4365 = vmatpush1.bf16.msra.mxu0 0
      %4366 = vmatprep.subr.bf16.mxu0 0
      %4367 = vmatpush1.bf16.msra.mxu0 0
      %4368 = vmatprep.subr.bf16.mxu0 0
      %4369 = vmatpush1.bf16.msra.mxu0 0
      %4370 = vmatprep.subr.bf16.mxu0 0
      %4371 = vmatpush1.bf16.msra.mxu0 0
      %4372 = vmatprep.subr.bf16.mxu0 0
      %4373 = vmatpush1.bf16.msra.mxu0 0
      %4374 = vmatprep.subr.bf16.mxu0 0
      %4375 = vmatpush1.bf16.msra.mxu0 0
      %4376 = vmatprep.subr.bf16.mxu0 0
      %4377 = vmatpush1.bf16.msra.mxu0 0
      %4378 = vmatprep.subr.bf16.mxu0 0
      %4379 = vmatpush1.bf16.msra.mxu0 0
      %4380 = vmatprep.subr.bf16.mxu0 0
      %4381 = vmatpush1.bf16.msra.mxu0 0
      %4382 = vmatprep.mubr.bf16.mxu0 0
      %4383 = vmatmul.mubr.bf16.gmra.mrb[0].mxu0 %v4324
      %v4384 = vpop.f32.mrb[0].mxu0
      %v4385 = vadd.f32 0.0, %v4384
      %v4386 = vpop.f32.mrb[0].mxu0
      %v4387 = vpop.f32.mrb[0].mxu0
      %v4388 = vadd.f32 0.0, %v4387
      %v4389 = vpop.f32.mrb[0].mxu0
      %4390 = vmatprep.mubr.bf16.mxu0 0
      %4391 = vmatmul.mubr.bf16.gmra.mrb[0].mxu0 %v4327
      %v4392 = vpop.f32.mrb[0].mxu0
      %v4393 = vadd.f32 0.0, %v4392
      %v4394 = vpop.f32.mrb[0].mxu0
      %v4395 = vpop.f32.mrb[0].mxu0
      %v4396 = vadd.f32 0.0, %v4395
      %v4397 = vpop.f32.mrb[0].mxu0
      %4398 = vmatprep.mubr.bf16.mxu0 0
      %4399 = vmatmul.mubr.bf16.gmra.mrb[0].mxu0 %v4330
      %v4400 = vpop.f32.mrb[0].mxu0
      %v4401 = vadd.f32 0.0, %v4400
      %v4402 = vpop.f32.mrb[0].mxu0
      %v4403 = vpop.f32.mrb[0].mxu0
      %v4404 = vadd.f32 0.0, %v4403
      %v4405 = vpop.f32.mrb[0].mxu0
      %4406 = vmatprep.mubr.bf16.mxu0 0
      %4407 = vmatmul.mubr.bf16.gmra.mrb[0].mxu0 %v4333
      %v4408 = vpop.f32.mrb[0].mxu0
      %v4409 = vadd.f32 0.0, %v4408
      %v4410 = vpop.f32.mrb[0].mxu0
      %v4411 = vpop.f32.mrb[0].mxu0
      %v4412 = vadd.f32 0.0, %v4411
      %v4413 = vpop.f32.mrb[0].mxu0
      %4414 = vmatprep.mubr.bf16.mxu0 0
      %4415 = vmatmul.mubr.bf16.gmra.mrb[0].mxu0 %v4336
      %v4416 = vpop.f32.mrb[0].mxu0
      %v4417 = vadd.f32 0.0, %v4416
      %v4418 = vpop.f32.mrb[0].mxu0
      %v4419 = vpop.f32.mrb[0].mxu0
      %v4420 = vadd.f32 0.0, %v4419
      %v4421 = vpop.f32.mrb[0].mxu0
      %4422 = vmatprep.mubr.bf16.mxu0 0
      %4423 = vmatmul.mubr.bf16.gmra.mrb[0].mxu0 %v4339
      %v4424 = vpop.f32.mrb[0].mxu0
      %v4425 = vadd.f32 0.0, %v4424
      %v4426 = vpop.f32.mrb[0].mxu0
      %v4427 = vpop.f32.mrb[0].mxu0
      %v4428 = vadd.f32 0.0, %v4427
      %v4429 = vpop.f32.mrb[0].mxu0
      %4430 = vmatprep.mubr.bf16.mxu0 0
      %4431 = vmatmul.mubr.bf16.gmra.mrb[0].mxu0 %v4342
      %v4432 = vpop.f32.mrb[0].mxu0
      %v4433 = vadd.f32 0.0, %v4432
      %v4434 = vpop.f32.mrb[0].mxu0
      %v4435 = vpop.f32.mrb[0].mxu0
      %v4436 = vadd.f32 0.0, %v4435
      %v4437 = vpop.f32.mrb[0].mxu0
      %4438 = vmatprep.mubr.bf16.mxu0 0
      %4439 = vmatmul.mubr.bf16.gmra.mrb[0].mxu0 %v4345
      %v4440 = vpop.f32.mrb[0].mxu0
      %v4441 = vadd.f32 0.0, %v4440
      %v4442 = vpop.f32.mrb[0].mxu0
      %v4443 = vpop.f32.mrb[0].mxu0
      %v4444 = vadd.f32 0.0, %v4443
      %v4445 = vpop.f32.mrb[0].mxu0
      %4446 = vdwg.mxu0
      %v4447 = vadd.f32 %v4248, %v4385
      %v4448 = vadd.f32 %v4249, %v4388
      %v4449 = vadd.f32 %v4250, %v4393
      %v4450 = vadd.f32 %v4251, %v4396
      %v4451 = vadd.f32 %v4252, %v4401
      %v4452 = vadd.f32 %v4253, %v4404
      %v4453 = vadd.f32 %v4254, %v4409
      %v4454 = vadd.f32 %v4255, %v4412
      %v4455 = vadd.f32 %v4256, %v4417
      %v4456 = vadd.f32 %v4257, %v4420
      %v4457 = vadd.f32 %v4258, %v4425
      %v4458 = vadd.f32 %v4259, %v4428
      %v4459 = vadd.f32 %v4260, %v4433
      %v4460 = vadd.f32 %v4261, %v4436
      %v4461 = vadd.f32 %v4262, %v4441
      %v4462 = vadd.f32 %v4263, %v4444
      %v4463 = vld [vmem:[%s4264] sm:$0xf]
      %v4464 = vld [vmem:[%s4264 + $0x4] sm:$0xf]
      %v4465 = vld [vmem:[%s4264 + $0x8] sm:$0x1]
      %v4466 = vld [vmem:[%s4264 + $0xc] sm:$0xf]
      %v4467 = vld [vmem:[%s4264 + $0x10] sm:$0xf]
      %v4468 = vld [vmem:[%s4264 + $0x14] sm:$0x1]
      %v4469 = vld [vmem:[%s4264 + $0x18] sm:$0xf]
      %v4470 = vld [vmem:[%s4264 + $0x1c] sm:$0xf]
      %v4471 = vld [vmem:[%s4264 + $0x20] sm:$0x1]
      %v4472 = vld [vmem:[%s4264 + $0x24] sm:$0xf]
      %v4473 = vld [vmem:[%s4264 + $0x28] sm:$0xf]
      %v4474 = vld [vmem:[%s4264 + $0x2c] sm:$0x1]
      %v4475 = vld [vmem:[%s4264 + $0x30] sm:$0xf]
      %v4476 = vld [vmem:[%s4264 + $0x34] sm:$0xf]
      %v4477 = vld [vmem:[%s4264 + $0x38] sm:$0x1]
      %v4478 = vld [vmem:[%s4264 + $0x3c] sm:$0xf]
      %v4479 = vld [vmem:[%s4264 + $0x40] sm:$0xf]
      %v4480 = vld [vmem:[%s4264 + $0x44] sm:$0x1]
      %v4481 = vld [vmem:[%s4264 + $0x48] sm:$0xf]
      %v4482 = vld [vmem:[%s4264 + $0x4c] sm:$0xf]
      %v4483 = vld [vmem:[%s4264 + $0x50] sm:$0x1]
      %v4484 = vld [vmem:[%s4264 + $0x54] sm:$0xf]
      %v4485 = vld [vmem:[%s4264 + $0x58] sm:$0xf]
      %v4486 = vld [vmem:[%s4264 + $0x5c] sm:$0x1]
      %v4488 = vshrl.u32 %v4463, 16
      %v4490 = vrot.slane %v4488, 4
      %v4491 = vshll.u32 %v4463, 16
      %v4493 = vrot.slane %v4491, 5
      %v4494 = vor.u32 %v4490, %v4493
      %v4495 = vrot.slane %v4494, 4
      %v4497 = vshll.u32 %v4464, 16
      %v4499 = vrot.slane %v4497, 5
      %v4500 = vsel %vm294, %v4495, %v4499
      %v4501 = vshrl.u32 %v4464, 16
      %v4503 = vrot.slane %v4501, 4
      %v4504 = vor.u32 %v4503, %v4499
      %v4505 = vrot.slane %v4504, 4
      %v4507 = vshll.u32 %v4465, 16
      %v4509 = vrot.slane %v4507, 5
      %v4510 = vsel %vm294, %v4505, %v4509
      %v4512 = vshrl.u32 %v4466, 16
      %v4514 = vrot.slane %v4512, 4
      %v4515 = vshll.u32 %v4466, 16
      %v4517 = vrot.slane %v4515, 5
      %v4518 = vor.u32 %v4514, %v4517
      %v4519 = vrot.slane %v4518, 4
      %v4521 = vshll.u32 %v4467, 16
      %v4523 = vrot.slane %v4521, 5
      %v4524 = vsel %vm294, %v4519, %v4523
      %v4525 = vshrl.u32 %v4467, 16
      %v4527 = vrot.slane %v4525, 4
      %v4528 = vor.u32 %v4527, %v4523
      %v4529 = vrot.slane %v4528, 4
      %v4531 = vshll.u32 %v4468, 16
      %v4533 = vrot.slane %v4531, 5
      %v4534 = vsel %vm294, %v4529, %v4533
      %v4536 = vshrl.u32 %v4469, 16
      %v4538 = vrot.slane %v4536, 4
      %v4539 = vshll.u32 %v4469, 16
      %v4541 = vrot.slane %v4539, 5
      %v4542 = vor.u32 %v4538, %v4541
      %v4543 = vrot.slane %v4542, 4
      %v4545 = vshll.u32 %v4470, 16
      %v4547 = vrot.slane %v4545, 5
      %v4548 = vsel %vm294, %v4543, %v4547
      %v4549 = vshrl.u32 %v4470, 16
      %v4551 = vrot.slane %v4549, 4
      %v4552 = vor.u32 %v4551, %v4547
      %v4553 = vrot.slane %v4552, 4
      %v4555 = vshll.u32 %v4471, 16
      %v4557 = vrot.slane %v4555, 5
      %v4558 = vsel %vm294, %v4553, %v4557
      %v4560 = vshrl.u32 %v4472, 16
      %v4562 = vrot.slane %v4560, 4
      %v4563 = vshll.u32 %v4472, 16
      %v4565 = vrot.slane %v4563, 5
      %v4566 = vor.u32 %v4562, %v4565
      %v4567 = vrot.slane %v4566, 4
      %v4569 = vshll.u32 %v4473, 16
      %v4571 = vrot.slane %v4569, 5
      %v4572 = vsel %vm294, %v4567, %v4571
      %v4573 = vshrl.u32 %v4473, 16
      %v4575 = vrot.slane %v4573, 4
      %v4576 = vor.u32 %v4575, %v4571
      %v4577 = vrot.slane %v4576, 4
      %v4579 = vshll.u32 %v4474, 16
      %v4581 = vrot.slane %v4579, 5
      %v4582 = vsel %vm294, %v4577, %v4581
      %v4584 = vshrl.u32 %v4475, 16
      %v4586 = vrot.slane %v4584, 4
      %v4587 = vshll.u32 %v4475, 16
      %v4589 = vrot.slane %v4587, 5
      %v4590 = vor.u32 %v4586, %v4589
      %v4591 = vrot.slane %v4590, 4
      %v4593 = vshll.u32 %v4476, 16
      %v4595 = vrot.slane %v4593, 5
      %v4596 = vsel %vm294, %v4591, %v4595
      %v4597 = vshrl.u32 %v4476, 16
      %v4599 = vrot.slane %v4597, 4
      %v4600 = vor.u32 %v4599, %v4595
      %v4601 = vrot.slane %v4600, 4
      %v4603 = vshll.u32 %v4477, 16
      %v4605 = vrot.slane %v4603, 5
      %v4606 = vsel %vm294, %v4601, %v4605
      %v4608 = vshrl.u32 %v4478, 16
      %v4610 = vrot.slane %v4608, 4
      %v4611 = vshll.u32 %v4478, 16
      %v4613 = vrot.slane %v4611, 5
      %v4614 = vor.u32 %v4610, %v4613
      %v4615 = vrot.slane %v4614, 4
      %v4617 = vshll.u32 %v4479, 16
      %v4619 = vrot.slane %v4617, 5
      %v4620 = vsel %vm294, %v4615, %v4619
      %v4621 = vshrl.u32 %v4479, 16
      %v4623 = vrot.slane %v4621, 4
      %v4624 = vor.u32 %v4623, %v4619
      %v4625 = vrot.slane %v4624, 4
      %v4627 = vshll.u32 %v4480, 16
      %v4629 = vrot.slane %v4627, 5
      %v4630 = vsel %vm294, %v4625, %v4629
      %v4632 = vshrl.u32 %v4481, 16
      %v4634 = vrot.slane %v4632, 4
      %v4635 = vshll.u32 %v4481, 16
      %v4637 = vrot.slane %v4635, 5
      %v4638 = vor.u32 %v4634, %v4637
      %v4639 = vrot.slane %v4638, 4
      %v4641 = vshll.u32 %v4482, 16
      %v4643 = vrot.slane %v4641, 5
      %v4644 = vsel %vm294, %v4639, %v4643
      %v4645 = vshrl.u32 %v4482, 16
      %v4647 = vrot.slane %v4645, 4
      %v4648 = vor.u32 %v4647, %v4643
      %v4649 = vrot.slane %v4648, 4
      %v4651 = vshll.u32 %v4483, 16
      %v4653 = vrot.slane %v4651, 5
      %v4654 = vsel %vm294, %v4649, %v4653
      %v4656 = vshrl.u32 %v4484, 16
      %v4658 = vrot.slane %v4656, 4
      %v4659 = vshll.u32 %v4484, 16
      %v4661 = vrot.slane %v4659, 5
      %v4662 = vor.u32 %v4658, %v4661
      %v4663 = vrot.slane %v4662, 4
      %v4665 = vshll.u32 %v4485, 16
      %v4667 = vrot.slane %v4665, 5
      %v4668 = vsel %vm294, %v4663, %v4667
      %v4669 = vshrl.u32 %v4485, 16
      %v4671 = vrot.slane %v4669, 4
      %v4672 = vor.u32 %v4671, %v4667
      %v4673 = vrot.slane %v4672, 4
      %v4675 = vshll.u32 %v4486, 16
      %v4677 = vrot.slane %v4675, 5
      %v4678 = vsel %vm294, %v4673, %v4677
      %s4679 = scalar_lea.vmem %s2, 14
      %v4680 = vld [vmem:[%s4679] sm:$0x3]
      %v4681 = vunpack.c.l.b16 %v4500
      %v4682 = vunpack.c.l.b16 %v4510
      %v4683 = vunpack.c.l.b16 %v4524
      %v4684 = vunpack.c.l.b16 %v4534
      %v4685 = vunpack.c.l.b16 %v4548
      %v4686 = vunpack.c.l.b16 %v4558
      %v4687 = vunpack.c.l.b16 %v4572
      %v4688 = vunpack.c.l.b16 %v4582
      %v4689 = vunpack.c.l.b16 %v4596
      %v4690 = vunpack.c.l.b16 %v4606
      %v4691 = vunpack.c.l.b16 %v4620
      %v4692 = vunpack.c.l.b16 %v4630
      %v4693 = vunpack.c.l.b16 %v4644
      %v4694 = vunpack.c.l.b16 %v4654
      %v4695 = vunpack.c.l.b16 %v4668
      %v4696 = vunpack.c.l.b16 %v4678
      %v4697 = vpack.c.b16 %v4682, %v4681
      %v4698 = vpack.c.b16 %v4684, %v4683
      %v4699 = vpack.c.b16 %v4686, %v4685
      %v4700 = vpack.c.b16 %v4688, %v4687
      %v4701 = vpack.c.b16 %v4690, %v4689
      %v4702 = vpack.c.b16 %v4692, %v4691
      %v4703 = vpack.c.b16 %v4694, %v4693
      %v4704 = vpack.c.b16 %v4696, %v4695
      %v4706 = vsel %vm567, %v4697, 0
      %v4709 = vsel %vm567, %v4698, 0
      %v4712 = vsel %vm567, %v4699, 0
      %v4715 = vsel %vm567, %v4700, 0
      %v4718 = vsel %vm567, %v4701, 0
      %v4721 = vsel %vm567, %v4702, 0
      %v4724 = vsel %vm567, %v4703, 0
      %v4727 = vsel %vm567, %v4704, 0
      %v4730 = vsel %vm598, %v4680, 0
      %4732 = vmatprep.subr.bf16.mxu0 0
      %4733 = vmatpush1.bf16.msra.mxu0 %v4730
      %4734 = vmatprep.subr.bf16.mxu0 0
      %4735 = vmatpush1.bf16.msra.mxu0 0
      %4736 = vmatprep.subr.bf16.mxu0 0
      %4737 = vmatpush1.bf16.msra.mxu0 0
      %4738 = vmatprep.subr.bf16.mxu0 0
      %4739 = vmatpush1.bf16.msra.mxu0 0
      %4740 = vmatprep.subr.bf16.mxu0 0
      %4741 = vmatpush1.bf16.msra.mxu0 0
      %4742 = vmatprep.subr.bf16.mxu0 0
      %4743 = vmatpush1.bf16.msra.mxu0 0
      %4744 = vmatprep.subr.bf16.mxu0 0
      %4745 = vmatpush1.bf16.msra.mxu0 0
      %4746 = vmatprep.subr.bf16.mxu0 0
      %4747 = vmatpush1.bf16.msra.mxu0 0
      %4748 = vmatprep.subr.bf16.mxu0 0
      %4749 = vmatpush1.bf16.msra.mxu0 0
      %4750 = vmatprep.subr.bf16.mxu0 0
      %4751 = vmatpush1.bf16.msra.mxu0 0
      %4752 = vmatprep.subr.bf16.mxu0 0
      %4753 = vmatpush1.bf16.msra.mxu0 0
      %4754 = vmatprep.subr.bf16.mxu0 0
      %4755 = vmatpush1.bf16.msra.mxu0 0
      %4756 = vmatprep.subr.bf16.mxu0 0
      %4757 = vmatpush1.bf16.msra.mxu0 0
      %4758 = vmatprep.subr.bf16.mxu0 0
      %4759 = vmatpush1.bf16.msra.mxu0 0
      %4760 = vmatprep.subr.bf16.mxu0 0
      %4761 = vmatpush1.bf16.msra.mxu0 0
      %4762 = vmatprep.subr.bf16.mxu0 0
      %4763 = vmatpush1.bf16.msra.mxu0 0
      %4764 = vmatprep.mubr.bf16.mxu0 0
      %4765 = vmatmul.mubr.bf16.gmra.mrb[0].mxu0 %v4706
      %v4766 = vpop.f32.mrb[0].mxu0
      %v4767 = vadd.f32 0.0, %v4766
      %v4768 = vpop.f32.mrb[0].mxu0
      %v4769 = vpop.f32.mrb[0].mxu0
      %v4770 = vadd.f32 0.0, %v4769
      %v4771 = vpop.f32.mrb[0].mxu0
      %4772 = vmatprep.mubr.bf16.mxu0 0
      %4773 = vmatmul.mubr.bf16.gmra.mrb[0].mxu0 %v4709
      %v4774 = vpop.f32.mrb[0].mxu0
      %v4775 = vadd.f32 0.0, %v4774
      %v4776 = vpop.f32.mrb[0].mxu0
      %v4777 = vpop.f32.mrb[0].mxu0
      %v4778 = vadd.f32 0.0, %v4777
      %v4779 = vpop.f32.mrb[0].mxu0
      %4780 = vmatprep.mubr.bf16.mxu0 0
      %4781 = vmatmul.mubr.bf16.gmra.mrb[0].mxu0 %v4712
      %v4782 = vpop.f32.mrb[0].mxu0
      %v4783 = vadd.f32 0.0, %v4782
      %v4784 = vpop.f32.mrb[0].mxu0
      %v4785 = vpop.f32.mrb[0].mxu0
      %v4786 = vadd.f32 0.0, %v4785
      %v4787 = vpop.f32.mrb[0].mxu0
      %4788 = vmatprep.mubr.bf16.mxu0 0
      %4789 = vmatmul.mubr.bf16.gmra.mrb[0].mxu0 %v4715
      %v4790 = vpop.f32.mrb[0].mxu0
      %v4791 = vadd.f32 0.0, %v4790
      %v4792 = vpop.f32.mrb[0].mxu0
      %v4793 = vpop.f32.mrb[0].mxu0
      %v4794 = vadd.f32 0.0, %v4793
      %v4795 = vpop.f32.mrb[0].mxu0
      %4796 = vmatprep.mubr.bf16.mxu0 0
      %4797 = vmatmul.mubr.bf16.gmra.mrb[0].mxu0 %v4718
      %v4798 = vpop.f32.mrb[0].mxu0
      %v4799 = vadd.f32 0.0, %v4798
      %v4800 = vpop.f32.mrb[0].mxu0
      %v4801 = vpop.f32.mrb[0].mxu0
      %v4802 = vadd.f32 0.0, %v4801
      %v4803 = vpop.f32.mrb[0].mxu0
      %4804 = vmatprep.mubr.bf16.mxu0 0
      %4805 = vmatmul.mubr.bf16.gmra.mrb[0].mxu0 %v4721
      %v4806 = vpop.f32.mrb[0].mxu0
      %v4807 = vadd.f32 0.0, %v4806
      %v4808 = vpop.f32.mrb[0].mxu0
      %v4809 = vpop.f32.mrb[0].mxu0
      %v4810 = vadd.f32 0.0, %v4809
      %v4811 = vpop.f32.mrb[0].mxu0
      %4812 = vmatprep.mubr.bf16.mxu0 0
      %4813 = vmatmul.mubr.bf16.gmra.mrb[0].mxu0 %v4724
      %v4814 = vpop.f32.mrb[0].mxu0
      %v4815 = vadd.f32 0.0, %v4814
      %v4816 = vpop.f32.mrb[0].mxu0
      %v4817 = vpop.f32.mrb[0].mxu0
      %v4818 = vadd.f32 0.0, %v4817
      %v4819 = vpop.f32.mrb[0].mxu0
      %4820 = vmatprep.mubr.bf16.mxu0 0
      %4821 = vmatmul.mubr.bf16.gmra.mrb[0].mxu0 %v4727
      %v4822 = vpop.f32.mrb[0].mxu0
      %v4823 = vadd.f32 0.0, %v4822
      %v4824 = vpop.f32.mrb[0].mxu0
      %v4825 = vpop.f32.mrb[0].mxu0
      %v4826 = vadd.f32 0.0, %v4825
      %v4827 = vpop.f32.mrb[0].mxu0
      %4828 = vdwg.mxu0
      %v4829 = vadd.f32 %v4447, %v4767
      %v4830 = vadd.f32 %v4448, %v4770
      %v4831 = vadd.f32 %v4449, %v4775
      %v4832 = vadd.f32 %v4450, %v4778
      %v4833 = vadd.f32 %v4451, %v4783
      %v4834 = vadd.f32 %v4452, %v4786
      %v4835 = vadd.f32 %v4453, %v4791
      %v4836 = vadd.f32 %v4454, %v4794
      %v4837 = vadd.f32 %v4455, %v4799
      %v4838 = vadd.f32 %v4456, %v4802
      %v4839 = vadd.f32 %v4457, %v4807
      %v4840 = vadd.f32 %v4458, %v4810
      %v4841 = vadd.f32 %v4459, %v4815
      %v4842 = vadd.f32 %v4460, %v4818
      %v4843 = vadd.f32 %v4461, %v4823
      %v4844 = vadd.f32 %v4462, %v4826
      %v4845 = vld [vmem:[%s4264] sm:$0xe]
      %v4846 = vld [vmem:[%s4264 + $0xc] sm:$0xe]
      %v4847 = vld [vmem:[%s4264 + $0x18] sm:$0xe]
      %v4848 = vld [vmem:[%s4264 + $0x24] sm:$0xe]
      %v4849 = vld [vmem:[%s4264 + $0x30] sm:$0xe]
      %v4850 = vld [vmem:[%s4264 + $0x3c] sm:$0xe]
      %v4851 = vld [vmem:[%s4264 + $0x48] sm:$0xe]
      %v4852 = vld [vmem:[%s4264 + $0x54] sm:$0xe]
      %v4877 = vrot.slane %v4845, 5
      %v4878 = vrot.slane %v4877, 4
      %v4879 = vrot.slane %v4464, 5
      %v4880 = vsel %vm923, %v4878, %v4879
      %v4881 = vrot.slane %v4879, 4
      %v4882 = vrot.slane %v4465, 5
      %v4883 = vsel %vm923, %v4881, %v4882
      %v4884 = vrot.slane %v4846, 5
      %v4885 = vrot.slane %v4884, 4
      %v4886 = vrot.slane %v4467, 5
      %v4887 = vsel %vm923, %v4885, %v4886
      %v4888 = vrot.slane %v4886, 4
      %v4889 = vrot.slane %v4468, 5
      %v4890 = vsel %vm923, %v4888, %v4889
      %v4891 = vrot.slane %v4847, 5
      %v4892 = vrot.slane %v4891, 4
      %v4893 = vrot.slane %v4470, 5
      %v4894 = vsel %vm923, %v4892, %v4893
      %v4895 = vrot.slane %v4893, 4
      %v4896 = vrot.slane %v4471, 5
      %v4897 = vsel %vm923, %v4895, %v4896
      %v4898 = vrot.slane %v4848, 5
      %v4899 = vrot.slane %v4898, 4
      %v4900 = vrot.slane %v4473, 5
      %v4901 = vsel %vm923, %v4899, %v4900
      %v4902 = vrot.slane %v4900, 4
      %v4903 = vrot.slane %v4474, 5
      %v4904 = vsel %vm923, %v4902, %v4903
      %v4905 = vrot.slane %v4849, 5
      %v4906 = vrot.slane %v4905, 4
      %v4907 = vrot.slane %v4476, 5
      %v4908 = vsel %vm923, %v4906, %v4907
      %v4909 = vrot.slane %v4907, 4
      %v4910 = vrot.slane %v4477, 5
      %v4911 = vsel %vm923, %v4909, %v4910
      %v4912 = vrot.slane %v4850, 5
      %v4913 = vrot.slane %v4912, 4
      %v4914 = vrot.slane %v4479, 5
      %v4915 = vsel %vm923, %v4913, %v4914
      %v4916 = vrot.slane %v4914, 4
      %v4917 = vrot.slane %v4480, 5
      %v4918 = vsel %vm923, %v4916, %v4917
      %v4919 = vrot.slane %v4851, 5
      %v4920 = vrot.slane %v4919, 4
      %v4921 = vrot.slane %v4482, 5
      %v4922 = vsel %vm923, %v4920, %v4921
      %v4923 = vrot.slane %v4921, 4
      %v4924 = vrot.slane %v4483, 5
      %v4925 = vsel %vm923, %v4923, %v4924
      %v4926 = vrot.slane %v4852, 5
      %v4927 = vrot.slane %v4926, 4
      %v4928 = vrot.slane %v4485, 5
      %v4929 = vsel %vm923, %v4927, %v4928
      %v4930 = vrot.slane %v4928, 4
      %v4931 = vrot.slane %v4486, 5
      %v4932 = vsel %vm923, %v4930, %v4931
      %s4933 = scalar_lea.vmem %s2, 16
      %v4934 = vld [vmem:[%s4933] sm:$0x3]
      %v4935 = vunpack.c.l.b16 %v4880
      %v4936 = vunpack.c.l.b16 %v4883
      %v4937 = vunpack.c.l.b16 %v4887
      %v4938 = vunpack.c.l.b16 %v4890
      %v4939 = vunpack.c.l.b16 %v4894
      %v4940 = vunpack.c.l.b16 %v4897
      %v4941 = vunpack.c.l.b16 %v4901
      %v4942 = vunpack.c.l.b16 %v4904
      %v4943 = vunpack.c.l.b16 %v4908
      %v4944 = vunpack.c.l.b16 %v4911
      %v4945 = vunpack.c.l.b16 %v4915
      %v4946 = vunpack.c.l.b16 %v4918
      %v4947 = vunpack.c.l.b16 %v4922
      %v4948 = vunpack.c.l.b16 %v4925
      %v4949 = vunpack.c.l.b16 %v4929
      %v4950 = vunpack.c.l.b16 %v4932
      %v4951 = vpack.c.b16 %v4936, %v4935
      %v4952 = vpack.c.b16 %v4938, %v4937
      %v4953 = vpack.c.b16 %v4940, %v4939
      %v4954 = vpack.c.b16 %v4942, %v4941
      %v4955 = vpack.c.b16 %v4944, %v4943
      %v4956 = vpack.c.b16 %v4946, %v4945
      %v4957 = vpack.c.b16 %v4948, %v4947
      %v4958 = vpack.c.b16 %v4950, %v4949
      %v4960 = vsel %vm567, %v4951, 0
      %v4963 = vsel %vm567, %v4952, 0
      %v4966 = vsel %vm567, %v4953, 0
      %v4969 = vsel %vm567, %v4954, 0
      %v4972 = vsel %vm567, %v4955, 0
      %v4975 = vsel %vm567, %v4956, 0
      %v4978 = vsel %vm567, %v4957, 0
      %v4981 = vsel %vm567, %v4958, 0
      %v4984 = vsel %vm598, %v4934, 0
      %4986 = vmatprep.subr.bf16.mxu0 0
      %4987 = vmatpush1.bf16.msra.mxu0 %v4984
      %4988 = vmatprep.subr.bf16.mxu0 0
      %4989 = vmatpush1.bf16.msra.mxu0 0
      %4990 = vmatprep.subr.bf16.mxu0 0
      %4991 = vmatpush1.bf16.msra.mxu0 0
      %4992 = vmatprep.subr.bf16.mxu0 0
      %4993 = vmatpush1.bf16.msra.mxu0 0
      %4994 = vmatprep.subr.bf16.mxu0 0
      %4995 = vmatpush1.bf16.msra.mxu0 0
      %4996 = vmatprep.subr.bf16.mxu0 0
      %4997 = vmatpush1.bf16.msra.mxu0 0
      %4998 = vmatprep.subr.bf16.mxu0 0
      %4999 = vmatpush1.bf16.msra.mxu0 0
      %5000 = vmatprep.subr.bf16.mxu0 0
      %5001 = vmatpush1.bf16.msra.mxu0 0
      %5002 = vmatprep.subr.bf16.mxu0 0
      %5003 = vmatpush1.bf16.msra.mxu0 0
      %5004 = vmatprep.subr.bf16.mxu0 0
      %5005 = vmatpush1.bf16.msra.mxu0 0
      %5006 = vmatprep.subr.bf16.mxu0 0
      %5007 = vmatpush1.bf16.msra.mxu0 0
      %5008 = vmatprep.subr.bf16.mxu0 0
      %5009 = vmatpush1.bf16.msra.mxu0 0
      %5010 = vmatprep.subr.bf16.mxu0 0
      %5011 = vmatpush1.bf16.msra.mxu0 0
      %5012 = vmatprep.subr.bf16.mxu0 0
      %5013 = vmatpush1.bf16.msra.mxu0 0
      %5014 = vmatprep.subr.bf16.mxu0 0
      %5015 = vmatpush1.bf16.msra.mxu0 0
      %5016 = vmatprep.subr.bf16.mxu0 0
      %5017 = vmatpush1.bf16.msra.mxu0 0
      %5018 = vmatprep.mubr.bf16.mxu0 0
      %5019 = vmatmul.mubr.bf16.gmra.mrb[0].mxu0 %v4960
      %v5020 = vpop.f32.mrb[0].mxu0
      %v5021 = vadd.f32 0.0, %v5020
      %v5022 = vpop.f32.mrb[0].mxu0
      %v5023 = vpop.f32.mrb[0].mxu0
      %v5024 = vadd.f32 0.0, %v5023
      %v5025 = vpop.f32.mrb[0].mxu0
      %5026 = vmatprep.mubr.bf16.mxu0 0
      %5027 = vmatmul.mubr.bf16.gmra.mrb[0].mxu0 %v4963
      %v5028 = vpop.f32.mrb[0].mxu0
      %v5029 = vadd.f32 0.0, %v5028
      %v5030 = vpop.f32.mrb[0].mxu0
      %v5031 = vpop.f32.mrb[0].mxu0
      %v5032 = vadd.f32 0.0, %v5031
      %v5033 = vpop.f32.mrb[0].mxu0
      %5034 = vmatprep.mubr.bf16.mxu0 0
      %5035 = vmatmul.mubr.bf16.gmra.mrb[0].mxu0 %v4966
      %v5036 = vpop.f32.mrb[0].mxu0
      %v5037 = vadd.f32 0.0, %v5036
      %v5038 = vpop.f32.mrb[0].mxu0
      %v5039 = vpop.f32.mrb[0].mxu0
      %v5040 = vadd.f32 0.0, %v5039
      %v5041 = vpop.f32.mrb[0].mxu0
      %5042 = vmatprep.mubr.bf16.mxu0 0
      %5043 = vmatmul.mubr.bf16.gmra.mrb[0].mxu0 %v4969
      %v5044 = vpop.f32.mrb[0].mxu0
      %v5045 = vadd.f32 0.0, %v5044
      %v5046 = vpop.f32.mrb[0].mxu0
      %v5047 = vpop.f32.mrb[0].mxu0
      %v5048 = vadd.f32 0.0, %v5047
      %v5049 = vpop.f32.mrb[0].mxu0
      %5050 = vmatprep.mubr.bf16.mxu0 0
      %5051 = vmatmul.mubr.bf16.gmra.mrb[0].mxu0 %v4972
      %v5052 = vpop.f32.mrb[0].mxu0
      %v5053 = vadd.f32 0.0, %v5052
      %v5054 = vpop.f32.mrb[0].mxu0
      %v5055 = vpop.f32.mrb[0].mxu0
      %v5056 = vadd.f32 0.0, %v5055
      %v5057 = vpop.f32.mrb[0].mxu0
      %5058 = vmatprep.mubr.bf16.mxu0 0
      %5059 = vmatmul.mubr.bf16.gmra.mrb[0].mxu0 %v4975
      %v5060 = vpop.f32.mrb[0].mxu0
      %v5061 = vadd.f32 0.0, %v5060
      %v5062 = vpop.f32.mrb[0].mxu0
      %v5063 = vpop.f32.mrb[0].mxu0
      %v5064 = vadd.f32 0.0, %v5063
      %v5065 = vpop.f32.mrb[0].mxu0
      %5066 = vmatprep.mubr.bf16.mxu0 0
      %5067 = vmatmul.mubr.bf16.gmra.mrb[0].mxu0 %v4978
      %v5068 = vpop.f32.mrb[0].mxu0
      %v5069 = vadd.f32 0.0, %v5068
      %v5070 = vpop.f32.mrb[0].mxu0
      %v5071 = vpop.f32.mrb[0].mxu0
      %v5072 = vadd.f32 0.0, %v5071
      %v5073 = vpop.f32.mrb[0].mxu0
      %5074 = vmatprep.mubr.bf16.mxu0 0
      %5075 = vmatmul.mubr.bf16.gmra.mrb[0].mxu0 %v4981
      %v5076 = vpop.f32.mrb[0].mxu0
      %v5077 = vadd.f32 0.0, %v5076
      %v5078 = vpop.f32.mrb[0].mxu0
      %v5079 = vpop.f32.mrb[0].mxu0
      %v5080 = vadd.f32 0.0, %v5079
      %v5081 = vpop.f32.mrb[0].mxu0
      %5082 = vdwg.mxu0
      %v5083 = vadd.f32 %v4829, %v5021
      %v5084 = vadd.f32 %v4830, %v5024
      %v5085 = vadd.f32 %v4831, %v5029
      %v5086 = vadd.f32 %v4832, %v5032
      %v5087 = vadd.f32 %v4833, %v5037
      %v5088 = vadd.f32 %v4834, %v5040
      %v5089 = vadd.f32 %v4835, %v5045
      %v5090 = vadd.f32 %v4836, %v5048
      %v5091 = vadd.f32 %v4837, %v5053
      %v5092 = vadd.f32 %v4838, %v5056
      %v5093 = vadd.f32 %v4839, %v5061
      %v5094 = vadd.f32 %v4840, %v5064
      %v5095 = vadd.f32 %v4841, %v5069
      %v5096 = vadd.f32 %v4842, %v5072
      %v5097 = vadd.f32 %v4843, %v5077
      %v5098 = vadd.f32 %v4844, %v5080
      %s5099 = sadd.s32 %s251, 2
      %s5100 = smul.u32 %s5099, 3
      %s5101 = smul.addr %s5100, 4
      %s5102 = scalar_lea.vmem %s238, %s5101
      %v5103 = vld [vmem:[%s5102] sm:$0xf]
      %v5104 = vld [vmem:[%s5102 + $0x4] sm:$0xf]
      %v5105 = vld [vmem:[%s5102 + $0x8] sm:$0x1]
      %v5106 = vld [vmem:[%s5102 + $0xc] sm:$0xf]
      %v5107 = vld [vmem:[%s5102 + $0x10] sm:$0xf]
      %v5108 = vld [vmem:[%s5102 + $0x14] sm:$0x1]
      %v5109 = vld [vmem:[%s5102 + $0x18] sm:$0xf]
      %v5110 = vld [vmem:[%s5102 + $0x1c] sm:$0xf]
      %v5111 = vld [vmem:[%s5102 + $0x20] sm:$0x1]
      %v5112 = vld [vmem:[%s5102 + $0x24] sm:$0xf]
      %v5113 = vld [vmem:[%s5102 + $0x28] sm:$0xf]
      %v5114 = vld [vmem:[%s5102 + $0x2c] sm:$0x1]
      %v5115 = vld [vmem:[%s5102 + $0x30] sm:$0xf]
      %v5116 = vld [vmem:[%s5102 + $0x34] sm:$0xf]
      %v5117 = vld [vmem:[%s5102 + $0x38] sm:$0x1]
      %v5118 = vld [vmem:[%s5102 + $0x3c] sm:$0xf]
      %v5119 = vld [vmem:[%s5102 + $0x40] sm:$0xf]
      %v5120 = vld [vmem:[%s5102 + $0x44] sm:$0x1]
      %v5121 = vld [vmem:[%s5102 + $0x48] sm:$0xf]
      %v5122 = vld [vmem:[%s5102 + $0x4c] sm:$0xf]
      %v5123 = vld [vmem:[%s5102 + $0x50] sm:$0x1]
      %v5124 = vld [vmem:[%s5102 + $0x54] sm:$0xf]
      %v5125 = vld [vmem:[%s5102 + $0x58] sm:$0xf]
      %v5126 = vld [vmem:[%s5102 + $0x5c] sm:$0x1]
      %v5127 = vunpack.c.l.bf16 %v5103
      %v5128 = vunpack.c.l.bf16 %v5104
      %v5129 = vunpack.c.l.bf16 %v5105
      %v5130 = vunpack.c.l.bf16 %v5106
      %v5131 = vunpack.c.l.bf16 %v5107
      %v5132 = vunpack.c.l.bf16 %v5108
      %v5133 = vunpack.c.l.bf16 %v5109
      %v5134 = vunpack.c.l.bf16 %v5110
      %v5135 = vunpack.c.l.bf16 %v5111
      %v5136 = vunpack.c.l.bf16 %v5112
      %v5137 = vunpack.c.l.bf16 %v5113
      %v5138 = vunpack.c.l.bf16 %v5114
      %v5139 = vunpack.c.l.bf16 %v5115
      %v5140 = vunpack.c.l.bf16 %v5116
      %v5141 = vunpack.c.l.bf16 %v5117
      %v5142 = vunpack.c.l.bf16 %v5118
      %v5143 = vunpack.c.l.bf16 %v5119
      %v5144 = vunpack.c.l.bf16 %v5120
      %v5145 = vunpack.c.l.bf16 %v5121
      %v5146 = vunpack.c.l.bf16 %v5122
      %v5147 = vunpack.c.l.bf16 %v5123
      %v5148 = vunpack.c.l.bf16 %v5124
      %v5149 = vunpack.c.l.bf16 %v5125
      %v5150 = vunpack.c.l.bf16 %v5126
      %v5151 = vld [vmem:[%s4] sm:$0x1]
      %v5153 = vlaneseq
      %v5154 = vshrl.u32 %v5153, 7
      %v5155 = vsub.s32 0, %v5154
      %v5156 = vrot.slane %v5151, %v5155
      %v5158 = vadd.f32 %v5083, %v5156
      %v5159 = vadd.f32 %v5084, %v5156
      %v5160 = vadd.f32 %v5085, %v5156
      %v5161 = vadd.f32 %v5086, %v5156
      %v5162 = vadd.f32 %v5087, %v5156
      %v5163 = vadd.f32 %v5088, %v5156
      %v5164 = vadd.f32 %v5089, %v5156
      %v5165 = vadd.f32 %v5090, %v5156
      %v5166 = vadd.f32 %v5091, %v5156
      %v5167 = vadd.f32 %v5092, %v5156
      %v5168 = vadd.f32 %v5093, %v5156
      %v5169 = vadd.f32 %v5094, %v5156
      %v5170 = vadd.f32 %v5095, %v5156
      %v5171 = vadd.f32 %v5096, %v5156
      %v5172 = vadd.f32 %v5097, %v5156
      %v5173 = vadd.f32 %v5098, %v5156
      %vm5198 = vcmask 1046528
      %v5199 = vrot.slane %v5127, 1
      %v5200 = vrot.slane %v5128, 1
      %v5201 = vsel %vm5198, %v5199, %v5200
      %v5202 = vrot.slane %v5129, 1
      %v5203 = vsel %vm5198, %v5200, %v5202
      %v5204 = vrot.slane %v5130, 1
      %v5205 = vrot.slane %v5131, 1
      %v5206 = vsel %vm5198, %v5204, %v5205
      %v5207 = vrot.slane %v5132, 1
      %v5208 = vsel %vm5198, %v5205, %v5207
      %v5209 = vrot.slane %v5133, 1
      %v5210 = vrot.slane %v5134, 1
      %v5211 = vsel %vm5198, %v5209, %v5210
      %v5212 = vrot.slane %v5135, 1
      %v5213 = vsel %vm5198, %v5210, %v5212
      %v5214 = vrot.slane %v5136, 1
      %v5215 = vrot.slane %v5137, 1
      %v5216 = vsel %vm5198, %v5214, %v5215
      %v5217 = vrot.slane %v5138, 1
      %v5218 = vsel %vm5198, %v5215, %v5217
      %v5219 = vrot.slane %v5139, 1
      %v5220 = vrot.slane %v5140, 1
      %v5221 = vsel %vm5198, %v5219, %v5220
      %v5222 = vrot.slane %v5141, 1
      %v5223 = vsel %vm5198, %v5220, %v5222
      %v5224 = vrot.slane %v5142, 1
      %v5225 = vrot.slane %v5143, 1
      %v5226 = vsel %vm5198, %v5224, %v5225
      %v5227 = vrot.slane %v5144, 1
      %v5228 = vsel %vm5198, %v5225, %v5227
      %v5229 = vrot.slane %v5145, 1
      %v5230 = vrot.slane %v5146, 1
      %v5231 = vsel %vm5198, %v5229, %v5230
      %v5232 = vrot.slane %v5147, 1
      %v5233 = vsel %vm5198, %v5230, %v5232
      %v5234 = vrot.slane %v5148, 1
      %v5235 = vrot.slane %v5149, 1
      %v5236 = vsel %vm5198, %v5234, %v5235
      %v5237 = vrot.slane %v5150, 1
      %v5238 = vsel %vm5198, %v5235, %v5237
      %v5255 = vadd.f32 %v5158, %v5201
      %v5256 = vadd.f32 %v5159, %v5203
      %v5257 = vadd.f32 %v5160, %v5206
      %v5258 = vadd.f32 %v5161, %v5208
      %v5259 = vadd.f32 %v5162, %v5211
      %v5260 = vadd.f32 %v5163, %v5213
      %v5261 = vadd.f32 %v5164, %v5216
      %v5262 = vadd.f32 %v5165, %v5218
      %v5263 = vadd.f32 %v5166, %v5221
      %v5264 = vadd.f32 %v5167, %v5223
      %v5265 = vadd.f32 %v5168, %v5226
      %v5266 = vadd.f32 %v5169, %v5228
      %v5267 = vadd.f32 %v5170, %v5231
      %v5268 = vadd.f32 %v5171, %v5233
      %v5269 = vadd.f32 %v5172, %v5236
      %v5270 = vadd.f32 %v5173, %v5238
      %v5271 = vmax.f32 %v5255, 0.0
      %v5272 = vmax.f32 %v5256, 0.0
      %v5273 = vmax.f32 %v5257, 0.0
      %v5274 = vmax.f32 %v5258, 0.0
      %v5275 = vmax.f32 %v5259, 0.0
      %v5276 = vmax.f32 %v5260, 0.0
      %v5277 = vmax.f32 %v5261, 0.0
      %v5278 = vmax.f32 %v5262, 0.0
      %v5279 = vmax.f32 %v5263, 0.0
      %v5280 = vmax.f32 %v5264, 0.0
      %v5281 = vmax.f32 %v5265, 0.0
      %v5282 = vmax.f32 %v5266, 0.0
      %v5283 = vmax.f32 %v5267, 0.0
      %v5284 = vmax.f32 %v5268, 0.0
      %v5285 = vmax.f32 %v5269, 0.0
      %v5286 = vmax.f32 %v5270, 0.0
      %5287 = vst.msk [vmem:[%s248] sm:$0xff] %vm567, %v5271
      %5288 = vst.msk [vmem:[%s248 + $0x8] sm:$0xff] %vm567, %v5272
      %5289 = vst.msk [vmem:[%s248 + $0x10] sm:$0xff] %vm567, %v5273
      %5290 = vst.msk [vmem:[%s248 + $0x18] sm:$0xff] %vm567, %v5274
      %5291 = vst.msk [vmem:[%s248 + $0x20] sm:$0xff] %vm567, %v5275
      %5292 = vst.msk [vmem:[%s248 + $0x28] sm:$0xff] %vm567, %v5276
      %5293 = vst.msk [vmem:[%s248 + $0x30] sm:$0xff] %vm567, %v5277
      %5294 = vst.msk [vmem:[%s248 + $0x38] sm:$0xff] %vm567, %v5278
      %5295 = vst.msk [vmem:[%s248 + $0x40] sm:$0xff] %vm567, %v5279
      %5296 = vst.msk [vmem:[%s248 + $0x48] sm:$0xff] %vm567, %v5280
      %5297 = vst.msk [vmem:[%s248 + $0x50] sm:$0xff] %vm567, %v5281
      %5298 = vst.msk [vmem:[%s248 + $0x58] sm:$0xff] %vm567, %v5282
      %5299 = vst.msk [vmem:[%s248 + $0x60] sm:$0xff] %vm567, %v5283
      %5300 = vst.msk [vmem:[%s248 + $0x68] sm:$0xff] %vm567, %v5284
      %5301 = vst.msk [vmem:[%s248 + $0x70] sm:$0xff] %vm567, %v5285
      %5302 = vst.msk [vmem:[%s248 + $0x78] sm:$0xff] %vm567, %v5286
      %s5303 = smul.u32 8, %s21
      %p5304 = scmp.lt.s32.totalorder %s20, 1
      %s5305 = scalar_select %p5304, %s20, 1
      %p5306 = scmp.lt.s32.totalorder %s5303, 15
      %s5307 = scalar_select %p5306, %s5303, 15
      %s5308 = smul.addr %s5307, 2
      %s5309 = smul.addr %s5305, 32
      %s5310 = sadd.s32 %s5308, %s5309
      %s5311 = smul.addr %s5310, 8
      %s5312 = scalar_lea.vmem %s5, %s5311
      // Predicated region
      $region41: #{tpu_custom_call.1} parent=39 // pred_check
        %p5313 = pneg %p158
      $region42: #{tpu_custom_call.1} parent=39 // pred_check_branch
        %5315 = sbr.rel (%p5313) target = $region44
      $region43: #{tpu_custom_call.1} parent=39 // pred_region
        %s5316 = smul.u32 8, %s21
      $region44: #{tpu_custom_call.1} parent=39 // pred_fallthru
        _
    $region40: #{tpu_custom_call.1} parent=5 // pred_fallthru
      _
    %p5317 = scmp.le.s32.totalorder 2, %s11
    // Predicated region
    $region45: #{tpu_custom_call.1} parent=5 // pred_check
      %p5318 = pneg %p5317
    $region46: #{tpu_custom_call.1} parent=5 // pred_check_branch
      %5320 = sbr.rel (%p5318) target = $region48
    $region47: #{tpu_custom_call.1} parent=5 // pred_region
      %s5321 = ssub.s32 %s11, 2
      // Predicated region
      $region49: #{tpu_custom_call.1} parent=47 // pred_check
        %p5322 = pneg %p164
      $region50: #{tpu_custom_call.1} parent=47 // pred_check_branch
        %5324 = sbr.rel (%p5322) target = $region52
      $region51: #{tpu_custom_call.1} parent=47 // pred_region
        %s5325 = smul.u32 8, %s23
        %p5326 = scmp.lt.s32.totalorder %s22, 1
        %s5327 = scalar_select %p5326, %s22, 1
        %p5328 = scmp.lt.s32.totalorder %s5325, 15
        %s5329 = scalar_select %p5328, %s5325, 15
        %s5330 = smul.addr %s5329, 2
        %s5331 = smul.addr %s5327, 32
        %s5332 = sadd.s32 %s5330, %s5331
        %s5333 = smul.addr %s5332, 8
        %s5334 = scalar_lea.vmem %s5, %s5333
      $region52: #{tpu_custom_call.1} parent=47 // pred_fallthru
        _
    $region48: #{tpu_custom_call.1} parent=5 // pred_fallthru
      _
  $region6: #{tpu_custom_call.1} parent=0 // loop_footer
    %s15 = sadd.s32 1, %s11
  $region7: #{tpu_custom_call.1} parent=0 // loop_footer_branch
    %10 = sbr.rel target = $region3
  $region8: #{tpu_custom_call.1} parent=0 // loop_exit
    _

</llo_original>
